<compile_context>
chip_gen: v6e
topology: v6e:2x2x1
jax: 0.10.0
libtpu: 0.0.40
codegen_flags: <defaults>
</compile_context>

<pallas_src>
import math

import numpy as np
import jax
import jax.numpy as jnp
from jax.experimental import pallas as pl
from jax.experimental.pallas import tpu as pltpu

# ----------------------------- small config ---------------------------------
B = 2                   # batch
L = 8                   # number of boxes in sample_params
S = L + 2               # [room-feature token, empty token, boxes...]
BS = B * S              # flattened token count
N_CLASSES = 10
INPUT_DIMS = N_CLASSES + 3 + 3 + 1    # 17
EMB = 512               # 64 (class) + 3*64 (pos) + 3*64 (size) + 64 (angle)
D_MODEL = 64            # hidden_dims (= n_heads * head_dim)
N_HEADS = 2
HEAD_DIM = 32
FF = 128                # feed_forward_dimensions
N_LAYERS = 2
FEAT = 32               # feature_extractor.feature_size (stand-in)
H = W = 16              # room mask spatial size
PE_HALF = 32            # FixedPositionalEncoding proj_dims // 2
LN_EPS = 1e-5
NEG_INF = -1e9
OUT_PAD = 128           # lane-dense padded output width (sliced back to 17 outside)
VEC_ROWS = 8 + 8 * N_LAYERS   # packed bias/LN/sigma table rows


# ----------------------------- shared math -----------------------------------
def _layernorm(x, gamma, beta):
    mean = jnp.mean(x, axis=-1, keepdims=True)
    var = jnp.mean(jnp.square(x - mean), axis=-1, keepdims=True)
    return (x - mean) * jax.lax.rsqrt(var + LN_EPS) * gamma + beta


def _gelu(x):
    # TODO(synk): PyTorch F.gelu uses the exact erf form; tanh approximation is
    # used here for Mosaic-lowering portability (max abs deviation ~1e-3).
    c = math.sqrt(2.0 / math.pi)
    return 0.5 * x * (1.0 + jnp.tanh(c * (x + 0.044715 * x * x * x)))


# ----------------------------- fused kernel -----------------------------------
def _fused_kernel(room_ref, boxes_ref, len_ref, vec_ref,
                  w_fe_ref, w_room_ref, w_class_ref, w_fc_ref,
                  wA_ref, w2_ref, w_out_ref, out_ref):
    f32 = jnp.float32
    bf16 = jnp.bfloat16

    # ---- packed f32 parameter-vector table, addressed by static row slices ----
    b_fe = vec_ref[0:1, 0:FEAT]
    b_room = vec_ref[1:2, :]
    empty = vec_ref[2:3, :]
    sigma = vec_ref[3:4, 0:PE_HALF]
    b_fc = vec_ref[4:5, 0:D_MODEL]
    g_fin = vec_ref[5:6, 0:D_MODEL]
    be_fin = vec_ref[6:7, 0:D_MODEL]
    b_out = vec_ref[7:8, 0:OUT_PAD]

    # ---- start symbol: feature-extractor stand-in + fc_room_f ----
    # TODO(synk): the real feature_extractor is an external CNN; linear+relu stand-in.
    room = room_ref[...].astype(bf16)                                   # (B, H*W)
    feat = jnp.maximum(
        jnp.dot(room, w_fe_ref[...], preferred_element_type=f32) + b_fe, 0.0)
    start_f = jnp.dot(feat.astype(bf16), w_room_ref[...],
                      preferred_element_type=f32) + b_room              # (B, 512)

    # ---- box embedding, flattened over B*L; full 512-wide row assembled in vregs ----
    boxes = boxes_ref[...]                                              # (B*L, 17)
    class_f = jnp.dot(boxes[:, 0:N_CLASSES].astype(bf16), w_class_ref[...],
                      preferred_element_type=f32)                       # (B*L, 64)
    parts = [class_f]
    for i in range(7):                       # tx, ty, tz, sx, sy, sz, angle
        col = boxes[:, N_CLASSES + i:N_CLASSES + i + 1]                 # (B*L, 1)
        xs = col * sigma                                                # (B*L, 32)
        parts.append(jnp.concatenate([jnp.sin(xs), jnp.cos(xs)], axis=-1))
    box_emb = jnp.concatenate(parts, axis=-1)                           # (B*L, 512)

    # ---- token assembly [start, empty, boxes] per batch, then ONE fc(512->64) ----
    rows = []
    for b in range(B):
        rows += [start_f[b:b + 1], empty, box_emb[b * L:(b + 1) * L]]
    pre_fc = jnp.concatenate(rows, axis=0)                              # (B*S, 512)
    x = jnp.dot(pre_fc.astype(bf16), w_fc_ref[...],
                preferred_element_type=f32) + b_fc                      # (B*S, 64)

    # ---- block-diagonal LengthMask(lengths + 2), built once from SMEM scalars ----
    key_pos = jax.lax.broadcasted_iota(jnp.int32, (1, S), 1)
    neg_blk = jnp.full((1, S), NEG_INF, f32)
    mask_parts = []
    for b in range(B):
        valid = jnp.where(key_pos < (len_ref[b] + 2), 0.0, NEG_INF).astype(f32)
        row = jnp.concatenate(
            [valid if bb == b else neg_blk for bb in range(B)], axis=-1)  # (1, B*S)
        mask_parts.append(jnp.broadcast_to(row, (S, BS)))
    mask = jnp.concatenate(mask_parts, axis=0)                          # (B*S, B*S)

    scale = 1.0 / math.sqrt(HEAD_DIM)

    # ---- transformer encoder (post-norm "full" attention layers, gelu FF) ----
    for l in range(N_LAYERS):
        wA = wA_ref[l]                                                  # (64, 384) bf16
        w_qkv = wA[:, 0:3 * D_MODEL]                                    # (64, 192)
        w_o = wA[:, 3 * D_MODEL:4 * D_MODEL]                            # (64, 64)
        w1 = wA[:, 4 * D_MODEL:4 * D_MODEL + FF]                        # (64, 128)
        r0 = 8 + 8 * l
        b_qkv = vec_ref[r0:r0 + 1, 0:3 * D_MODEL]
        b_o = vec_ref[r0 + 1:r0 + 2, 0:D_MODEL]
        g1 = vec_ref[r0 + 2:r0 + 3, 0:D_MODEL]
        be1 = vec_ref[r0 + 3:r0 + 4, 0:D_MODEL]
        b1 = vec_ref[r0 + 4:r0 + 5, 0:FF]
        b2 = vec_ref[r0 + 5:r0 + 6, 0:D_MODEL]
        g2 = vec_ref[r0 + 6:r0 + 7, 0:D_MODEL]
        be2 = vec_ref[r0 + 7:r0 + 8, 0:D_MODEL]

        # fused Q|K|V projection: one (B*S,64)@(64,192) matmul
        qkv = jnp.dot(x.astype(bf16), w_qkv, preferred_element_type=f32) + b_qkv

        head_outs = []
        for h in range(N_HEADS):
            qh = qkv[:, h * HEAD_DIM:(h + 1) * HEAD_DIM].astype(bf16)
            kh = qkv[:, D_MODEL + h * HEAD_DIM:
                     D_MODEL + (h + 1) * HEAD_DIM].astype(bf16)
            vh = qkv[:, 2 * D_MODEL + h * HEAD_DIM:
                     2 * D_MODEL + (h + 1) * HEAD_DIM].astype(bf16)
            s = jax.lax.dot_general(qh, kh, (((1,), (1,)), ((), ())),
                                    preferred_element_type=f32) * scale + mask
            s = s - jnp.max(s, axis=-1, keepdims=True)
            p = jnp.exp(s)
            p = p * pl.reciprocal(jnp.sum(p, axis=-1, keepdims=True), approx=True)
            head_outs.append(jnp.dot(p.astype(bf16), vh, preferred_element_type=f32))

        attn_h = jnp.concatenate(head_outs, axis=-1)                    # (B*S, 64)
        attn = jnp.dot(attn_h.astype(bf16), w_o, preferred_element_type=f32) + b_o

        xn = _layernorm(x + attn, g1, be1)
        y = jnp.dot(xn.astype(bf16), w1, preferred_element_type=f32) + b1
        y = _gelu(y)
        y = jnp.dot(y.astype(bf16), w2_ref[l], preferred_element_type=f32) + b2
        x = _layernorm(xn + y, g2, be2)

    # ---- head: final LayerNorm on F[:, 1] + hidden2output stand-in ----
    # TODO(synk): real ATISS hidden2output is AutoregressiveDMLL (external module);
    # replaced with a deterministic linear stand-in.
    f_rows = jnp.concatenate(
        [x[b * S + 1:b * S + 2, :] for b in range(B)], axis=0)          # (B, 64)
    f1 = _layernorm(f_rows, g_fin, be_fin)
    out_ref[...] = jnp.dot(f1.astype(bf16), w_out_ref[...],
                           preferred_element_type=f32) + b_out          # (B, 128)


# ----------------------------- parameter packing --------------------------------
def pack_params(p):
    """Fuse per-head weights, stack per-layer weights, pack all small vectors into
    one (VEC_ROWS, 512) f32 table, and cast matmul weights to bf16."""
    bf16 = jnp.bfloat16

    def row(v):
        v = jnp.asarray(v, jnp.float32).reshape(1, -1)
        return jnp.pad(v, ((0, 0), (0, EMB - v.shape[1])))

    rows = [row(p["b_fe"]), row(p["b_room"]), row(p["empty_token"]), row(p["sigma"]),
            row(p["b_fc"]), row(p["g_fin"]), row(p["b_fin"]), row(p["b_out"])]

    def fuse_heads(w):     # (NL, NH, 64, hd) -> (NL, 64, NH*hd), heads along lanes
        return jnp.transpose(w, (0, 2, 1, 3)).reshape(N_LAYERS, D_MODEL,
                                                      N_HEADS * HEAD_DIM)

    def fuse_bias(b):      # (NL, NH, 1, hd) -> (NL, NH*hd)
        return jnp.transpose(b, (0, 2, 1, 3)).reshape(N_LAYERS, N_HEADS * HEAD_DIM)

    w_qkv = jnp.concatenate(
        [fuse_heads(p["w_q"]), fuse_heads(p["w_k"]), fuse_heads(p["w_v"])], axis=-1)
    b_qkv = jnp.concatenate(
        [fuse_bias(p["b_q"]), fuse_bias(p["b_k"]), fuse_bias(p["b_v"])], axis=-1)
    w_o = p["w_o"].reshape(N_LAYERS, N_HEADS * HEAD_DIM, D_MODEL)       # (NL, 64, 64)
    wA = jnp.concatenate([w_qkv, w_o, p["w1"]], axis=-1)                # (NL, 64, 384)

    for l in range(N_LAYERS):
        rows += [row(b_qkv[l]), row(p["b_o"][l]), row(p["g1"][l]), row(p["be1"][l]),
                 row(p["b1"][l]), row(p["b2"][l]), row(p["g2"][l]), row(p["be2"][l])]

    return {
        "vec": jnp.concatenate(rows, axis=0),                           # (24, 512) f32
        "w_fe": p["w_fe"].astype(bf16),
        "w_room": p["w_room"].astype(bf16),
        "w_class": p["w_class"].astype(bf16),
        "w_fc": p["w_fc"].astype(bf16),
        "wA": wA.astype(bf16),
        "w2": p["w2"].astype(bf16),
        "w_out": jnp.pad(p["w_out"],
                         ((0, 0), (0, OUT_PAD - INPUT_DIMS))).astype(bf16),
    }


# ----------------------------- pallas_call wrapper -------------------------------
def atiss_forward(packed, sample_params):
    room_flat = sample_params["room_layout"].reshape(B, H * W)
    lengths = sample_params["lengths"].astype(jnp.int32)
    boxes = jnp.concatenate(
        [sample_params["class_labels"], sample_params["translations"],
         sample_params["sizes"], sample_params["angles"]],
        axis=-1).reshape(B * L, INPUT_DIMS)

    vmem = pl.BlockSpec(memory_space=pltpu.MemorySpace.VMEM)
    smem = pl.BlockSpec(memory_space=pltpu.MemorySpace.SMEM)

    out = pl.pallas_call(
        _fused_kernel,
        out_shape=jax.ShapeDtypeStruct((B, OUT_PAD), jnp.float32),
        in_specs=[vmem, vmem, smem, vmem,         # room, boxes, lengths, vec table
                  vmem, vmem, vmem, vmem,         # w_fe, w_room, w_class, w_fc
                  vmem, vmem, vmem],              # wA (qkv|o|ff1), w2, w_out
        out_specs=vmem,
    )(room_flat, boxes, lengths, packed["vec"],
      packed["w_fe"], packed["w_room"], packed["w_class"], packed["w_fc"],
      packed["wA"], packed["w2"], packed["w_out"])
    return out[:, :INPUT_DIMS].reshape(B, 1, INPUT_DIMS)


# ----------------------------- plain-JAX reference ----------------------------
def reference_forward(params, sample_params):
    room = sample_params["room_layout"].reshape(B, H * W)
    feat = jnp.maximum(room @ params["w_fe"] + params["b_fe"], 0.0)
    start_f = (feat @ params["w_room"] + params["b_room"])[:, None, :]

    sigma = params["sigma"]                       # (1, 32)

    def pe(x):                                    # (B, L, 1)
        xs = x * sigma[None]
        return jnp.concatenate([jnp.sin(xs), jnp.cos(xs)], axis=-1)

    cls = sample_params["class_labels"]
    t = sample_params["translations"]
    sz = sample_params["sizes"]
    ang = sample_params["angles"]

    class_f = cls @ params["w_class"]
    pos_f = jnp.concatenate([pe(t[..., 0:1]), pe(t[..., 1:2]), pe(t[..., 2:3])], -1)
    size_f = jnp.concatenate([pe(sz[..., 0:1]), pe(sz[..., 1:2]), pe(sz[..., 2:3])], -1)
    angle_f = pe(ang)
    X = jnp.concatenate([class_f, pos_f, size_f, angle_f], -1)          # (B, L, 512)
    X = jnp.concatenate(
        [start_f, jnp.broadcast_to(params["empty_token"][None], (B, 1, EMB)), X], axis=1)
    X = X @ params["w_fc"] + params["b_fc"]                             # (B, S, 64)

    lengths = sample_params["lengths"]
    valid = jnp.arange(S)[None, :] < (lengths + 2)[:, None]
    mask = jnp.where(valid, 0.0, NEG_INF)[:, None, :]                   # (B, 1, S)

    for l in range(N_LAYERS):
        attn = jnp.zeros((B, S, D_MODEL), jnp.float32)
        for h in range(N_HEADS):
            qh = X @ params["w_q"][l, h] + params["b_q"][l, h]
            kh = X @ params["w_k"][l, h] + params["b_k"][l, h]
            vh = X @ params["w_v"][l, h] + params["b_v"][l, h]
            s = jnp.einsum("bqe,bke->bqk", qh, kh) / math.sqrt(HEAD_DIM) + mask
            p = jax.nn.softmax(s, axis=-1)
            attn = attn + jnp.einsum("bqk,bke->bqe", p, vh) @ params["w_o"][l, h]
        attn = attn + params["b_o"][l]
        Xn = _layernorm(X + attn, params["g1"][l], params["be1"][l])
        Y = _gelu(Xn @ params["w1"][l] + params["b1"][l]) @ params["w2"][l] + params["b2"][l]
        X = _layernorm(Xn + Y, params["g2"][l], params["be2"][l])

    F1 = _layernorm(X[:, 1:2, :], params["g_fin"], params["b_fin"])
    return F1 @ params["w_out"] + params["b_out"]


# ----------------------------- parameters --------------------------------------
def init_params(key):
    ks = jax.random.split(key, 8)

    def nrm(k, shape, scale=0.05):
        return (scale * jax.random.normal(k, shape)).astype(jnp.float32)

    p = {
        "w_fe": nrm(ks[0], (H * W, FEAT)),
        "b_fe": jnp.zeros((1, FEAT), jnp.float32),
        "w_room": nrm(ks[1], (FEAT, EMB)),
        "b_room": jnp.zeros((1, EMB), jnp.float32),
        "empty_token": nrm(ks[2], (1, EMB), 1.0),        # nn.Parameter(torch.randn(1, 512))
        "w_class": nrm(ks[3], (N_CLASSES, 64)),          # fc_class (no bias)
        "w_fc": nrm(ks[4], (EMB, D_MODEL)),
        "b_fc": jnp.zeros((1, D_MODEL), jnp.float32),
        "g_fin": jnp.ones((1, D_MODEL), jnp.float32),
        "b_fin": jnp.zeros((1, D_MODEL), jnp.float32),
        "w_out": nrm(ks[5], (D_MODEL, INPUT_DIMS)),
        "b_out": jnp.zeros((1, INPUT_DIMS), jnp.float32),
        # FixedPositionalEncoding(proj_dims=64, val=0.1): sigma = 2*pi * 10**(2i/64)
        "sigma": jnp.asarray(
            2.0 * np.pi * (10.0 ** (2.0 * np.arange(PE_HALF) / 64.0))[None, :], jnp.float32),
    }
    lk = jax.random.split(ks[6], 6)
    # Per-head projection weights (reference layout; fused by pack_params).
    p["w_q"] = nrm(lk[0], (N_LAYERS, N_HEADS, D_MODEL, HEAD_DIM))
    p["w_k"] = nrm(lk[1], (N_LAYERS, N_HEADS, D_MODEL, HEAD_DIM))
    p["w_v"] = nrm(lk[2], (N_LAYERS, N_HEADS, D_MODEL, HEAD_DIM))
    p["b_q"] = jnp.zeros((N_LAYERS, N_HEADS, 1, HEAD_DIM), jnp.float32)
    p["b_k"] = jnp.zeros((N_LAYERS, N_HEADS, 1, HEAD_DIM), jnp.float32)
    p["b_v"] = jnp.zeros((N_LAYERS, N_HEADS, 1, HEAD_DIM), jnp.float32)
    p["w_o"] = nrm(lk[3], (N_LAYERS, N_HEADS, HEAD_DIM, D_MODEL))
    p["b_o"] = jnp.zeros((N_LAYERS, 1, D_MODEL), jnp.float32)
    p["g1"] = jnp.ones((N_LAYERS, 1, D_MODEL), jnp.float32)
    p["be1"] = jnp.zeros((N_LAYERS, 1, D_MODEL), jnp.float32)
    p["w1"] = nrm(lk[4], (N_LAYERS, D_MODEL, FF))
    p["b1"] = jnp.zeros((N_LAYERS, 1, FF), jnp.float32)
    p["w2"] = nrm(lk[5], (N_LAYERS, FF, D_MODEL))
    p["b2"] = jnp.zeros((N_LAYERS, 1, D_MODEL), jnp.float32)
    p["g2"] = jnp.ones((N_LAYERS, 1, D_MODEL), jnp.float32)
    p["be2"] = jnp.zeros((N_LAYERS, 1, D_MODEL), jnp.float32)
    return p


# ----------------------------- main ---------------------------------------------
if __name__ == "__main__":
    key = jax.random.PRNGKey(0)
    pkey, dkey = jax.random.split(key)
    params = init_params(pkey)
    packed = pack_params(params)

    dks = jax.random.split(dkey, 5)
    class_labels = jax.nn.one_hot(
        jax.random.randint(dks[0], (B, L), 0, N_CLASSES), N_CLASSES).astype(jnp.float32)
    translations = jax.random.uniform(dks[1], (B, L, 3), jnp.float32, -1.0, 1.0)
    sizes = jax.random.uniform(dks[2], (B, L, 3), jnp.float32, 0.0, 1.0)
    angles = jax.random.uniform(dks[3], (B, L, 1), jnp.float32, -np.pi, np.pi)
    room_layout = (jax.random.uniform(dks[4], (B, 1, H, W)) > 0.5).astype(jnp.float32)
    lengths = jnp.array([L, L - 3], dtype=jnp.int32)

    sample_params = {
        "class_labels": class_labels,
        "translations": translations,
        "sizes": sizes,
        "angles": angles,
        "room_layout": room_layout,
        "lengths": lengths,
    }

    out = atiss_forward(packed, sample_params)
    out = jax.block_until_ready(out)
    assert out.shape == (B, 1, INPUT_DIMS), out.shape

    ref = reference_forward(params, sample_params)
    # Kernel runs matmuls with bf16 operands (f32 accumulate, native MXU dtype);
    # reference is pure f32 -> slightly relaxed tolerance.
    np.testing.assert_allclose(np.asarray(out), np.asarray(ref), rtol=3e-2, atol=3e-2)

    print("KERNEL_OK")
</pallas_src>

<mosaic_0001>
module attributes {stable_mosaic.version = 11 : i64} {
  func.func @_fused_kernel(%arg0: memref<2x256xf32, #tpu.memory_space<vmem>>, %arg1: memref<16x17xf32, #tpu.memory_space<vmem>>, %arg2: memref<2xi32, #tpu.memory_space<smem>>, %arg3: memref<24x512xf32, #tpu.memory_space<vmem>>, %arg4: memref<256x32xbf16, #tpu.memory_space<vmem>>, %arg5: memref<32x512xbf16, #tpu.memory_space<vmem>>, %arg6: memref<10x64xbf16, #tpu.memory_space<vmem>>, %arg7: memref<512x64xbf16, #tpu.memory_space<vmem>>, %arg8: memref<2x64x384xbf16, #tpu.memory_space<vmem>>, %arg9: memref<2x128x64xbf16, #tpu.memory_space<vmem>>, %arg10: memref<64x128xbf16, #tpu.memory_space<vmem>>, %arg11: memref<2x128xf32, #tpu.memory_space<vmem>>) attributes {dimension_semantics = [], scalar_prefetch = 0 : i64, scratch_operands = 0 : i64, tpu.core_type = #tpu.core_type<tc>} {
    %c0 = arith.constant 0 : index
    %c0_0 = arith.constant 0 : index
    %0 = vector.load %arg3[%c0, %c0_0] : memref<24x512xf32, #tpu.memory_space<vmem>>, vector<1x32xf32>
    %c1 = arith.constant 1 : index
    %c0_1 = arith.constant 0 : index
    %1 = vector.load %arg3[%c1, %c0_1] : memref<24x512xf32, #tpu.memory_space<vmem>>, vector<1x512xf32>
    %c2 = arith.constant 2 : index
    %c0_2 = arith.constant 0 : index
    %2 = vector.load %arg3[%c2, %c0_2] : memref<24x512xf32, #tpu.memory_space<vmem>>, vector<1x512xf32>
    %c3 = arith.constant 3 : index
    %c0_3 = arith.constant 0 : index
    %3 = vector.load %arg3[%c3, %c0_3] : memref<24x512xf32, #tpu.memory_space<vmem>>, vector<1x32xf32>
    %c4 = arith.constant 4 : index
    %c0_4 = arith.constant 0 : index
    %4 = vector.load %arg3[%c4, %c0_4] : memref<24x512xf32, #tpu.memory_space<vmem>>, vector<1x64xf32>
    %c5 = arith.constant 5 : index
    %c0_5 = arith.constant 0 : index
    %5 = vector.load %arg3[%c5, %c0_5] : memref<24x512xf32, #tpu.memory_space<vmem>>, vector<1x64xf32>
    %c6 = arith.constant 6 : index
    %c0_6 = arith.constant 0 : index
    %6 = vector.load %arg3[%c6, %c0_6] : memref<24x512xf32, #tpu.memory_space<vmem>>, vector<1x64xf32>
    %c7 = arith.constant 7 : index
    %c0_7 = arith.constant 0 : index
    %7 = vector.load %arg3[%c7, %c0_7] : memref<24x512xf32, #tpu.memory_space<vmem>>, vector<1x128xf32>
    %c0_8 = arith.constant 0 : index
    %c0_9 = arith.constant 0 : index
    %8 = vector.load %arg0[%c0_8, %c0_9] : memref<2x256xf32, #tpu.memory_space<vmem>>, vector<2x256xf32>
    %9 = arith.truncf %8 : vector<2x256xf32> to vector<2x256xbf16>
    %c0_10 = arith.constant 0 : index
    %c0_11 = arith.constant 0 : index
    %10 = vector.load %arg4[%c0_10, %c0_11] : memref<256x32xbf16, #tpu.memory_space<vmem>>, vector<256x32xbf16>
    %cst = arith.constant dense<0.000000e+00> : vector<2x32xf32>
    %11 = tpu.matmul %9, %10, %cst {dimension_numbers = #tpu.dot_dimension_numbers<[1], [0], [0], [1], [0, 0, 1, 1], [], []>} : vector<2x256xbf16>, vector<256x32xbf16>, vector<2x32xf32> -> vector<2x32xf32>
    %12 = vector.broadcast %0 : vector<1x32xf32> to vector<2x32xf32>
    %13 = arith.addf %11, %12 : vector<2x32xf32>
    %cst_12 = arith.constant 0.000000e+00 : f32
    %14 = vector.broadcast %cst_12 : f32 to vector<2x32xf32>
    %15 = arith.maximumf %13, %14 : vector<2x32xf32>
    %16 = arith.truncf %15 : vector<2x32xf32> to vector<2x32xbf16>
    %c0_13 = arith.constant 0 : index
    %c0_14 = arith.constant 0 : index
    %17 = vector.load %arg5[%c0_13, %c0_14] : memref<32x512xbf16, #tpu.memory_space<vmem>>, vector<32x512xbf16>
    %cst_15 = arith.constant dense<0.000000e+00> : vector<2x512xf32>
    %18 = tpu.matmul %16, %17, %cst_15 {dimension_numbers = #tpu.dot_dimension_numbers<[1], [0], [0], [1], [0, 0, 1, 1], [], []>} : vector<2x32xbf16>, vector<32x512xbf16>, vector<2x512xf32> -> vector<2x512xf32>
    %19 = vector.broadcast %1 : vector<1x512xf32> to vector<2x512xf32>
    %20 = arith.addf %18, %19 : vector<2x512xf32>
    %c0_16 = arith.constant 0 : index
    %c0_17 = arith.constant 0 : index
    %21 = vector.load %arg1[%c0_16, %c0_17] : memref<16x17xf32, #tpu.memory_space<vmem>>, vector<16x17xf32>
    %22 = vector.extract_strided_slice %21 {offsets = [0, 0], sizes = [16, 10], strides = [1, 1]} : vector<16x17xf32> to vector<16x10xf32>
    %23 = arith.truncf %22 : vector<16x10xf32> to vector<16x10xbf16>
    %c0_18 = arith.constant 0 : index
    %c0_19 = arith.constant 0 : index
    %24 = vector.load %arg6[%c0_18, %c0_19] : memref<10x64xbf16, #tpu.memory_space<vmem>>, vector<10x64xbf16>
    %cst_20 = arith.constant dense<0.000000e+00> : vector<16x64xf32>
    %25 = tpu.matmul %23, %24, %cst_20 {dimension_numbers = #tpu.dot_dimension_numbers<[1], [0], [0], [1], [0, 0, 1, 1], [], []>} : vector<16x10xbf16>, vector<10x64xbf16>, vector<16x64xf32> -> vector<16x64xf32>
    %26 = vector.extract_strided_slice %21 {offsets = [0, 10], sizes = [16, 1], strides = [1, 1]} : vector<16x17xf32> to vector<16x1xf32>
    %27 = vector.broadcast %26 : vector<16x1xf32> to vector<16x32xf32>
    %28 = vector.broadcast %3 : vector<1x32xf32> to vector<16x32xf32>
    %29 = arith.mulf %27, %28 : vector<16x32xf32>
    %30 = math.sin %29 : vector<16x32xf32>
    %31 = math.cos %29 : vector<16x32xf32>
    %32 = tpu.concatenate %30, %31 in 1 : vector<16x32xf32>, vector<16x32xf32> -> vector<16x64xf32>
    %33 = vector.extract_strided_slice %21 {offsets = [0, 11], sizes = [16, 1], strides = [1, 1]} : vector<16x17xf32> to vector<16x1xf32>
    %34 = vector.broadcast %33 : vector<16x1xf32> to vector<16x32xf32>
    %35 = vector.broadcast %3 : vector<1x32xf32> to vector<16x32xf32>
    %36 = arith.mulf %34, %35 : vector<16x32xf32>
    %37 = math.sin %36 : vector<16x32xf32>
    %38 = math.cos %36 : vector<16x32xf32>
    %39 = tpu.concatenate %37, %38 in 1 : vector<16x32xf32>, vector<16x32xf32> -> vector<16x64xf32>
    %40 = vector.extract_strided_slice %21 {offsets = [0, 12], sizes = [16, 1], strides = [1, 1]} : vector<16x17xf32> to vector<16x1xf32>
    %41 = vector.broadcast %40 : vector<16x1xf32> to vector<16x32xf32>
    %42 = vector.broadcast %3 : vector<1x32xf32> to vector<16x32xf32>
    %43 = arith.mulf %41, %42 : vector<16x32xf32>
    %44 = math.sin %43 : vector<16x32xf32>
    %45 = math.cos %43 : vector<16x32xf32>
    %46 = tpu.concatenate %44, %45 in 1 : vector<16x32xf32>, vector<16x32xf32> -> vector<16x64xf32>
    %47 = vector.extract_strided_slice %21 {offsets = [0, 13], sizes = [16, 1], strides = [1, 1]} : vector<16x17xf32> to vector<16x1xf32>
    %48 = vector.broadcast %47 : vector<16x1xf32> to vector<16x32xf32>
    %49 = vector.broadcast %3 : vector<1x32xf32> to vector<16x32xf32>
    %50 = arith.mulf %48, %49 : vector<16x32xf32>
    %51 = math.sin %50 : vector<16x32xf32>
    %52 = math.cos %50 : vector<16x32xf32>
    %53 = tpu.concatenate %51, %52 in 1 : vector<16x32xf32>, vector<16x32xf32> -> vector<16x64xf32>
    %54 = vector.extract_strided_slice %21 {offsets = [0, 14], sizes = [16, 1], strides = [1, 1]} : vector<16x17xf32> to vector<16x1xf32>
    %55 = vector.broadcast %54 : vector<16x1xf32> to vector<16x32xf32>
    %56 = vector.broadcast %3 : vector<1x32xf32> to vector<16x32xf32>
    %57 = arith.mulf %55, %56 : vector<16x32xf32>
    %58 = math.sin %57 : vector<16x32xf32>
    %59 = math.cos %57 : vector<16x32xf32>
    %60 = tpu.concatenate %58, %59 in 1 : vector<16x32xf32>, vector<16x32xf32> -> vector<16x64xf32>
    %61 = vector.extract_strided_slice %21 {offsets = [0, 15], sizes = [16, 1], strides = [1, 1]} : vector<16x17xf32> to vector<16x1xf32>
    %62 = vector.broadcast %61 : vector<16x1xf32> to vector<16x32xf32>
    %63 = vector.broadcast %3 : vector<1x32xf32> to vector<16x32xf32>
    %64 = arith.mulf %62, %63 : vector<16x32xf32>
    %65 = math.sin %64 : vector<16x32xf32>
    %66 = math.cos %64 : vector<16x32xf32>
    %67 = tpu.concatenate %65, %66 in 1 : vector<16x32xf32>, vector<16x32xf32> -> vector<16x64xf32>
    %68 = vector.extract_strided_slice %21 {offsets = [0, 16], sizes = [16, 1], strides = [1, 1]} : vector<16x17xf32> to vector<16x1xf32>
    %69 = vector.broadcast %68 : vector<16x1xf32> to vector<16x32xf32>
    %70 = vector.broadcast %3 : vector<1x32xf32> to vector<16x32xf32>
    %71 = arith.mulf %69, %70 : vector<16x32xf32>
    %72 = math.sin %71 : vector<16x32xf32>
    %73 = math.cos %71 : vector<16x32xf32>
    %74 = tpu.concatenate %72, %73 in 1 : vector<16x32xf32>, vector<16x32xf32> -> vector<16x64xf32>
    %75 = tpu.concatenate %25, %32, %39, %46, %53, %60, %67, %74 in 1 : vector<16x64xf32>, vector<16x64xf32>, vector<16x64xf32>, vector<16x64xf32>, vector<16x64xf32>, vector<16x64xf32>, vector<16x64xf32>, vector<16x64xf32> -> vector<16x512xf32>
    %76 = vector.extract_strided_slice %20 {offsets = [0, 0], sizes = [1, 512], strides = [1, 1]} : vector<2x512xf32> to vector<1x512xf32>
    %77 = vector.extract_strided_slice %75 {offsets = [0, 0], sizes = [8, 512], strides = [1, 1]} : vector<16x512xf32> to vector<8x512xf32>
    %78 = vector.extract_strided_slice %20 {offsets = [1, 0], sizes = [1, 512], strides = [1, 1]} : vector<2x512xf32> to vector<1x512xf32>
    %79 = vector.extract_strided_slice %75 {offsets = [8, 0], sizes = [8, 512], strides = [1, 1]} : vector<16x512xf32> to vector<8x512xf32>
    %80 = tpu.concatenate %76, %2, %77, %78, %2, %79 in 0 : vector<1x512xf32>, vector<1x512xf32>, vector<8x512xf32>, vector<1x512xf32>, vector<1x512xf32>, vector<8x512xf32> -> vector<20x512xf32>
    %81 = arith.truncf %80 : vector<20x512xf32> to vector<20x512xbf16>
    %c0_21 = arith.constant 0 : index
    %c0_22 = arith.constant 0 : index
    %82 = vector.load %arg7[%c0_21, %c0_22] : memref<512x64xbf16, #tpu.memory_space<vmem>>, vector<512x64xbf16>
    %cst_23 = arith.constant dense<0.000000e+00> : vector<20x64xf32>
    %83 = tpu.matmul %81, %82, %cst_23 {dimension_numbers = #tpu.dot_dimension_numbers<[1], [0], [0], [1], [0, 0, 1, 1], [], []>} : vector<20x512xbf16>, vector<512x64xbf16>, vector<20x64xf32> -> vector<20x64xf32>
    %84 = vector.broadcast %4 : vector<1x64xf32> to vector<20x64xf32>
    %85 = arith.addf %83, %84 : vector<20x64xf32>
    %86 = tpu.iota {dimensions = array<i32: 1>} : vector<1x10xi32>
    %cst_24 = arith.constant -1.000000e+09 : f32
    %87 = vector.broadcast %cst_24 : f32 to vector<1x10xf32>
    %c0_25 = arith.constant 0 : index
    %88 = memref.load %arg2[%c0_25] : memref<2xi32, #tpu.memory_space<smem>>
    %c2_i32 = arith.constant 2 : i32
    %89 = arith.addi %88, %c2_i32 : i32
    %90 = vector.broadcast %89 : i32 to vector<1x10xi32>
    %91 = arith.cmpi slt, %86, %90 : vector<1x10xi32>
    %cst_26 = arith.constant 0.000000e+00 : f32
    %cst_27 = arith.constant -1.000000e+09 : f32
    %92 = vector.broadcast %cst_26 : f32 to vector<1x10xf32>
    %93 = vector.broadcast %cst_27 : f32 to vector<1x10xf32>
    %94 = arith.select %91, %92, %93 : vector<1x10xi1>, vector<1x10xf32>
    %95 = tpu.concatenate %94, %87 in 1 : vector<1x10xf32>, vector<1x10xf32> -> vector<1x20xf32>
    %96 = vector.shape_cast %95 : vector<1x20xf32> to vector<1x20xf32>
    %97 = vector.broadcast %96 : vector<1x20xf32> to vector<10x20xf32>
    %c1_28 = arith.constant 1 : index
    %98 = memref.load %arg2[%c1_28] : memref<2xi32, #tpu.memory_space<smem>>
    %c2_i32_29 = arith.constant 2 : i32
    %99 = arith.addi %98, %c2_i32_29 : i32
    %100 = vector.broadcast %99 : i32 to vector<1x10xi32>
    %101 = arith.cmpi slt, %86, %100 : vector<1x10xi32>
    %cst_30 = arith.constant 0.000000e+00 : f32
    %cst_31 = arith.constant -1.000000e+09 : f32
    %102 = vector.broadcast %cst_30 : f32 to vector<1x10xf32>
    %103 = vector.broadcast %cst_31 : f32 to vector<1x10xf32>
    %104 = arith.select %101, %102, %103 : vector<1x10xi1>, vector<1x10xf32>
    %105 = tpu.concatenate %87, %104 in 1 : vector<1x10xf32>, vector<1x10xf32> -> vector<1x20xf32>
    %106 = vector.shape_cast %105 : vector<1x20xf32> to vector<1x20xf32>
    %107 = vector.broadcast %106 : vector<1x20xf32> to vector<10x20xf32>
    %108 = tpu.concatenate %97, %107 in 0 : vector<10x20xf32>, vector<10x20xf32> -> vector<20x20xf32>
    %c0_32 = arith.constant 0 : index
    %c0_33 = arith.constant 0 : index
    %c0_34 = arith.constant 0 : index
    %109 = vector.load %arg8[%c0_32, %c0_33, %c0_34] : memref<2x64x384xbf16, #tpu.memory_space<vmem>>, vector<1x64x384xbf16>
    %110 = vector.shape_cast %109 : vector<1x64x384xbf16> to vector<64x384xbf16>
    %111 = vector.extract_strided_slice %110 {offsets = [0, 0], sizes = [64, 192], strides = [1, 1]} : vector<64x384xbf16> to vector<64x192xbf16>
    %112 = vector.extract_strided_slice %110 {offsets = [0, 192], sizes = [64, 64], strides = [1, 1]} : vector<64x384xbf16> to vector<64x64xbf16>
    %113 = vector.extract_strided_slice %110 {offsets = [0, 256], sizes = [64, 128], strides = [1, 1]} : vector<64x384xbf16> to vector<64x128xbf16>
    %c8 = arith.constant 8 : index
    %c0_35 = arith.constant 0 : index
    %114 = vector.load %arg3[%c8, %c0_35] : memref<24x512xf32, #tpu.memory_space<vmem>>, vector<1x192xf32>
    %c9 = arith.constant 9 : index
    %c0_36 = arith.constant 0 : index
    %115 = vector.load %arg3[%c9, %c0_36] : memref<24x512xf32, #tpu.memory_space<vmem>>, vector<1x64xf32>
    %c10 = arith.constant 10 : index
    %c0_37 = arith.constant 0 : index
    %116 = vector.load %arg3[%c10, %c0_37] : memref<24x512xf32, #tpu.memory_space<vmem>>, vector<1x64xf32>
    %c11 = arith.constant 11 : index
    %c0_38 = arith.constant 0 : index
    %117 = vector.load %arg3[%c11, %c0_38] : memref<24x512xf32, #tpu.memory_space<vmem>>, vector<1x64xf32>
    %c12 = arith.constant 12 : index
    %c0_39 = arith.constant 0 : index
    %118 = vector.load %arg3[%c12, %c0_39] : memref<24x512xf32, #tpu.memory_space<vmem>>, vector<1x128xf32>
    %c13 = arith.constant 13 : index
    %c0_40 = arith.constant 0 : index
    %119 = vector.load %arg3[%c13, %c0_40] : memref<24x512xf32, #tpu.memory_space<vmem>>, vector<1x64xf32>
    %c14 = arith.constant 14 : index
    %c0_41 = arith.constant 0 : index
    %120 = vector.load %arg3[%c14, %c0_41] : memref<24x512xf32, #tpu.memory_space<vmem>>, vector<1x64xf32>
    %c15 = arith.constant 15 : index
    %c0_42 = arith.constant 0 : index
    %121 = vector.load %arg3[%c15, %c0_42] : memref<24x512xf32, #tpu.memory_space<vmem>>, vector<1x64xf32>
    %122 = arith.truncf %85 : vector<20x64xf32> to vector<20x64xbf16>
    %cst_43 = arith.constant dense<0.000000e+00> : vector<20x192xf32>
    %123 = tpu.matmul %122, %111, %cst_43 {dimension_numbers = #tpu.dot_dimension_numbers<[1], [0], [0], [1], [0, 0, 1, 1], [], []>} : vector<20x64xbf16>, vector<64x192xbf16>, vector<20x192xf32> -> vector<20x192xf32>
    %124 = vector.broadcast %114 : vector<1x192xf32> to vector<20x192xf32>
    %125 = arith.addf %123, %124 : vector<20x192xf32>
    %126 = vector.extract_strided_slice %125 {offsets = [0, 0], sizes = [20, 32], strides = [1, 1]} : vector<20x192xf32> to vector<20x32xf32>
    %127 = arith.truncf %126 : vector<20x32xf32> to vector<20x32xbf16>
    %128 = vector.extract_strided_slice %125 {offsets = [0, 64], sizes = [20, 32], strides = [1, 1]} : vector<20x192xf32> to vector<20x32xf32>
    %129 = arith.truncf %128 : vector<20x32xf32> to vector<20x32xbf16>
    %130 = vector.extract_strided_slice %125 {offsets = [0, 128], sizes = [20, 32], strides = [1, 1]} : vector<20x192xf32> to vector<20x32xf32>
    %131 = arith.truncf %130 : vector<20x32xf32> to vector<20x32xbf16>
    %cst_44 = arith.constant dense<0.000000e+00> : vector<20x20xf32>
    %132 = tpu.matmul %127, %129, %cst_44 {dimension_numbers = #tpu.dot_dimension_numbers<[1], [1], [0], [0], [0, 0, 1, 0], [], []>} : vector<20x32xbf16>, vector<20x32xbf16>, vector<20x20xf32> -> vector<20x20xf32>
    %cst_45 = arith.constant 0.176776692 : f32
    %133 = vector.broadcast %cst_45 : f32 to vector<20x20xf32>
    %134 = arith.mulf %132, %133 : vector<20x20xf32>
    %135 = arith.addf %134, %108 : vector<20x20xf32>
    %cst_46 = arith.constant dense<0xFF800000> : vector<20xf32>
    %136 = vector.multi_reduction <maximumf>, %135, %cst_46 [1] : vector<20x20xf32> to vector<20xf32>
    %137 = vector.shape_cast %136 : vector<20xf32> to vector<20x1xf32>
    %138 = vector.broadcast %137 : vector<20x1xf32> to vector<20x20xf32>
    %139 = arith.subf %135, %138 : vector<20x20xf32>
    %140 = math.exp %139 : vector<20x20xf32>
    %cst_47 = arith.constant dense<0.000000e+00> : vector<20xf32>
    %141 = vector.multi_reduction <add>, %140, %cst_47 [1] : vector<20x20xf32> to vector<20xf32>
    %142 = vector.shape_cast %141 : vector<20xf32> to vector<20x1xf32>
    %143 = tpu.reciprocal %142 {approx = true} : vector<20x1xf32> -> vector<20x1xf32>
    %144 = vector.broadcast %143 : vector<20x1xf32> to vector<20x20xf32>
    %145 = arith.mulf %140, %144 : vector<20x20xf32>
    %146 = arith.truncf %145 : vector<20x20xf32> to vector<20x20xbf16>
    %cst_48 = arith.constant dense<0.000000e+00> : vector<20x32xf32>
    %147 = tpu.matmul %146, %131, %cst_48 {dimension_numbers = #tpu.dot_dimension_numbers<[1], [0], [0], [1], [0, 0, 1, 1], [], []>} : vector<20x20xbf16>, vector<20x32xbf16>, vector<20x32xf32> -> vector<20x32xf32>
    %148 = vector.extract_strided_slice %125 {offsets = [0, 32], sizes = [20, 32], strides = [1, 1]} : vector<20x192xf32> to vector<20x32xf32>
    %149 = arith.truncf %148 : vector<20x32xf32> to vector<20x32xbf16>
    %150 = vector.extract_strided_slice %125 {offsets = [0, 96], sizes = [20, 32], strides = [1, 1]} : vector<20x192xf32> to vector<20x32xf32>
    %151 = arith.truncf %150 : vector<20x32xf32> to vector<20x32xbf16>
    %152 = vector.extract_strided_slice %125 {offsets = [0, 160], sizes = [20, 32], strides = [1, 1]} : vector<20x192xf32> to vector<20x32xf32>
    %153 = arith.truncf %152 : vector<20x32xf32> to vector<20x32xbf16>
    %cst_49 = arith.constant dense<0.000000e+00> : vector<20x20xf32>
    %154 = tpu.matmul %149, %151, %cst_49 {dimension_numbers = #tpu.dot_dimension_numbers<[1], [1], [0], [0], [0, 0, 1, 0], [], []>} : vector<20x32xbf16>, vector<20x32xbf16>, vector<20x20xf32> -> vector<20x20xf32>
    %cst_50 = arith.constant 0.176776692 : f32
    %155 = vector.broadcast %cst_50 : f32 to vector<20x20xf32>
    %156 = arith.mulf %154, %155 : vector<20x20xf32>
    %157 = arith.addf %156, %108 : vector<20x20xf32>
    %cst_51 = arith.constant dense<0xFF800000> : vector<20xf32>
    %158 = vector.multi_reduction <maximumf>, %157, %cst_51 [1] : vector<20x20xf32> to vector<20xf32>
    %159 = vector.shape_cast %158 : vector<20xf32> to vector<20x1xf32>
    %160 = vector.broadcast %159 : vector<20x1xf32> to vector<20x20xf32>
    %161 = arith.subf %157, %160 : vector<20x20xf32>
    %162 = math.exp %161 : vector<20x20xf32>
    %cst_52 = arith.constant dense<0.000000e+00> : vector<20xf32>
    %163 = vector.multi_reduction <add>, %162, %cst_52 [1] : vector<20x20xf32> to vector<20xf32>
    %164 = vector.shape_cast %163 : vector<20xf32> to vector<20x1xf32>
    %165 = tpu.reciprocal %164 {approx = true} : vector<20x1xf32> -> vector<20x1xf32>
    %166 = vector.broadcast %165 : vector<20x1xf32> to vector<20x20xf32>
    %167 = arith.mulf %162, %166 : vector<20x20xf32>
    %168 = arith.truncf %167 : vector<20x20xf32> to vector<20x20xbf16>
    %cst_53 = arith.constant dense<0.000000e+00> : vector<20x32xf32>
    %169 = tpu.matmul %168, %153, %cst_53 {dimension_numbers = #tpu.dot_dimension_numbers<[1], [0], [0], [1], [0, 0, 1, 1], [], []>} : vector<20x20xbf16>, vector<20x32xbf16>, vector<20x32xf32> -> vector<20x32xf32>
    %170 = tpu.concatenate %147, %169 in 1 : vector<20x32xf32>, vector<20x32xf32> -> vector<20x64xf32>
    %171 = arith.truncf %170 : vector<20x64xf32> to vector<20x64xbf16>
    %cst_54 = arith.constant dense<0.000000e+00> : vector<20x64xf32>
    %172 = tpu.matmul %171, %112, %cst_54 {dimension_numbers = #tpu.dot_dimension_numbers<[1], [0], [0], [1], [0, 0, 1, 1], [], []>} : vector<20x64xbf16>, vector<64x64xbf16>, vector<20x64xf32> -> vector<20x64xf32>
    %173 = vector.broadcast %115 : vector<1x64xf32> to vector<20x64xf32>
    %174 = arith.addf %172, %173 : vector<20x64xf32>
    %175 = arith.addf %85, %174 : vector<20x64xf32>
    %cst_55 = arith.constant dense<0.000000e+00> : vector<20xf32>
    %176 = vector.multi_reduction <add>, %175, %cst_55 [1] : vector<20x64xf32> to vector<20xf32>
    %177 = vector.shape_cast %176 : vector<20xf32> to vector<20x1xf32>
    %cst_56 = arith.constant 6.400000e+01 : f32
    %178 = vector.broadcast %cst_56 : f32 to vector<20x1xf32>
    %179 = arith.divf %177, %178 : vector<20x1xf32>
    %180 = vector.broadcast %179 : vector<20x1xf32> to vector<20x64xf32>
    %181 = arith.subf %175, %180 : vector<20x64xf32>
    %182 = arith.mulf %181, %181 : vector<20x64xf32>
    %cst_57 = arith.constant dense<0.000000e+00> : vector<20xf32>
    %183 = vector.multi_reduction <add>, %182, %cst_57 [1] : vector<20x64xf32> to vector<20xf32>
    %184 = vector.shape_cast %183 : vector<20xf32> to vector<20x1xf32>
    %cst_58 = arith.constant 6.400000e+01 : f32
    %185 = vector.broadcast %cst_58 : f32 to vector<20x1xf32>
    %186 = arith.divf %184, %185 : vector<20x1xf32>
    %187 = vector.broadcast %179 : vector<20x1xf32> to vector<20x64xf32>
    %188 = arith.subf %175, %187 : vector<20x64xf32>
    %cst_59 = arith.constant 9.99999974E-6 : f32
    %189 = vector.broadcast %cst_59 : f32 to vector<20x1xf32>
    %190 = arith.addf %186, %189 : vector<20x1xf32>
    %191 = math.rsqrt %190 : vector<20x1xf32>
    %192 = vector.broadcast %191 : vector<20x1xf32> to vector<20x64xf32>
    %193 = arith.mulf %188, %192 : vector<20x64xf32>
    %194 = vector.broadcast %116 : vector<1x64xf32> to vector<20x64xf32>
    %195 = arith.mulf %193, %194 : vector<20x64xf32>
    %196 = vector.broadcast %117 : vector<1x64xf32> to vector<20x64xf32>
    %197 = arith.addf %195, %196 : vector<20x64xf32>
    %198 = arith.truncf %197 : vector<20x64xf32> to vector<20x64xbf16>
    %cst_60 = arith.constant dense<0.000000e+00> : vector<20x128xf32>
    %199 = tpu.matmul %198, %113, %cst_60 {dimension_numbers = #tpu.dot_dimension_numbers<[1], [0], [0], [1], [0, 0, 1, 1], [], []>} : vector<20x64xbf16>, vector<64x128xbf16>, vector<20x128xf32> -> vector<20x128xf32>
    %200 = vector.broadcast %118 : vector<1x128xf32> to vector<20x128xf32>
    %201 = arith.addf %199, %200 : vector<20x128xf32>
    %cst_61 = arith.constant 5.000000e-01 : f32
    %202 = vector.broadcast %cst_61 : f32 to vector<20x128xf32>
    %203 = arith.mulf %202, %201 : vector<20x128xf32>
    %cst_62 = arith.constant 4.471500e-02 : f32
    %204 = vector.broadcast %cst_62 : f32 to vector<20x128xf32>
    %205 = arith.mulf %204, %201 : vector<20x128xf32>
    %206 = arith.mulf %205, %201 : vector<20x128xf32>
    %207 = arith.mulf %206, %201 : vector<20x128xf32>
    %208 = arith.addf %201, %207 : vector<20x128xf32>
    %cst_63 = arith.constant 0.797884583 : f32
    %209 = vector.broadcast %cst_63 : f32 to vector<20x128xf32>
    %210 = arith.mulf %209, %208 : vector<20x128xf32>
    %211 = math.tanh %210 : vector<20x128xf32>
    %cst_64 = arith.constant 1.000000e+00 : f32
    %212 = vector.broadcast %cst_64 : f32 to vector<20x128xf32>
    %213 = arith.addf %212, %211 : vector<20x128xf32>
    %214 = arith.mulf %203, %213 : vector<20x128xf32>
    %215 = arith.truncf %214 : vector<20x128xf32> to vector<20x128xbf16>
    %c0_65 = arith.constant 0 : index
    %c0_66 = arith.constant 0 : index
    %c0_67 = arith.constant 0 : index
    %216 = vector.load %arg9[%c0_65, %c0_66, %c0_67] : memref<2x128x64xbf16, #tpu.memory_space<vmem>>, vector<1x128x64xbf16>
    %217 = vector.shape_cast %216 : vector<1x128x64xbf16> to vector<128x64xbf16>
    %cst_68 = arith.constant dense<0.000000e+00> : vector<20x64xf32>
    %218 = tpu.matmul %215, %217, %cst_68 {dimension_numbers = #tpu.dot_dimension_numbers<[1], [0], [0], [1], [0, 0, 1, 1], [], []>} : vector<20x128xbf16>, vector<128x64xbf16>, vector<20x64xf32> -> vector<20x64xf32>
    %219 = vector.broadcast %119 : vector<1x64xf32> to vector<20x64xf32>
    %220 = arith.addf %218, %219 : vector<20x64xf32>
    %221 = arith.addf %197, %220 : vector<20x64xf32>
    %cst_69 = arith.constant dense<0.000000e+00> : vector<20xf32>
    %222 = vector.multi_reduction <add>, %221, %cst_69 [1] : vector<20x64xf32> to vector<20xf32>
    %223 = vector.shape_cast %222 : vector<20xf32> to vector<20x1xf32>
    %cst_70 = arith.constant 6.400000e+01 : f32
    %224 = vector.broadcast %cst_70 : f32 to vector<20x1xf32>
    %225 = arith.divf %223, %224 : vector<20x1xf32>
    %226 = vector.broadcast %225 : vector<20x1xf32> to vector<20x64xf32>
    %227 = arith.subf %221, %226 : vector<20x64xf32>
    %228 = arith.mulf %227, %227 : vector<20x64xf32>
    %cst_71 = arith.constant dense<0.000000e+00> : vector<20xf32>
    %229 = vector.multi_reduction <add>, %228, %cst_71 [1] : vector<20x64xf32> to vector<20xf32>
    %230 = vector.shape_cast %229 : vector<20xf32> to vector<20x1xf32>
    %cst_72 = arith.constant 6.400000e+01 : f32
    %231 = vector.broadcast %cst_72 : f32 to vector<20x1xf32>
    %232 = arith.divf %230, %231 : vector<20x1xf32>
    %233 = vector.broadcast %225 : vector<20x1xf32> to vector<20x64xf32>
    %234 = arith.subf %221, %233 : vector<20x64xf32>
    %cst_73 = arith.constant 9.99999974E-6 : f32
    %235 = vector.broadcast %cst_73 : f32 to vector<20x1xf32>
    %236 = arith.addf %232, %235 : vector<20x1xf32>
    %237 = math.rsqrt %236 : vector<20x1xf32>
    %238 = vector.broadcast %237 : vector<20x1xf32> to vector<20x64xf32>
    %239 = arith.mulf %234, %238 : vector<20x64xf32>
    %240 = vector.broadcast %120 : vector<1x64xf32> to vector<20x64xf32>
    %241 = arith.mulf %239, %240 : vector<20x64xf32>
    %242 = vector.broadcast %121 : vector<1x64xf32> to vector<20x64xf32>
    %243 = arith.addf %241, %242 : vector<20x64xf32>
    %c1_74 = arith.constant 1 : index
    %c0_75 = arith.constant 0 : index
    %c0_76 = arith.constant 0 : index
    %244 = vector.load %arg8[%c1_74, %c0_75, %c0_76] : memref<2x64x384xbf16, #tpu.memory_space<vmem>>, vector<1x64x384xbf16>
    %245 = vector.shape_cast %244 : vector<1x64x384xbf16> to vector<64x384xbf16>
    %246 = vector.extract_strided_slice %245 {offsets = [0, 0], sizes = [64, 192], strides = [1, 1]} : vector<64x384xbf16> to vector<64x192xbf16>
    %247 = vector.extract_strided_slice %245 {offsets = [0, 192], sizes = [64, 64], strides = [1, 1]} : vector<64x384xbf16> to vector<64x64xbf16>
    %248 = vector.extract_strided_slice %245 {offsets = [0, 256], sizes = [64, 128], strides = [1, 1]} : vector<64x384xbf16> to vector<64x128xbf16>
    %c16 = arith.constant 16 : index
    %c0_77 = arith.constant 0 : index
    %249 = vector.load %arg3[%c16, %c0_77] : memref<24x512xf32, #tpu.memory_space<vmem>>, vector<1x192xf32>
    %c17 = arith.constant 17 : index
    %c0_78 = arith.constant 0 : index
    %250 = vector.load %arg3[%c17, %c0_78] : memref<24x512xf32, #tpu.memory_space<vmem>>, vector<1x64xf32>
    %c18 = arith.constant 18 : index
    %c0_79 = arith.constant 0 : index
    %251 = vector.load %arg3[%c18, %c0_79] : memref<24x512xf32, #tpu.memory_space<vmem>>, vector<1x64xf32>
    %c19 = arith.constant 19 : index
    %c0_80 = arith.constant 0 : index
    %252 = vector.load %arg3[%c19, %c0_80] : memref<24x512xf32, #tpu.memory_space<vmem>>, vector<1x64xf32>
    %c20 = arith.constant 20 : index
    %c0_81 = arith.constant 0 : index
    %253 = vector.load %arg3[%c20, %c0_81] : memref<24x512xf32, #tpu.memory_space<vmem>>, vector<1x128xf32>
    %c21 = arith.constant 21 : index
    %c0_82 = arith.constant 0 : index
    %254 = vector.load %arg3[%c21, %c0_82] : memref<24x512xf32, #tpu.memory_space<vmem>>, vector<1x64xf32>
    %c22 = arith.constant 22 : index
    %c0_83 = arith.constant 0 : index
    %255 = vector.load %arg3[%c22, %c0_83] : memref<24x512xf32, #tpu.memory_space<vmem>>, vector<1x64xf32>
    %c23 = arith.constant 23 : index
    %c0_84 = arith.constant 0 : index
    %256 = vector.load %arg3[%c23, %c0_84] : memref<24x512xf32, #tpu.memory_space<vmem>>, vector<1x64xf32>
    %257 = arith.truncf %243 : vector<20x64xf32> to vector<20x64xbf16>
    %cst_85 = arith.constant dense<0.000000e+00> : vector<20x192xf32>
    %258 = tpu.matmul %257, %246, %cst_85 {dimension_numbers = #tpu.dot_dimension_numbers<[1], [0], [0], [1], [0, 0, 1, 1], [], []>} : vector<20x64xbf16>, vector<64x192xbf16>, vector<20x192xf32> -> vector<20x192xf32>
    %259 = vector.broadcast %249 : vector<1x192xf32> to vector<20x192xf32>
    %260 = arith.addf %258, %259 : vector<20x192xf32>
    %261 = vector.extract_strided_slice %260 {offsets = [0, 0], sizes = [20, 32], strides = [1, 1]} : vector<20x192xf32> to vector<20x32xf32>
    %262 = arith.truncf %261 : vector<20x32xf32> to vector<20x32xbf16>
    %263 = vector.extract_strided_slice %260 {offsets = [0, 64], sizes = [20, 32], strides = [1, 1]} : vector<20x192xf32> to vector<20x32xf32>
    %264 = arith.truncf %263 : vector<20x32xf32> to vector<20x32xbf16>
    %265 = vector.extract_strided_slice %260 {offsets = [0, 128], sizes = [20, 32], strides = [1, 1]} : vector<20x192xf32> to vector<20x32xf32>
    %266 = arith.truncf %265 : vector<20x32xf32> to vector<20x32xbf16>
    %cst_86 = arith.constant dense<0.000000e+00> : vector<20x20xf32>
    %267 = tpu.matmul %262, %264, %cst_86 {dimension_numbers = #tpu.dot_dimension_numbers<[1], [1], [0], [0], [0, 0, 1, 0], [], []>} : vector<20x32xbf16>, vector<20x32xbf16>, vector<20x20xf32> -> vector<20x20xf32>
    %cst_87 = arith.constant 0.176776692 : f32
    %268 = vector.broadcast %cst_87 : f32 to vector<20x20xf32>
    %269 = arith.mulf %267, %268 : vector<20x20xf32>
    %270 = arith.addf %269, %108 : vector<20x20xf32>
    %cst_88 = arith.constant dense<0xFF800000> : vector<20xf32>
    %271 = vector.multi_reduction <maximumf>, %270, %cst_88 [1] : vector<20x20xf32> to vector<20xf32>
    %272 = vector.shape_cast %271 : vector<20xf32> to vector<20x1xf32>
    %273 = vector.broadcast %272 : vector<20x1xf32> to vector<20x20xf32>
    %274 = arith.subf %270, %273 : vector<20x20xf32>
    %275 = math.exp %274 : vector<20x20xf32>
    %cst_89 = arith.constant dense<0.000000e+00> : vector<20xf32>
    %276 = vector.multi_reduction <add>, %275, %cst_89 [1] : vector<20x20xf32> to vector<20xf32>
    %277 = vector.shape_cast %276 : vector<20xf32> to vector<20x1xf32>
    %278 = tpu.reciprocal %277 {approx = true} : vector<20x1xf32> -> vector<20x1xf32>
    %279 = vector.broadcast %278 : vector<20x1xf32> to vector<20x20xf32>
    %280 = arith.mulf %275, %279 : vector<20x20xf32>
    %281 = arith.truncf %280 : vector<20x20xf32> to vector<20x20xbf16>
    %cst_90 = arith.constant dense<0.000000e+00> : vector<20x32xf32>
    %282 = tpu.matmul %281, %266, %cst_90 {dimension_numbers = #tpu.dot_dimension_numbers<[1], [0], [0], [1], [0, 0, 1, 1], [], []>} : vector<20x20xbf16>, vector<20x32xbf16>, vector<20x32xf32> -> vector<20x32xf32>
    %283 = vector.extract_strided_slice %260 {offsets = [0, 32], sizes = [20, 32], strides = [1, 1]} : vector<20x192xf32> to vector<20x32xf32>
    %284 = arith.truncf %283 : vector<20x32xf32> to vector<20x32xbf16>
    %285 = vector.extract_strided_slice %260 {offsets = [0, 96], sizes = [20, 32], strides = [1, 1]} : vector<20x192xf32> to vector<20x32xf32>
    %286 = arith.truncf %285 : vector<20x32xf32> to vector<20x32xbf16>
    %287 = vector.extract_strided_slice %260 {offsets = [0, 160], sizes = [20, 32], strides = [1, 1]} : vector<20x192xf32> to vector<20x32xf32>
    %288 = arith.truncf %287 : vector<20x32xf32> to vector<20x32xbf16>
    %cst_91 = arith.constant dense<0.000000e+00> : vector<20x20xf32>
    %289 = tpu.matmul %284, %286, %cst_91 {dimension_numbers = #tpu.dot_dimension_numbers<[1], [1], [0], [0], [0, 0, 1, 0], [], []>} : vector<20x32xbf16>, vector<20x32xbf16>, vector<20x20xf32> -> vector<20x20xf32>
    %cst_92 = arith.constant 0.176776692 : f32
    %290 = vector.broadcast %cst_92 : f32 to vector<20x20xf32>
    %291 = arith.mulf %289, %290 : vector<20x20xf32>
    %292 = arith.addf %291, %108 : vector<20x20xf32>
    %cst_93 = arith.constant dense<0xFF800000> : vector<20xf32>
    %293 = vector.multi_reduction <maximumf>, %292, %cst_93 [1] : vector<20x20xf32> to vector<20xf32>
    %294 = vector.shape_cast %293 : vector<20xf32> to vector<20x1xf32>
    %295 = vector.broadcast %294 : vector<20x1xf32> to vector<20x20xf32>
    %296 = arith.subf %292, %295 : vector<20x20xf32>
    %297 = math.exp %296 : vector<20x20xf32>
    %cst_94 = arith.constant dense<0.000000e+00> : vector<20xf32>
    %298 = vector.multi_reduction <add>, %297, %cst_94 [1] : vector<20x20xf32> to vector<20xf32>
    %299 = vector.shape_cast %298 : vector<20xf32> to vector<20x1xf32>
    %300 = tpu.reciprocal %299 {approx = true} : vector<20x1xf32> -> vector<20x1xf32>
    %301 = vector.broadcast %300 : vector<20x1xf32> to vector<20x20xf32>
    %302 = arith.mulf %297, %301 : vector<20x20xf32>
    %303 = arith.truncf %302 : vector<20x20xf32> to vector<20x20xbf16>
    %cst_95 = arith.constant dense<0.000000e+00> : vector<20x32xf32>
    %304 = tpu.matmul %303, %288, %cst_95 {dimension_numbers = #tpu.dot_dimension_numbers<[1], [0], [0], [1], [0, 0, 1, 1], [], []>} : vector<20x20xbf16>, vector<20x32xbf16>, vector<20x32xf32> -> vector<20x32xf32>
    %305 = tpu.concatenate %282, %304 in 1 : vector<20x32xf32>, vector<20x32xf32> -> vector<20x64xf32>
    %306 = arith.truncf %305 : vector<20x64xf32> to vector<20x64xbf16>
    %cst_96 = arith.constant dense<0.000000e+00> : vector<20x64xf32>
    %307 = tpu.matmul %306, %247, %cst_96 {dimension_numbers = #tpu.dot_dimension_numbers<[1], [0], [0], [1], [0, 0, 1, 1], [], []>} : vector<20x64xbf16>, vector<64x64xbf16>, vector<20x64xf32> -> vector<20x64xf32>
    %308 = vector.broadcast %250 : vector<1x64xf32> to vector<20x64xf32>
    %309 = arith.addf %307, %308 : vector<20x64xf32>
    %310 = arith.addf %243, %309 : vector<20x64xf32>
    %cst_97 = arith.constant dense<0.000000e+00> : vector<20xf32>
    %311 = vector.multi_reduction <add>, %310, %cst_97 [1] : vector<20x64xf32> to vector<20xf32>
    %312 = vector.shape_cast %311 : vector<20xf32> to vector<20x1xf32>
    %cst_98 = arith.constant 6.400000e+01 : f32
    %313 = vector.broadcast %cst_98 : f32 to vector<20x1xf32>
    %314 = arith.divf %312, %313 : vector<20x1xf32>
    %315 = vector.broadcast %314 : vector<20x1xf32> to vector<20x64xf32>
    %316 = arith.subf %310, %315 : vector<20x64xf32>
    %317 = arith.mulf %316, %316 : vector<20x64xf32>
    %cst_99 = arith.constant dense<0.000000e+00> : vector<20xf32>
    %318 = vector.multi_reduction <add>, %317, %cst_99 [1] : vector<20x64xf32> to vector<20xf32>
    %319 = vector.shape_cast %318 : vector<20xf32> to vector<20x1xf32>
    %cst_100 = arith.constant 6.400000e+01 : f32
    %320 = vector.broadcast %cst_100 : f32 to vector<20x1xf32>
    %321 = arith.divf %319, %320 : vector<20x1xf32>
    %322 = vector.broadcast %314 : vector<20x1xf32> to vector<20x64xf32>
    %323 = arith.subf %310, %322 : vector<20x64xf32>
    %cst_101 = arith.constant 9.99999974E-6 : f32
    %324 = vector.broadcast %cst_101 : f32 to vector<20x1xf32>
    %325 = arith.addf %321, %324 : vector<20x1xf32>
    %326 = math.rsqrt %325 : vector<20x1xf32>
    %327 = vector.broadcast %326 : vector<20x1xf32> to vector<20x64xf32>
    %328 = arith.mulf %323, %327 : vector<20x64xf32>
    %329 = vector.broadcast %251 : vector<1x64xf32> to vector<20x64xf32>
    %330 = arith.mulf %328, %329 : vector<20x64xf32>
    %331 = vector.broadcast %252 : vector<1x64xf32> to vector<20x64xf32>
    %332 = arith.addf %330, %331 : vector<20x64xf32>
    %333 = arith.truncf %332 : vector<20x64xf32> to vector<20x64xbf16>
    %cst_102 = arith.constant dense<0.000000e+00> : vector<20x128xf32>
    %334 = tpu.matmul %333, %248, %cst_102 {dimension_numbers = #tpu.dot_dimension_numbers<[1], [0], [0], [1], [0, 0, 1, 1], [], []>} : vector<20x64xbf16>, vector<64x128xbf16>, vector<20x128xf32> -> vector<20x128xf32>
    %335 = vector.broadcast %253 : vector<1x128xf32> to vector<20x128xf32>
    %336 = arith.addf %334, %335 : vector<20x128xf32>
    %cst_103 = arith.constant 5.000000e-01 : f32
    %337 = vector.broadcast %cst_103 : f32 to vector<20x128xf32>
    %338 = arith.mulf %337, %336 : vector<20x128xf32>
    %cst_104 = arith.constant 4.471500e-02 : f32
    %339 = vector.broadcast %cst_104 : f32 to vector<20x128xf32>
    %340 = arith.mulf %339, %336 : vector<20x128xf32>
    %341 = arith.mulf %340, %336 : vector<20x128xf32>
    %342 = arith.mulf %341, %336 : vector<20x128xf32>
    %343 = arith.addf %336, %342 : vector<20x128xf32>
    %cst_105 = arith.constant 0.797884583 : f32
    %344 = vector.broadcast %cst_105 : f32 to vector<20x128xf32>
    %345 = arith.mulf %344, %343 : vector<20x128xf32>
    %346 = math.tanh %345 : vector<20x128xf32>
    %cst_106 = arith.constant 1.000000e+00 : f32
    %347 = vector.broadcast %cst_106 : f32 to vector<20x128xf32>
    %348 = arith.addf %347, %346 : vector<20x128xf32>
    %349 = arith.mulf %338, %348 : vector<20x128xf32>
    %350 = arith.truncf %349 : vector<20x128xf32> to vector<20x128xbf16>
    %c1_107 = arith.constant 1 : index
    %c0_108 = arith.constant 0 : index
    %c0_109 = arith.constant 0 : index
    %351 = vector.load %arg9[%c1_107, %c0_108, %c0_109] : memref<2x128x64xbf16, #tpu.memory_space<vmem>>, vector<1x128x64xbf16>
    %352 = vector.shape_cast %351 : vector<1x128x64xbf16> to vector<128x64xbf16>
    %cst_110 = arith.constant dense<0.000000e+00> : vector<20x64xf32>
    %353 = tpu.matmul %350, %352, %cst_110 {dimension_numbers = #tpu.dot_dimension_numbers<[1], [0], [0], [1], [0, 0, 1, 1], [], []>} : vector<20x128xbf16>, vector<128x64xbf16>, vector<20x64xf32> -> vector<20x64xf32>
    %354 = vector.broadcast %254 : vector<1x64xf32> to vector<20x64xf32>
    %355 = arith.addf %353, %354 : vector<20x64xf32>
    %356 = arith.addf %332, %355 : vector<20x64xf32>
    %cst_111 = arith.constant dense<0.000000e+00> : vector<20xf32>
    %357 = vector.multi_reduction <add>, %356, %cst_111 [1] : vector<20x64xf32> to vector<20xf32>
    %358 = vector.shape_cast %357 : vector<20xf32> to vector<20x1xf32>
    %cst_112 = arith.constant 6.400000e+01 : f32
    %359 = vector.broadcast %cst_112 : f32 to vector<20x1xf32>
    %360 = arith.divf %358, %359 : vector<20x1xf32>
    %361 = vector.broadcast %360 : vector<20x1xf32> to vector<20x64xf32>
    %362 = arith.subf %356, %361 : vector<20x64xf32>
    %363 = arith.mulf %362, %362 : vector<20x64xf32>
    %cst_113 = arith.constant dense<0.000000e+00> : vector<20xf32>
    %364 = vector.multi_reduction <add>, %363, %cst_113 [1] : vector<20x64xf32> to vector<20xf32>
    %365 = vector.shape_cast %364 : vector<20xf32> to vector<20x1xf32>
    %cst_114 = arith.constant 6.400000e+01 : f32
    %366 = vector.broadcast %cst_114 : f32 to vector<20x1xf32>
    %367 = arith.divf %365, %366 : vector<20x1xf32>
    %368 = vector.broadcast %360 : vector<20x1xf32> to vector<20x64xf32>
    %369 = arith.subf %356, %368 : vector<20x64xf32>
    %cst_115 = arith.constant 9.99999974E-6 : f32
    %370 = vector.broadcast %cst_115 : f32 to vector<20x1xf32>
    %371 = arith.addf %367, %370 : vector<20x1xf32>
    %372 = math.rsqrt %371 : vector<20x1xf32>
    %373 = vector.broadcast %372 : vector<20x1xf32> to vector<20x64xf32>
    %374 = arith.mulf %369, %373 : vector<20x64xf32>
    %375 = vector.broadcast %255 : vector<1x64xf32> to vector<20x64xf32>
    %376 = arith.mulf %374, %375 : vector<20x64xf32>
    %377 = vector.broadcast %256 : vector<1x64xf32> to vector<20x64xf32>
    %378 = arith.addf %376, %377 : vector<20x64xf32>
    %379 = vector.extract_strided_slice %378 {offsets = [1, 0], sizes = [1, 64], strides = [1, 1]} : vector<20x64xf32> to vector<1x64xf32>
    %380 = vector.extract_strided_slice %378 {offsets = [11, 0], sizes = [1, 64], strides = [1, 1]} : vector<20x64xf32> to vector<1x64xf32>
    %381 = tpu.concatenate %379, %380 in 0 : vector<1x64xf32>, vector<1x64xf32> -> vector<2x64xf32>
    %cst_116 = arith.constant dense<0.000000e+00> : vector<2xf32>
    %382 = vector.multi_reduction <add>, %381, %cst_116 [1] : vector<2x64xf32> to vector<2xf32>
    %383 = vector.shape_cast %382 : vector<2xf32> to vector<2x1xf32>
    %cst_117 = arith.constant 6.400000e+01 : f32
    %384 = vector.broadcast %cst_117 : f32 to vector<2x1xf32>
    %385 = arith.divf %383, %384 : vector<2x1xf32>
    %386 = vector.broadcast %385 : vector<2x1xf32> to vector<2x64xf32>
    %387 = arith.subf %381, %386 : vector<2x64xf32>
    %388 = arith.mulf %387, %387 : vector<2x64xf32>
    %cst_118 = arith.constant dense<0.000000e+00> : vector<2xf32>
    %389 = vector.multi_reduction <add>, %388, %cst_118 [1] : vector<2x64xf32> to vector<2xf32>
    %390 = vector.shape_cast %389 : vector<2xf32> to vector<2x1xf32>
    %cst_119 = arith.constant 6.400000e+01 : f32
    %391 = vector.broadcast %cst_119 : f32 to vector<2x1xf32>
    %392 = arith.divf %390, %391 : vector<2x1xf32>
    %393 = vector.broadcast %385 : vector<2x1xf32> to vector<2x64xf32>
    %394 = arith.subf %381, %393 : vector<2x64xf32>
    %cst_120 = arith.constant 9.99999974E-6 : f32
    %395 = vector.broadcast %cst_120 : f32 to vector<2x1xf32>
    %396 = arith.addf %392, %395 : vector<2x1xf32>
    %397 = math.rsqrt %396 : vector<2x1xf32>
    %398 = vector.broadcast %397 : vector<2x1xf32> to vector<2x64xf32>
    %399 = arith.mulf %394, %398 : vector<2x64xf32>
    %400 = vector.broadcast %5 : vector<1x64xf32> to vector<2x64xf32>
    %401 = arith.mulf %399, %400 : vector<2x64xf32>
    %402 = vector.broadcast %6 : vector<1x64xf32> to vector<2x64xf32>
    %403 = arith.addf %401, %402 : vector<2x64xf32>
    %404 = arith.truncf %403 : vector<2x64xf32> to vector<2x64xbf16>
    %c0_121 = arith.constant 0 : index
    %c0_122 = arith.constant 0 : index
    %405 = vector.load %arg10[%c0_121, %c0_122] : memref<64x128xbf16, #tpu.memory_space<vmem>>, vector<64x128xbf16>
    %cst_123 = arith.constant dense<0.000000e+00> : vector<2x128xf32>
    %406 = tpu.matmul %404, %405, %cst_123 {dimension_numbers = #tpu.dot_dimension_numbers<[1], [0], [0], [1], [0, 0, 1, 1], [], []>} : vector<2x64xbf16>, vector<64x128xbf16>, vector<2x128xf32> -> vector<2x128xf32>
    %407 = vector.broadcast %7 : vector<1x128xf32> to vector<2x128xf32>
    %408 = arith.addf %406, %407 : vector<2x128xf32>
    %c0_124 = arith.constant 0 : index
    %c0_125 = arith.constant 0 : index
    %409 = vector.load %arg11[%c0_124, %c0_125] : memref<2x128xf32, #tpu.memory_space<vmem>>, vector<2x128xf32>
    tpu.vector_store %arg11[%c0_124, %c0_125], %408 {strides = array<i32>} : memref<2x128xf32, #tpu.memory_space<vmem>>, vector<2x128xf32>,
    return
  }
}

</mosaic_0001>

<llo_original>
// kernel: tpu_custom_call.1
$region0: #{tpu_custom_call.1}
  #allocation0 [shape = 'u32[]', space=smem, size = 0x4, offset = 0x4, fixed_abs, tag = 'smem constant byte address 0x4 - core index']
  #allocation1 [shape = 'u32[144,128]{1,0:T(1,128)}', space=vmem, size = 0x12000, scoped, tag = 'internal scratch']
  %s0 = inlined_call_operand.vmem [shape: f32[2,256], index: 0, kind: input, shape index: {}]
  %s1 = inlined_call_operand.vmem [shape: f32[16,17], index: 1, kind: input, shape index: {}]
  %s2 = inlined_call_operand.vmem [shape: s32[2], index: 2, kind: input, shape index: {}]
  %s3 = inlined_call_operand.vmem [shape: f32[24,512], index: 3, kind: input, shape index: {}]
  %s4 = inlined_call_operand.vmem [shape: bf16[256,32], index: 4, kind: input, shape index: {}]
  %s5 = inlined_call_operand.vmem [shape: bf16[32,512], index: 5, kind: input, shape index: {}]
  %s6 = inlined_call_operand.vmem [shape: bf16[10,64], index: 6, kind: input, shape index: {}]
  %s7 = inlined_call_operand.vmem [shape: bf16[512,64], index: 7, kind: input, shape index: {}]
  %s8 = inlined_call_operand.vmem [shape: bf16[2,64,384], index: 8, kind: input, shape index: {}]
  %s9 = inlined_call_operand.vmem [shape: bf16[2,128,64], index: 9, kind: input, shape index: {}]
  %s10 = inlined_call_operand.vmem [shape: bf16[64,128], index: 10, kind: input, shape index: {}]
  %s11 = inlined_call_operand.hbm [shape: f32[2,128], index: 11, kind: output, shape index: {}]
  %s12 = sld [smem:[#allocation0]]
  $region58: #{tpu_custom_call.1} parent=0
    _
  %s14 = ssub.s32 1, %s12
  %s15 = scalar_select 0, %s14, %s12
  $region1: #{tpu_custom_call.1} parent=0
    #allocation2 [shape = 'u8[512]{0}', space=smem, size = 0x200, scoped, tag = 'input window, operand 2, single buffered']
    #allocation3 [shape = 's32[1]{0}', space=sflag, size = 0x4, scoped, tag = 'scoped memory for tpu_custom_call.1']
    #allocation4 [shape = 's32[1]{0}', space=sflag, size = 0x4, scoped, tag = 'scoped memory for tpu_custom_call.1']
    #allocation5 [shape = 'u8[1024]{0}', space=vmem, size = 0x400, scoped, tag = 'output window, operand 0, single buffered']
    %16 = vsyncpa [#allocation4], 0
    %17 = vsyncpa [#allocation3], 0
    // Predicated region
    $region2: #{tpu_custom_call.1} parent=1 // pred_check
      _
    $region3: #{tpu_custom_call.1} parent=1 // pred_check_branch
      %19 = sbr.rel (0) target = $region5
    $region4: #{tpu_custom_call.1} parent=1 // pred_region
      _
    $region5: #{tpu_custom_call.1} parent=1 // pred_fallthru
      _
    // Predicated region
    $region6: #{tpu_custom_call.1} parent=1 // pred_check
      _
    $region7: #{tpu_custom_call.1} parent=1 // pred_check_branch
      %21 = sbr.rel (0) target = $region9
    $region8: #{tpu_custom_call.1} parent=1 // pred_region
      _
    $region9: #{tpu_custom_call.1} parent=1 // pred_fallthru
      _
    // Predicated region
    $region10: #{tpu_custom_call.1} parent=1 // pred_check
      _
    $region11: #{tpu_custom_call.1} parent=1 // pred_check_branch
      %23 = sbr.rel (0) target = $region13
    $region12: #{tpu_custom_call.1} parent=1 // pred_region
      %s25 = ssub.s32 16, 16
      %26 = vsyncadd [#allocation4], %s25
      %s28 = sshll.u32 %s2, 4
      %s29 = int_to_ptr.vmem [resolvable:$true] %s28
      %31 = dma.vmem_to_smem %s29, 16, [#allocation2], [#allocation4]
    $region13: #{tpu_custom_call.1} parent=1 // pred_fallthru
      _
    // Predicated region
    $region14: #{tpu_custom_call.1} parent=1 // pred_check
      _
    $region15: #{tpu_custom_call.1} parent=1 // pred_check_branch
      %33 = sbr.rel (0) target = $region17
    $region16: #{tpu_custom_call.1} parent=1 // pred_region
      _
    $region17: #{tpu_custom_call.1} parent=1 // pred_fallthru
      _
    // Predicated region
    $region18: #{tpu_custom_call.1} parent=1 // pred_check
      _
    $region19: #{tpu_custom_call.1} parent=1 // pred_check_branch
      %35 = sbr.rel (0) target = $region21
    $region20: #{tpu_custom_call.1} parent=1 // pred_region
      _
    $region21: #{tpu_custom_call.1} parent=1 // pred_fallthru
      _
    // Predicated region
    $region22: #{tpu_custom_call.1} parent=1 // pred_check
      _
    $region23: #{tpu_custom_call.1} parent=1 // pred_check_branch
      %37 = sbr.rel (0) target = $region25
    $region24: #{tpu_custom_call.1} parent=1 // pred_region
      _
    $region25: #{tpu_custom_call.1} parent=1 // pred_fallthru
      _
    // Predicated region
    $region26: #{tpu_custom_call.1} parent=1 // pred_check
      _
    $region27: #{tpu_custom_call.1} parent=1 // pred_check_branch
      %39 = sbr.rel (0) target = $region29
    $region28: #{tpu_custom_call.1} parent=1 // pred_region
      _
    $region29: #{tpu_custom_call.1} parent=1 // pred_fallthru
      _
    // Predicated region
    $region30: #{tpu_custom_call.1} parent=1 // pred_check
      _
    $region31: #{tpu_custom_call.1} parent=1 // pred_check_branch
      %41 = sbr.rel (0) target = $region33
    $region32: #{tpu_custom_call.1} parent=1 // pred_region
      _
    $region33: #{tpu_custom_call.1} parent=1 // pred_fallthru
      _
    // Predicated region
    $region34: #{tpu_custom_call.1} parent=1 // pred_check
      _
    $region35: #{tpu_custom_call.1} parent=1 // pred_check_branch
      %43 = sbr.rel (0) target = $region37
    $region36: #{tpu_custom_call.1} parent=1 // pred_region
      _
    $region37: #{tpu_custom_call.1} parent=1 // pred_fallthru
      _
    // Predicated region
    $region38: #{tpu_custom_call.1} parent=1 // pred_check
      _
    $region39: #{tpu_custom_call.1} parent=1 // pred_check_branch
      %45 = sbr.rel (0) target = $region41
    $region40: #{tpu_custom_call.1} parent=1 // pred_region
      _
    $region41: #{tpu_custom_call.1} parent=1 // pred_fallthru
      _
    // Predicated region
    $region42: #{tpu_custom_call.1} parent=1 // pred_check
      _
    $region43: #{tpu_custom_call.1} parent=1 // pred_check_branch
      %47 = sbr.rel (0) target = $region45
    $region44: #{tpu_custom_call.1} parent=1 // pred_region
      _
    $region45: #{tpu_custom_call.1} parent=1 // pred_fallthru
      _
    // Predicated region
    $region46: #{tpu_custom_call.1} parent=1 // pred_check
      _
    $region47: #{tpu_custom_call.1} parent=1 // pred_check_branch
      %49 = sbr.rel (0) target = $region49
    $region48: #{tpu_custom_call.1} parent=1 // pred_region
      %50 = dma.done [#allocation4], 16
    $region49: #{tpu_custom_call.1} parent=1 // pred_fallthru
      _
    %51 = sfence
    %v53 = vld [vmem:[%s3] ss:$0 sm:$0xff]
    %s54 = scalar_lea.vmem %s3, 1
    %v55 = vld [vmem:[%s54] ss:$8 sm:$0xf]
    %s56 = scalar_lea.vmem %s3, 2
    %v57 = vld [vmem:[%s56] ss:$8 sm:$0xf]
    %v58 = vld [vmem:[%s3 + $0x3] ss:$0 sm:$0xff]
    %v59 = vld [vmem:[%s3 + $0x4] ss:$0 sm:$0xff]
    %v60 = vld [vmem:[%s3 + $0x5] ss:$0 sm:$0xff]
    %v61 = vld [vmem:[%s3 + $0x6] ss:$0 sm:$0xff]
    %v62 = vld [vmem:[%s3 + $0x7] ss:$0 sm:$0xff]
    %v63 = vld [vmem:[%s0] sm:$0xf]
    %v66 = vunpack.c.l.s4 1983009808
    %v67 = vunpack.c.0.s8 %v66
    %v68 = vlaneseq
    %v69 = vshrl.u32 %v68, 7
    %v70 = vsub.s32 %v67, %v69
    %v71 = vrot.slane %v63, %v70
    %v72 = vcombine.high %v71, %v71
    %v75 = vpack.c.bf16 %v71, %v71
    %v76 = vpack.c.bf16 %v72, %v72
    %v77 = vld [vmem:[%s4] sm:$0xf]
    %v78 = vld [vmem:[%s4 + $0x4] sm:$0xf]
    %v79 = vld [vmem:[%s4 + $0x8] sm:$0xf]
    %v80 = vld [vmem:[%s4 + $0xc] sm:$0xf]
    %v81 = vld [vmem:[%s4 + $0x10] sm:$0xf]
    %v82 = vld [vmem:[%s4 + $0x14] sm:$0xf]
    %v83 = vld [vmem:[%s4 + $0x18] sm:$0xf]
    %v84 = vld [vmem:[%s4 + $0x1c] sm:$0xf]
    %v85 = vld [vmem:[%s4 + $0x20] sm:$0xf]
    %v86 = vld [vmem:[%s4 + $0x24] sm:$0xf]
    %v87 = vld [vmem:[%s4 + $0x28] sm:$0xf]
    %v88 = vld [vmem:[%s4 + $0x2c] sm:$0xf]
    %v89 = vld [vmem:[%s4 + $0x30] sm:$0xf]
    %v90 = vld [vmem:[%s4 + $0x34] sm:$0xf]
    %v91 = vld [vmem:[%s4 + $0x38] sm:$0xf]
    %v92 = vld [vmem:[%s4 + $0x3c] sm:$0xf]
    %v93 = vld [vmem:[%s4 + $0x40] sm:$0xf]
    %v94 = vld [vmem:[%s4 + $0x44] sm:$0xf]
    %v95 = vld [vmem:[%s4 + $0x48] sm:$0xf]
    %v96 = vld [vmem:[%s4 + $0x4c] sm:$0xf]
    %v97 = vld [vmem:[%s4 + $0x50] sm:$0xf]
    %v98 = vld [vmem:[%s4 + $0x54] sm:$0xf]
    %v99 = vld [vmem:[%s4 + $0x58] sm:$0xf]
    %v100 = vld [vmem:[%s4 + $0x5c] sm:$0xf]
    %v101 = vld [vmem:[%s4 + $0x60] sm:$0xf]
    %v102 = vld [vmem:[%s4 + $0x64] sm:$0xf]
    %v103 = vld [vmem:[%s4 + $0x68] sm:$0xf]
    %v104 = vld [vmem:[%s4 + $0x6c] sm:$0xf]
    %v105 = vld [vmem:[%s4 + $0x70] sm:$0xf]
    %v106 = vld [vmem:[%s4 + $0x74] sm:$0xf]
    %v107 = vld [vmem:[%s4 + $0x78] sm:$0xf]
    %v108 = vld [vmem:[%s4 + $0x7c] sm:$0xf]
    %v141 = vunpack.c.l.b16 %v77
    %v142 = vunpack.c.l.b16 %v78
    %v143 = vunpack.c.l.b16 %v79
    %v144 = vunpack.c.l.b16 %v80
    %v145 = vunpack.c.l.b16 %v81
    %v146 = vunpack.c.l.b16 %v82
    %v147 = vunpack.c.l.b16 %v83
    %v148 = vunpack.c.l.b16 %v84
    %v149 = vunpack.c.l.b16 %v85
    %v150 = vunpack.c.l.b16 %v86
    %v151 = vunpack.c.l.b16 %v87
    %v152 = vunpack.c.l.b16 %v88
    %v153 = vunpack.c.l.b16 %v89
    %v154 = vunpack.c.l.b16 %v90
    %v155 = vunpack.c.l.b16 %v91
    %v156 = vunpack.c.l.b16 %v92
    %v157 = vunpack.c.l.b16 %v93
    %v158 = vunpack.c.l.b16 %v94
    %v159 = vunpack.c.l.b16 %v95
    %v160 = vunpack.c.l.b16 %v96
    %v161 = vunpack.c.l.b16 %v97
    %v162 = vunpack.c.l.b16 %v98
    %v163 = vunpack.c.l.b16 %v99
    %v164 = vunpack.c.l.b16 %v100
    %v165 = vunpack.c.l.b16 %v101
    %v166 = vunpack.c.l.b16 %v102
    %v167 = vunpack.c.l.b16 %v103
    %v168 = vunpack.c.l.b16 %v104
    %v169 = vunpack.c.l.b16 %v105
    %v170 = vunpack.c.l.b16 %v106
    %v171 = vunpack.c.l.b16 %v107
    %v172 = vunpack.c.l.b16 %v108
    %v173 = vpack.c.b16 %v142, %v141
    %v174 = vpack.c.b16 %v144, %v143
    %v175 = vpack.c.b16 %v146, %v145
    %v176 = vpack.c.b16 %v148, %v147
    %v177 = vpack.c.b16 %v150, %v149
    %v178 = vpack.c.b16 %v152, %v151
    %v179 = vpack.c.b16 %v154, %v153
    %v180 = vpack.c.b16 %v156, %v155
    %v181 = vpack.c.b16 %v158, %v157
    %v182 = vpack.c.b16 %v160, %v159
    %v183 = vpack.c.b16 %v162, %v161
    %v184 = vpack.c.b16 %v164, %v163
    %v185 = vpack.c.b16 %v166, %v165
    %v186 = vpack.c.b16 %v168, %v167
    %v187 = vpack.c.b16 %v170, %v169
    %v188 = vpack.c.b16 %v172, %v171
    %205 = vmatprep.subr.bf16.mxu0 0
    %206 = vmatpush1.bf16.msra.mxu0 %v180
    %207 = vmatprep.subr.bf16.mxu0 0
    %208 = vmatpush1.bf16.msra.mxu0 %v179
    %209 = vmatprep.subr.bf16.mxu0 0
    %210 = vmatpush1.bf16.msra.mxu0 %v178
    %211 = vmatprep.subr.bf16.mxu0 0
    %212 = vmatpush1.bf16.msra.mxu0 %v177
    %213 = vmatprep.subr.bf16.mxu0 0
    %214 = vmatpush1.bf16.msra.mxu0 %v176
    %215 = vmatprep.subr.bf16.mxu0 0
    %216 = vmatpush1.bf16.msra.mxu0 %v175
    %217 = vmatprep.subr.bf16.mxu0 0
    %218 = vmatpush1.bf16.msra.mxu0 %v174
    %219 = vmatprep.subr.bf16.mxu0 0
    %220 = vmatpush1.bf16.msra.mxu0 %v173
    %221 = vmatprep.subr.bf16.mxu0 0
    %222 = vmatpush2.bf16.msra.mxu0 %v188
    %223 = vmatprep.subr.bf16.mxu0 0
    %224 = vmatpush2.bf16.msra.mxu0 %v187
    %225 = vmatprep.subr.bf16.mxu0 0
    %226 = vmatpush2.bf16.msra.mxu0 %v186
    %227 = vmatprep.subr.bf16.mxu0 0
    %228 = vmatpush2.bf16.msra.mxu0 %v185
    %229 = vmatprep.subr.bf16.mxu0 0
    %230 = vmatpush2.bf16.msra.mxu0 %v184
    %231 = vmatprep.subr.bf16.mxu0 0
    %232 = vmatpush2.bf16.msra.mxu0 %v183
    %233 = vmatprep.subr.bf16.mxu0 0
    %234 = vmatpush2.bf16.msra.mxu0 %v182
    %235 = vmatprep.subr.bf16.mxu0 0
    %236 = vmatpush2.bf16.msra.mxu0 %v181
    %237 = vmatprep.mubr.bf16.mxu0 %v76
    %238 = vmatmul.mubr.bf16.gmra.mxu0 %v75
    %v239 = vpop.f32.mrf.mxu0
    %v240 = vadd.f32 %v53, %v239
    %v241 = vpop.f32.mrf.mxu0
    %v242 = vpop.f32.mrf.mxu0
    %v243 = vpop.f32.mrf.mxu0
    %244 = vdwg.mxu0
    %v245 = vmax.f32 %v240, 0.0
    %v246 = vpack.c.bf16 %v245, %v245
    %v247 = vld [vmem:[%s5] sm:$0xff]
    %v248 = vld [vmem:[%s5 + $0x8] sm:$0xff]
    %v249 = vld [vmem:[%s5 + $0x10] sm:$0xff]
    %v250 = vld [vmem:[%s5 + $0x18] sm:$0xff]
    %v251 = vld [vmem:[%s5 + $0x20] sm:$0xff]
    %v252 = vld [vmem:[%s5 + $0x28] sm:$0xff]
    %v253 = vld [vmem:[%s5 + $0x30] sm:$0xff]
    %v254 = vld [vmem:[%s5 + $0x38] sm:$0xff]
    %v256 = vlaneseq
    %v257 = vshrl.u32 %v256, 7
    %v258 = vsub.s32 0, %v257
    %v259 = vrot.slane %v55, %v258
    %v260 = vlaneseq
    %v261 = vshrl.u32 %v260, 7
    %v262 = vsub.s32 1, %v261
    %v263 = vrot.slane %v55, %v262
    %v264 = vlaneseq
    %v265 = vshrl.u32 %v264, 7
    %v266 = vsub.s32 2, %v265
    %v267 = vrot.slane %v55, %v266
    %v268 = vlaneseq
    %v269 = vshrl.u32 %v268, 7
    %v270 = vsub.s32 3, %v269
    %v271 = vrot.slane %v55, %v270
    %v284 = vunpack.c.l.b16 %v247
    %v285 = vunpack.c.h.b16 %v247
    %v286 = vunpack.c.l.b16 %v248
    %v287 = vunpack.c.h.b16 %v248
    %v288 = vunpack.c.l.b16 %v249
    %v289 = vunpack.c.h.b16 %v249
    %v290 = vunpack.c.l.b16 %v250
    %v291 = vunpack.c.h.b16 %v250
    %v292 = vunpack.c.l.b16 %v251
    %v293 = vunpack.c.h.b16 %v251
    %v294 = vunpack.c.l.b16 %v252
    %v295 = vunpack.c.h.b16 %v252
    %v296 = vunpack.c.l.b16 %v253
    %v297 = vunpack.c.h.b16 %v253
    %v298 = vunpack.c.l.b16 %v254
    %v299 = vunpack.c.h.b16 %v254
    %v300 = vpack.c.b16 %v288, %v284
    %v301 = vpack.c.b16 %v289, %v285
    %v302 = vpack.c.b16 %v290, %v286
    %v303 = vpack.c.b16 %v291, %v287
    %v304 = vpack.c.b16 %v296, %v292
    %v305 = vpack.c.b16 %v297, %v293
    %v306 = vpack.c.b16 %v298, %v294
    %v307 = vpack.c.b16 %v299, %v295
    %vm316 = vcmask 261120
    %v318 = vsel %vm316, %v246, 0
    %320 = vmatprep.subr.bf16.mxu0 0
    %321 = vmatpush1.bf16.msra.mxu0 0
    %322 = vmatprep.subr.bf16.mxu0 0
    %323 = vmatpush1.bf16.msra.mxu0 0
    %324 = vmatprep.subr.bf16.mxu0 0
    %325 = vmatpush1.bf16.msra.mxu0 0
    %326 = vmatprep.subr.bf16.mxu0 0
    %327 = vmatpush1.bf16.msra.mxu0 0
    %328 = vmatprep.subr.bf16.mxu0 0
    %329 = vmatpush1.bf16.msra.mxu0 0
    %330 = vmatprep.subr.bf16.mxu0 0
    %331 = vmatpush1.bf16.msra.mxu0 0
    %332 = vmatprep.subr.bf16.mxu0 %v305
    %333 = vmatpush1.bf16.msra.mxu0 %v304
    %334 = vmatprep.subr.bf16.mxu0 %v301
    %335 = vmatpush1.bf16.msra.mxu0 %v300
    %336 = vmatprep.subr.bf16.mxu0 0
    %337 = vmatpush2.bf16.msra.mxu0 0
    %338 = vmatprep.subr.bf16.mxu0 0
    %339 = vmatpush2.bf16.msra.mxu0 0
    %340 = vmatprep.subr.bf16.mxu0 0
    %341 = vmatpush2.bf16.msra.mxu0 0
    %342 = vmatprep.subr.bf16.mxu0 0
    %343 = vmatpush2.bf16.msra.mxu0 0
    %344 = vmatprep.subr.bf16.mxu0 0
    %345 = vmatpush2.bf16.msra.mxu0 0
    %346 = vmatprep.subr.bf16.mxu0 0
    %347 = vmatpush2.bf16.msra.mxu0 0
    %348 = vmatprep.subr.bf16.mxu0 0
    %349 = vmatpush2.bf16.msra.mxu0 0
    %350 = vmatprep.subr.bf16.mxu0 0
    %351 = vmatpush2.bf16.msra.mxu0 0
    %352 = vmatprep.mubr.bf16.mxu0 0
    %353 = vmatmul.mubr.bf16.gmra.mxu0 %v318
    %v354 = vpop.f32.mrf.mxu0
    %v355 = vadd.f32 %v259, %v354
    %v356 = vpop.f32.mrf.mxu0
    %v357 = vadd.f32 %v263, %v356
    %v358 = vpop.f32.mrf.mxu0
    %v359 = vpop.f32.mrf.mxu0
    %360 = vdwg.mxu0
    %361 = vmatprep.subr.bf16.mxu0 0
    %362 = vmatpush1.bf16.msra.mxu0 0
    %363 = vmatprep.subr.bf16.mxu0 0
    %364 = vmatpush1.bf16.msra.mxu0 0
    %365 = vmatprep.subr.bf16.mxu0 0
    %366 = vmatpush1.bf16.msra.mxu0 0
    %367 = vmatprep.subr.bf16.mxu0 0
    %368 = vmatpush1.bf16.msra.mxu0 0
    %369 = vmatprep.subr.bf16.mxu0 0
    %370 = vmatpush1.bf16.msra.mxu0 0
    %371 = vmatprep.subr.bf16.mxu0 0
    %372 = vmatpush1.bf16.msra.mxu0 0
    %373 = vmatprep.subr.bf16.mxu0 %v307
    %374 = vmatpush1.bf16.msra.mxu0 %v306
    %375 = vmatprep.subr.bf16.mxu0 %v303
    %376 = vmatpush1.bf16.msra.mxu0 %v302
    %377 = vmatprep.subr.bf16.mxu0 0
    %378 = vmatpush2.bf16.msra.mxu0 0
    %379 = vmatprep.subr.bf16.mxu0 0
    %380 = vmatpush2.bf16.msra.mxu0 0
    %381 = vmatprep.subr.bf16.mxu0 0
    %382 = vmatpush2.bf16.msra.mxu0 0
    %383 = vmatprep.subr.bf16.mxu0 0
    %384 = vmatpush2.bf16.msra.mxu0 0
    %385 = vmatprep.subr.bf16.mxu0 0
    %386 = vmatpush2.bf16.msra.mxu0 0
    %387 = vmatprep.subr.bf16.mxu0 0
    %388 = vmatpush2.bf16.msra.mxu0 0
    %389 = vmatprep.subr.bf16.mxu0 0
    %390 = vmatpush2.bf16.msra.mxu0 0
    %391 = vmatprep.subr.bf16.mxu0 0
    %392 = vmatpush2.bf16.msra.mxu0 0
    %393 = vmatprep.mubr.bf16.mxu0 0
    %394 = vmatmul.mubr.bf16.gmra.mxu0 %v318
    %v395 = vpop.f32.mrf.mxu0
    %v396 = vadd.f32 %v267, %v395
    %v397 = vpop.f32.mrf.mxu0
    %v398 = vadd.f32 %v271, %v397
    %v399 = vpop.f32.mrf.mxu0
    %v400 = vpop.f32.mrf.mxu0
    %401 = vdwg.mxu0
    %v402 = vld [vmem:[%s1] sm:$0xff]
    %v403 = vld [vmem:[%s1 + $0x8] sm:$0xff]
    %v404 = vpack.c.bf16 %v403, %v402
    %v405 = vld [vmem:[%s6] sm:$0xf]
    %v406 = vld [vmem:[%s6 + $0x4] sm:$0x1]
    %v409 = vunpack.c.l.b16 %v405
    %v410 = vunpack.c.l.b16 %v406
    %v411 = vpack.c.b16 %v410, %v409
    %vm412 = vcmask 80896
    %v414 = vsel %vm412, %v404, 0
    %vm416 = vcmask 1044480
    %v418 = vsel %vm416, %v411, 0
    %420 = vmatprep.subr.bf16.mxu0 0
    %421 = vmatpush1.bf16.msra.mxu0 0
    %422 = vmatprep.subr.bf16.mxu0 0
    %423 = vmatpush1.bf16.msra.mxu0 0
    %424 = vmatprep.subr.bf16.mxu0 0
    %425 = vmatpush1.bf16.msra.mxu0 0
    %426 = vmatprep.subr.bf16.mxu0 0
    %427 = vmatpush1.bf16.msra.mxu0 0
    %428 = vmatprep.subr.bf16.mxu0 0
    %429 = vmatpush1.bf16.msra.mxu0 0
    %430 = vmatprep.subr.bf16.mxu0 0
    %431 = vmatpush1.bf16.msra.mxu0 0
    %432 = vmatprep.subr.bf16.mxu0 0
    %433 = vmatpush1.bf16.msra.mxu0 0
    %434 = vmatprep.subr.bf16.mxu0 0
    %435 = vmatpush1.bf16.msra.mxu0 %v418
    %436 = vmatprep.subr.bf16.mxu0 0
    %437 = vmatpush2.bf16.msra.mxu0 0
    %438 = vmatprep.subr.bf16.mxu0 0
    %439 = vmatpush2.bf16.msra.mxu0 0
    %440 = vmatprep.subr.bf16.mxu0 0
    %441 = vmatpush2.bf16.msra.mxu0 0
    %442 = vmatprep.subr.bf16.mxu0 0
    %443 = vmatpush2.bf16.msra.mxu0 0
    %444 = vmatprep.subr.bf16.mxu0 0
    %445 = vmatpush2.bf16.msra.mxu0 0
    %446 = vmatprep.subr.bf16.mxu0 0
    %447 = vmatpush2.bf16.msra.mxu0 0
    %448 = vmatprep.subr.bf16.mxu0 0
    %449 = vmatpush2.bf16.msra.mxu0 0
    %450 = vmatprep.subr.bf16.mxu0 0
    %451 = vmatpush2.bf16.msra.mxu0 0
    %452 = vmatprep.mubr.bf16.mxu0 0
    %453 = vmatmul.mubr.bf16.gmra.mxu0 %v414
    %v454 = vpop.f32.mrf.mxu0
    %v455 = vadd.f32 0.0, %v454
    %v456 = vpop.f32.mrf.mxu0
    %v457 = vpop.f32.mrf.mxu0
    %v458 = vadd.f32 0.0, %v457
    %v459 = vpop.f32.mrf.mxu0
    %460 = vdwg.mxu0
    %462 = vset.pattern.permute.xlu0 10
    %463 = vperm.xlu0 %462, %v402
    %v464 = vpop.permute.xlu0 %463
    %467 = vset.pattern.permute.xlu0 10
    %468 = vperm.xlu0 %467, %v403
    %v469 = vpop.permute.xlu0 %468
    %v471 = vmul.f32 %v464, %v58
    %v472 = vmul.f32 %v469, %v58
    %v473 = vand.u32 2147483647, %v471
    %vm474 = vcmp.le.f32.partialorder %v473, 0.7853982
    %vm475 = vcmp.lt.s32.totalorder %v471, 0
    %v476 = vand.u32 %v471, 2139095040
    %v477 = vshrl.u32 %v476, 23
    %v478 = vsub.s32 %v477, 127
    %v479 = vand.u32 2147483647, %v471
    %v480 = vand.u32 %v479, 8388607
    %v481 = vor.u32 %v480, 8388608
    %v482 = vsub.s32 0, %v481
    %v483 = vadd.s32 %v478, 1
    %vm484 = vcmp.gt.s32.totalorder %v483, 0
    %v485 = vsel %vm484, %v483, 0
    %v486 = vshrl.u32 %v485, 5
    %v487 = vand.u32 %v485, 31
    %v488 = vsub.s32 32, %v487
    %v489 = vshrl.u32 683565275, %v488
    %v490 = vshll.u32 683565275, %v487
    %v491 = vshrl.u32 2475754826, %v488
    %v492 = vor.u32 %v490, %v491
    %v493 = vshll.u32 2475754826, %v487
    %v494 = vshrl.u32 2131351028, %v488
    %v495 = vor.u32 %v493, %v494
    %v496 = vshll.u32 2131351028, %v487
    %v497 = vshrl.u32 2102212464, %v488
    %v498 = vor.u32 %v496, %v497
    %v499 = vshll.u32 2102212464, %v487
    %v500 = vshrl.u32 920167782, %v488
    %v501 = vor.u32 %v499, %v500
    %v502 = vshll.u32 920167782, %v487
    %v503 = vshrl.u32 1326507024, %v488
    %v504 = vor.u32 %v502, %v503
    %vm505 = vcmp.lt.s32.totalorder %v486, 1
    %vm506 = vcmp.lt.s32.totalorder %v486, 2
    %vm507 = vcmp.lt.s32.totalorder %v486, 3
    %vm508 = vcmp.lt.s32.totalorder %v486, 4
    %v509 = vsel %vm505, %v489, %v492
    %v510 = vsel %vm508, %v498, 2102212464
    %v511 = vsel %vm507, %v495, %v510
    %v512 = vsel %vm506, %v509, %v511
    %v513 = vsel %vm505, %v492, %v495
    %v514 = vsel %vm508, %v501, 920167782
    %v515 = vsel %vm507, %v498, %v514
    %v516 = vsel %vm506, %v513, %v515
    %v517 = vsel %vm505, %v495, %v498
    %v518 = vsel %vm508, %v504, 1326507024
    %v519 = vsel %vm507, %v501, %v518
    %v520 = vsel %vm506, %v517, %v519
    %v521 = vshll.u32 %v481, 8
    %v522 = vmul.u32.u64.compose %v521, %v520
    %v523 = vextract.low.u32 %v522
    %v524 = vextract.high.u32 %v522
    %v525 = vmul.u32.u64.compose %v521, %v516
    %v526 = vextract.low.u32 %v525
    %v527 = vextract.high.u32 %v525
    %v528 = vmul.u32 %v521, %v512
    %v529 = vadd.s32 %v524, %v526
    %vm530 = vc.u32 %v524, %v526
    %v531 = vadd.s32 %v527, 1
    %v532 = vsel %vm530, %v531, %v527
    %v533 = vadd.s32 %v528, %v532
    %v534 = vadd.s32 %v533, 536870912
    %v535 = vshrl.u32 %v534, 30
    %v536 = vshll.u32 %v535, 30
    %v537 = vsub.s32 %v533, %v536
    %vm538 = vcmp.lt.s32.totalorder %v537, 0
    %v539 = vsub.s32 0, %v537
    %v540 = vsel %vm538, %v539, %v537
    %v541 = vclz %v540
    %v542 = vsub.s32 %v541, 2
    %vm543 = vcmp.gt.s32.totalorder 0, %v542
    %v544 = vsel %vm543, 0, %v542
    %v545 = vsub.s32 32, %v544
    %v546 = vshll.u32 %v537, %v544
    %v547 = vshrl.u32 %v529, %v545
    %v548 = vor.u32 %v546, %v547
    %v549 = vsub.s32 4294967266, %v544
    %v550 = vadd.s32 %v549, 127
    %v551 = vshll.u32 %v550, 23
    %v552 = vor.u32 4788187, %v551
    %v553 = vand.u32 2147483647, %v552
    %v555 = vcvt.s32.f32 %v548
    %v556 = vmul.f32 %v555, %v553
    %v557 = vxor.u32 %v556, 2147483648
    %v558 = vsel %vm475, %v557, %v556
    %v559 = vsub.s32 4, %v535
    %v560 = vsel %vm475, %v559, %v535
    %v561 = vsel %vm474, %v471, %v558
    %v562 = vsel %vm474, 0, %v560
    %v563 = vcosq.f32.pop %v561
    %v564 = vsinq.f32.pop %v561
    %vm565 = vweird.f32 %v471
    %v566 = vadd.s32 %v562, 3
    %v567 = vand.u32 %v566, 3
    %vm568 = vcmp.lt.s32.totalorder %v567, 2
    %vm569 = vcmp.eq.s32.totalorder %v567, 0
    %v570 = vxor.u32 %v564, 2147483648
    %v571 = vsel %vm569, %v563, %v570
    %vm572 = vcmp.eq.s32.totalorder %v567, 2
    %v573 = vxor.u32 %v563, 2147483648
    %v574 = vsel %vm572, %v573, %v564
    %v575 = vsel %vm568, %v571, %v574
    %v576 = vsel %vm565, nan, %v575
    %v577 = vand.u32 2147483647, %v472
    %vm578 = vcmp.le.f32.partialorder %v577, 0.7853982
    %vm579 = vcmp.lt.s32.totalorder %v472, 0
    %v580 = vand.u32 %v472, 2139095040
    %v581 = vshrl.u32 %v580, 23
    %v582 = vsub.s32 %v581, 127
    %v583 = vand.u32 2147483647, %v472
    %v584 = vand.u32 %v583, 8388607
    %v585 = vor.u32 %v584, 8388608
    %v586 = vsub.s32 0, %v585
    %v587 = vadd.s32 %v582, 1
    %vm588 = vcmp.gt.s32.totalorder %v587, 0
    %v589 = vsel %vm588, %v587, 0
    %v590 = vshrl.u32 %v589, 5
    %v591 = vand.u32 %v589, 31
    %v592 = vsub.s32 32, %v591
    %v593 = vshrl.u32 683565275, %v592
    %v594 = vshll.u32 683565275, %v591
    %v595 = vshrl.u32 2475754826, %v592
    %v596 = vor.u32 %v594, %v595
    %v597 = vshll.u32 2475754826, %v591
    %v598 = vshrl.u32 2131351028, %v592
    %v599 = vor.u32 %v597, %v598
    %v600 = vshll.u32 2131351028, %v591
    %v601 = vshrl.u32 2102212464, %v592
    %v602 = vor.u32 %v600, %v601
    %v603 = vshll.u32 2102212464, %v591
    %v604 = vshrl.u32 920167782, %v592
    %v605 = vor.u32 %v603, %v604
    %v606 = vshll.u32 920167782, %v591
    %v607 = vshrl.u32 1326507024, %v592
    %v608 = vor.u32 %v606, %v607
    %vm609 = vcmp.lt.s32.totalorder %v590, 1
    %vm610 = vcmp.lt.s32.totalorder %v590, 2
    %vm611 = vcmp.lt.s32.totalorder %v590, 3
    %vm612 = vcmp.lt.s32.totalorder %v590, 4
    %v613 = vsel %vm609, %v593, %v596
    %v614 = vsel %vm612, %v602, 2102212464
    %v615 = vsel %vm611, %v599, %v614
    %v616 = vsel %vm610, %v613, %v615
    %v617 = vsel %vm609, %v596, %v599
    %v618 = vsel %vm612, %v605, 920167782
    %v619 = vsel %vm611, %v602, %v618
    %v620 = vsel %vm610, %v617, %v619
    %v621 = vsel %vm609, %v599, %v602
    %v622 = vsel %vm612, %v608, 1326507024
    %v623 = vsel %vm611, %v605, %v622
    %v624 = vsel %vm610, %v621, %v623
    %v625 = vshll.u32 %v585, 8
    %v626 = vmul.u32.u64.compose %v625, %v624
    %v627 = vextract.low.u32 %v626
    %v628 = vextract.high.u32 %v626
    %v629 = vmul.u32.u64.compose %v625, %v620
    %v630 = vextract.low.u32 %v629
    %v631 = vextract.high.u32 %v629
    %v632 = vmul.u32 %v625, %v616
    %v633 = vadd.s32 %v628, %v630
    %vm634 = vc.u32 %v628, %v630
    %v635 = vadd.s32 %v631, 1
    %v636 = vsel %vm634, %v635, %v631
    %v637 = vadd.s32 %v632, %v636
    %v638 = vadd.s32 %v637, 536870912
    %v639 = vshrl.u32 %v638, 30
    %v640 = vshll.u32 %v639, 30
    %v641 = vsub.s32 %v637, %v640
    %vm642 = vcmp.lt.s32.totalorder %v641, 0
    %v643 = vsub.s32 0, %v641
    %v644 = vsel %vm642, %v643, %v641
    %v645 = vclz %v644
    %v646 = vsub.s32 %v645, 2
    %vm647 = vcmp.gt.s32.totalorder 0, %v646
    %v648 = vsel %vm647, 0, %v646
    %v649 = vsub.s32 32, %v648
    %v650 = vshll.u32 %v641, %v648
    %v651 = vshrl.u32 %v633, %v649
    %v652 = vor.u32 %v650, %v651
    %v653 = vsub.s32 4294967266, %v648
    %v654 = vadd.s32 %v653, 127
    %v655 = vshll.u32 %v654, 23
    %v656 = vor.u32 4788187, %v655
    %v657 = vand.u32 2147483647, %v656
    %v659 = vcvt.s32.f32 %v652
    %v660 = vmul.f32 %v659, %v657
    %v661 = vxor.u32 %v660, 2147483648
    %v662 = vsel %vm579, %v661, %v660
    %v663 = vsub.s32 4, %v639
    %v664 = vsel %vm579, %v663, %v639
    %v665 = vsel %vm578, %v472, %v662
    %v666 = vsel %vm578, 0, %v664
    %v667 = vcosq.f32.pop %v665
    %v668 = vsinq.f32.pop %v665
    %vm669 = vweird.f32 %v472
    %v670 = vadd.s32 %v666, 3
    %v671 = vand.u32 %v670, 3
    %vm672 = vcmp.lt.s32.totalorder %v671, 2
    %vm673 = vcmp.eq.s32.totalorder %v671, 0
    %v674 = vxor.u32 %v668, 2147483648
    %v675 = vsel %vm673, %v667, %v674
    %vm676 = vcmp.eq.s32.totalorder %v671, 2
    %v677 = vxor.u32 %v667, 2147483648
    %v678 = vsel %vm676, %v677, %v668
    %v679 = vsel %vm672, %v675, %v678
    %v680 = vsel %vm669, nan, %v679
    %v681 = vand.u32 2147483647, %v471
    %vm682 = vcmp.le.f32.partialorder %v681, 0.7853982
    %vm683 = vcmp.lt.s32.totalorder %v471, 0
    %v684 = vand.u32 %v471, 2139095040
    %v685 = vshrl.u32 %v684, 23
    %v686 = vsub.s32 %v685, 127
    %v687 = vand.u32 2147483647, %v471
    %v688 = vand.u32 %v687, 8388607
    %v689 = vor.u32 %v688, 8388608
    %v690 = vsub.s32 0, %v689
    %v691 = vadd.s32 %v686, 1
    %vm692 = vcmp.gt.s32.totalorder %v691, 0
    %v693 = vsel %vm692, %v691, 0
    %v694 = vshrl.u32 %v693, 5
    %v695 = vand.u32 %v693, 31
    %v696 = vsub.s32 32, %v695
    %v697 = vshrl.u32 683565275, %v696
    %v698 = vshll.u32 683565275, %v695
    %v699 = vshrl.u32 2475754826, %v696
    %v700 = vor.u32 %v698, %v699
    %v701 = vshll.u32 2475754826, %v695
    %v702 = vshrl.u32 2131351028, %v696
    %v703 = vor.u32 %v701, %v702
    %v704 = vshll.u32 2131351028, %v695
    %v705 = vshrl.u32 2102212464, %v696
    %v706 = vor.u32 %v704, %v705
    %v707 = vshll.u32 2102212464, %v695
    %v708 = vshrl.u32 920167782, %v696
    %v709 = vor.u32 %v707, %v708
    %v710 = vshll.u32 920167782, %v695
    %v711 = vshrl.u32 1326507024, %v696
    %v712 = vor.u32 %v710, %v711
    %vm713 = vcmp.lt.s32.totalorder %v694, 1
    %vm714 = vcmp.lt.s32.totalorder %v694, 2
    %vm715 = vcmp.lt.s32.totalorder %v694, 3
    %vm716 = vcmp.lt.s32.totalorder %v694, 4
    %v717 = vsel %vm713, %v697, %v700
    %v718 = vsel %vm716, %v706, 2102212464
    %v719 = vsel %vm715, %v703, %v718
    %v720 = vsel %vm714, %v717, %v719
    %v721 = vsel %vm713, %v700, %v703
    %v722 = vsel %vm716, %v709, 920167782
    %v723 = vsel %vm715, %v706, %v722
    %v724 = vsel %vm714, %v721, %v723
    %v725 = vsel %vm713, %v703, %v706
    %v726 = vsel %vm716, %v712, 1326507024
    %v727 = vsel %vm715, %v709, %v726
    %v728 = vsel %vm714, %v725, %v727
    %v729 = vshll.u32 %v689, 8
    %v730 = vmul.u32.u64.compose %v729, %v728
    %v731 = vextract.low.u32 %v730
    %v732 = vextract.high.u32 %v730
    %v733 = vmul.u32.u64.compose %v729, %v724
    %v734 = vextract.low.u32 %v733
    %v735 = vextract.high.u32 %v733
    %v736 = vmul.u32 %v729, %v720
    %v737 = vadd.s32 %v732, %v734
    %vm738 = vc.u32 %v732, %v734
    %v739 = vadd.s32 %v735, 1
    %v740 = vsel %vm738, %v739, %v735
    %v741 = vadd.s32 %v736, %v740
    %v742 = vadd.s32 %v741, 536870912
    %v743 = vshrl.u32 %v742, 30
    %v744 = vshll.u32 %v743, 30
    %v745 = vsub.s32 %v741, %v744
    %vm746 = vcmp.lt.s32.totalorder %v745, 0
    %v747 = vsub.s32 0, %v745
    %v748 = vsel %vm746, %v747, %v745
    %v749 = vclz %v748
    %v750 = vsub.s32 %v749, 2
    %vm751 = vcmp.gt.s32.totalorder 0, %v750
    %v752 = vsel %vm751, 0, %v750
    %v753 = vsub.s32 32, %v752
    %v754 = vshll.u32 %v745, %v752
    %v755 = vshrl.u32 %v737, %v753
    %v756 = vor.u32 %v754, %v755
    %v757 = vsub.s32 4294967266, %v752
    %v758 = vadd.s32 %v757, 127
    %v759 = vshll.u32 %v758, 23
    %v760 = vor.u32 4788187, %v759
    %v761 = vand.u32 2147483647, %v760
    %v763 = vcvt.s32.f32 %v756
    %v764 = vmul.f32 %v763, %v761
    %v765 = vxor.u32 %v764, 2147483648
    %v766 = vsel %vm683, %v765, %v764
    %v767 = vsub.s32 4, %v743
    %v768 = vsel %vm683, %v767, %v743
    %v769 = vsel %vm682, %v471, %v766
    %v770 = vsel %vm682, 0, %v768
    %v771 = vcosq.f32.pop %v769
    %v772 = vsinq.f32.pop %v769
    %vm773 = vweird.f32 %v471
    %v774 = vand.u32 %v770, 3
    %vm775 = vcmp.lt.s32.totalorder %v774, 2
    %vm776 = vcmp.eq.s32.totalorder %v774, 0
    %v777 = vxor.u32 %v772, 2147483648
    %v778 = vsel %vm776, %v771, %v777
    %vm779 = vcmp.eq.s32.totalorder %v774, 2
    %v780 = vxor.u32 %v771, 2147483648
    %v781 = vsel %vm779, %v780, %v772
    %v782 = vsel %vm775, %v778, %v781
    %v783 = vsel %vm773, nan, %v782
    %v784 = vand.u32 2147483647, %v472
    %vm785 = vcmp.le.f32.partialorder %v784, 0.7853982
    %vm786 = vcmp.lt.s32.totalorder %v472, 0
    %v787 = vand.u32 %v472, 2139095040
    %v788 = vshrl.u32 %v787, 23
    %v789 = vsub.s32 %v788, 127
    %v790 = vand.u32 2147483647, %v472
    %v791 = vand.u32 %v790, 8388607
    %v792 = vor.u32 %v791, 8388608
    %v793 = vsub.s32 0, %v792
    %v794 = vadd.s32 %v789, 1
    %vm795 = vcmp.gt.s32.totalorder %v794, 0
    %v796 = vsel %vm795, %v794, 0
    %v797 = vshrl.u32 %v796, 5
    %v798 = vand.u32 %v796, 31
    %v799 = vsub.s32 32, %v798
    %v800 = vshrl.u32 683565275, %v799
    %v801 = vshll.u32 683565275, %v798
    %v802 = vshrl.u32 2475754826, %v799
    %v803 = vor.u32 %v801, %v802
    %v804 = vshll.u32 2475754826, %v798
    %v805 = vshrl.u32 2131351028, %v799
    %v806 = vor.u32 %v804, %v805
    %v807 = vshll.u32 2131351028, %v798
    %v808 = vshrl.u32 2102212464, %v799
    %v809 = vor.u32 %v807, %v808
    %v810 = vshll.u32 2102212464, %v798
    %v811 = vshrl.u32 920167782, %v799
    %v812 = vor.u32 %v810, %v811
    %v813 = vshll.u32 920167782, %v798
    %v814 = vshrl.u32 1326507024, %v799
    %v815 = vor.u32 %v813, %v814
    %vm816 = vcmp.lt.s32.totalorder %v797, 1
    %vm817 = vcmp.lt.s32.totalorder %v797, 2
    %vm818 = vcmp.lt.s32.totalorder %v797, 3
    %vm819 = vcmp.lt.s32.totalorder %v797, 4
    %v820 = vsel %vm816, %v800, %v803
    %v821 = vsel %vm819, %v809, 2102212464
    %v822 = vsel %vm818, %v806, %v821
    %v823 = vsel %vm817, %v820, %v822
    %v824 = vsel %vm816, %v803, %v806
    %v825 = vsel %vm819, %v812, 920167782
    %v826 = vsel %vm818, %v809, %v825
    %v827 = vsel %vm817, %v824, %v826
    %v828 = vsel %vm816, %v806, %v809
    %v829 = vsel %vm819, %v815, 1326507024
    %v830 = vsel %vm818, %v812, %v829
    %v831 = vsel %vm817, %v828, %v830
    %v832 = vshll.u32 %v792, 8
    %v833 = vmul.u32.u64.compose %v832, %v831
    %v834 = vextract.low.u32 %v833
    %v835 = vextract.high.u32 %v833
    %v836 = vmul.u32.u64.compose %v832, %v827
    %v837 = vextract.low.u32 %v836
    %v838 = vextract.high.u32 %v836
    %v839 = vmul.u32 %v832, %v823
    %v840 = vadd.s32 %v835, %v837
    %vm841 = vc.u32 %v835, %v837
    %v842 = vadd.s32 %v838, 1
    %v843 = vsel %vm841, %v842, %v838
    %v844 = vadd.s32 %v839, %v843
    %v845 = vadd.s32 %v844, 536870912
    %v846 = vshrl.u32 %v845, 30
    %v847 = vshll.u32 %v846, 30
    %v848 = vsub.s32 %v844, %v847
    %vm849 = vcmp.lt.s32.totalorder %v848, 0
    %v850 = vsub.s32 0, %v848
    %v851 = vsel %vm849, %v850, %v848
    %v852 = vclz %v851
    %v853 = vsub.s32 %v852, 2
    %vm854 = vcmp.gt.s32.totalorder 0, %v853
    %v855 = vsel %vm854, 0, %v853
    %v856 = vsub.s32 32, %v855
    %v857 = vshll.u32 %v848, %v855
    %v858 = vshrl.u32 %v840, %v856
    %v859 = vor.u32 %v857, %v858
    %v860 = vsub.s32 4294967266, %v855
    %v861 = vadd.s32 %v860, 127
    %v862 = vshll.u32 %v861, 23
    %v863 = vor.u32 4788187, %v862
    %v864 = vand.u32 2147483647, %v863
    %v866 = vcvt.s32.f32 %v859
    %v867 = vmul.f32 %v866, %v864
    %v868 = vxor.u32 %v867, 2147483648
    %v869 = vsel %vm786, %v868, %v867
    %v870 = vsub.s32 4, %v846
    %v871 = vsel %vm786, %v870, %v846
    %v872 = vsel %vm785, %v472, %v869
    %v873 = vsel %vm785, 0, %v871
    %v874 = vcosq.f32.pop %v872
    %v875 = vsinq.f32.pop %v872
    %vm876 = vweird.f32 %v472
    %v877 = vand.u32 %v873, 3
    %vm878 = vcmp.lt.s32.totalorder %v877, 2
    %vm879 = vcmp.eq.s32.totalorder %v877, 0
    %v880 = vxor.u32 %v875, 2147483648
    %v881 = vsel %vm879, %v874, %v880
    %vm882 = vcmp.eq.s32.totalorder %v877, 2
    %v883 = vxor.u32 %v874, 2147483648
    %v884 = vsel %vm882, %v883, %v875
    %v885 = vsel %vm878, %v881, %v884
    %v886 = vsel %vm876, nan, %v885
    %889 = vrot.lane.b32.xlu0 %v783, 32
    %v890 = vpop.permute.xlu0 %889
    %891 = vrot.lane.b32.xlu0 %v886, 32
    %v892 = vpop.permute.xlu0 %891
    %v895 = vsel %vm316, %v576, %v890
    %v896 = vsel %vm316, %v680, %v892
    %897 = vset.pattern.permute.xlu0 11
    %898 = vperm.xlu0 %897, %v402
    %v899 = vpop.permute.xlu0 %898
    %901 = vset.pattern.permute.xlu0 11
    %902 = vperm.xlu0 %901, %v403
    %v903 = vpop.permute.xlu0 %902
    %v905 = vmul.f32 %v899, %v58
    %v906 = vmul.f32 %v903, %v58
    %v907 = vand.u32 2147483647, %v905
    %vm908 = vcmp.le.f32.partialorder %v907, 0.7853982
    %vm909 = vcmp.lt.s32.totalorder %v905, 0
    %v910 = vand.u32 %v905, 2139095040
    %v911 = vshrl.u32 %v910, 23
    %v912 = vsub.s32 %v911, 127
    %v913 = vand.u32 2147483647, %v905
    %v914 = vand.u32 %v913, 8388607
    %v915 = vor.u32 %v914, 8388608
    %v916 = vsub.s32 0, %v915
    %v917 = vadd.s32 %v912, 1
    %vm918 = vcmp.gt.s32.totalorder %v917, 0
    %v919 = vsel %vm918, %v917, 0
    %v920 = vshrl.u32 %v919, 5
    %v921 = vand.u32 %v919, 31
    %v922 = vsub.s32 32, %v921
    %v923 = vshrl.u32 683565275, %v922
    %v924 = vshll.u32 683565275, %v921
    %v925 = vshrl.u32 2475754826, %v922
    %v926 = vor.u32 %v924, %v925
    %v927 = vshll.u32 2475754826, %v921
    %v928 = vshrl.u32 2131351028, %v922
    %v929 = vor.u32 %v927, %v928
    %v930 = vshll.u32 2131351028, %v921
    %v931 = vshrl.u32 2102212464, %v922
    %v932 = vor.u32 %v930, %v931
    %v933 = vshll.u32 2102212464, %v921
    %v934 = vshrl.u32 920167782, %v922
    %v935 = vor.u32 %v933, %v934
    %v936 = vshll.u32 920167782, %v921
    %v937 = vshrl.u32 1326507024, %v922
    %v938 = vor.u32 %v936, %v937
    %vm939 = vcmp.lt.s32.totalorder %v920, 1
    %vm940 = vcmp.lt.s32.totalorder %v920, 2
    %vm941 = vcmp.lt.s32.totalorder %v920, 3
    %vm942 = vcmp.lt.s32.totalorder %v920, 4
    %v943 = vsel %vm939, %v923, %v926
    %v944 = vsel %vm942, %v932, 2102212464
    %v945 = vsel %vm941, %v929, %v944
    %v946 = vsel %vm940, %v943, %v945
    %v947 = vsel %vm939, %v926, %v929
    %v948 = vsel %vm942, %v935, 920167782
    %v949 = vsel %vm941, %v932, %v948
    %v950 = vsel %vm940, %v947, %v949
    %v951 = vsel %vm939, %v929, %v932
    %v952 = vsel %vm942, %v938, 1326507024
    %v953 = vsel %vm941, %v935, %v952
    %v954 = vsel %vm940, %v951, %v953
    %v955 = vshll.u32 %v915, 8
    %v956 = vmul.u32.u64.compose %v955, %v954
    %v957 = vextract.low.u32 %v956
    %v958 = vextract.high.u32 %v956
    %v959 = vmul.u32.u64.compose %v955, %v950
    %v960 = vextract.low.u32 %v959
    %v961 = vextract.high.u32 %v959
    %v962 = vmul.u32 %v955, %v946
    %v963 = vadd.s32 %v958, %v960
    %vm964 = vc.u32 %v958, %v960
    %v965 = vadd.s32 %v961, 1
    %v966 = vsel %vm964, %v965, %v961
    %v967 = vadd.s32 %v962, %v966
    %v968 = vadd.s32 %v967, 536870912
    %v969 = vshrl.u32 %v968, 30
    %v970 = vshll.u32 %v969, 30
    %v971 = vsub.s32 %v967, %v970
    %vm972 = vcmp.lt.s32.totalorder %v971, 0
    %v973 = vsub.s32 0, %v971
    %v974 = vsel %vm972, %v973, %v971
    %v975 = vclz %v974
    %v976 = vsub.s32 %v975, 2
    %vm977 = vcmp.gt.s32.totalorder 0, %v976
    %v978 = vsel %vm977, 0, %v976
    %v979 = vsub.s32 32, %v978
    %v980 = vshll.u32 %v971, %v978
    %v981 = vshrl.u32 %v963, %v979
    %v982 = vor.u32 %v980, %v981
    %v983 = vsub.s32 4294967266, %v978
    %v984 = vadd.s32 %v983, 127
    %v985 = vshll.u32 %v984, 23
    %v986 = vor.u32 4788187, %v985
    %v987 = vand.u32 2147483647, %v986
    %v989 = vcvt.s32.f32 %v982
    %v990 = vmul.f32 %v989, %v987
    %v991 = vxor.u32 %v990, 2147483648
    %v992 = vsel %vm909, %v991, %v990
    %v993 = vsub.s32 4, %v969
    %v994 = vsel %vm909, %v993, %v969
    %v995 = vsel %vm908, %v905, %v992
    %v996 = vsel %vm908, 0, %v994
    %v997 = vcosq.f32.pop %v995
    %v998 = vsinq.f32.pop %v995
    %vm999 = vweird.f32 %v905
    %v1000 = vadd.s32 %v996, 3
    %v1001 = vand.u32 %v1000, 3
    %vm1002 = vcmp.lt.s32.totalorder %v1001, 2
    %vm1003 = vcmp.eq.s32.totalorder %v1001, 0
    %v1004 = vxor.u32 %v998, 2147483648
    %v1005 = vsel %vm1003, %v997, %v1004
    %vm1006 = vcmp.eq.s32.totalorder %v1001, 2
    %v1007 = vxor.u32 %v997, 2147483648
    %v1008 = vsel %vm1006, %v1007, %v998
    %v1009 = vsel %vm1002, %v1005, %v1008
    %v1010 = vsel %vm999, nan, %v1009
    %v1011 = vand.u32 2147483647, %v906
    %vm1012 = vcmp.le.f32.partialorder %v1011, 0.7853982
    %vm1013 = vcmp.lt.s32.totalorder %v906, 0
    %v1014 = vand.u32 %v906, 2139095040
    %v1015 = vshrl.u32 %v1014, 23
    %v1016 = vsub.s32 %v1015, 127
    %v1017 = vand.u32 2147483647, %v906
    %v1018 = vand.u32 %v1017, 8388607
    %v1019 = vor.u32 %v1018, 8388608
    %v1020 = vsub.s32 0, %v1019
    %v1021 = vadd.s32 %v1016, 1
    %vm1022 = vcmp.gt.s32.totalorder %v1021, 0
    %v1023 = vsel %vm1022, %v1021, 0
    %v1024 = vshrl.u32 %v1023, 5
    %v1025 = vand.u32 %v1023, 31
    %v1026 = vsub.s32 32, %v1025
    %v1027 = vshrl.u32 683565275, %v1026
    %v1028 = vshll.u32 683565275, %v1025
    %v1029 = vshrl.u32 2475754826, %v1026
    %v1030 = vor.u32 %v1028, %v1029
    %v1031 = vshll.u32 2475754826, %v1025
    %v1032 = vshrl.u32 2131351028, %v1026
    %v1033 = vor.u32 %v1031, %v1032
    %v1034 = vshll.u32 2131351028, %v1025
    %v1035 = vshrl.u32 2102212464, %v1026
    %v1036 = vor.u32 %v1034, %v1035
    %v1037 = vshll.u32 2102212464, %v1025
    %v1038 = vshrl.u32 920167782, %v1026
    %v1039 = vor.u32 %v1037, %v1038
    %v1040 = vshll.u32 920167782, %v1025
    %v1041 = vshrl.u32 1326507024, %v1026
    %v1042 = vor.u32 %v1040, %v1041
    %vm1043 = vcmp.lt.s32.totalorder %v1024, 1
    %vm1044 = vcmp.lt.s32.totalorder %v1024, 2
    %vm1045 = vcmp.lt.s32.totalorder %v1024, 3
    %vm1046 = vcmp.lt.s32.totalorder %v1024, 4
    %v1047 = vsel %vm1043, %v1027, %v1030
    %v1048 = vsel %vm1046, %v1036, 2102212464
    %v1049 = vsel %vm1045, %v1033, %v1048
    %v1050 = vsel %vm1044, %v1047, %v1049
    %v1051 = vsel %vm1043, %v1030, %v1033
    %v1052 = vsel %vm1046, %v1039, 920167782
    %v1053 = vsel %vm1045, %v1036, %v1052
    %v1054 = vsel %vm1044, %v1051, %v1053
    %v1055 = vsel %vm1043, %v1033, %v1036
    %v1056 = vsel %vm1046, %v1042, 1326507024
    %v1057 = vsel %vm1045, %v1039, %v1056
    %v1058 = vsel %vm1044, %v1055, %v1057
    %v1059 = vshll.u32 %v1019, 8
    %v1060 = vmul.u32.u64.compose %v1059, %v1058
    %v1061 = vextract.low.u32 %v1060
    %v1062 = vextract.high.u32 %v1060
    %v1063 = vmul.u32.u64.compose %v1059, %v1054
    %v1064 = vextract.low.u32 %v1063
    %v1065 = vextract.high.u32 %v1063
    %v1066 = vmul.u32 %v1059, %v1050
    %v1067 = vadd.s32 %v1062, %v1064
    %vm1068 = vc.u32 %v1062, %v1064
    %v1069 = vadd.s32 %v1065, 1
    %v1070 = vsel %vm1068, %v1069, %v1065
    %v1071 = vadd.s32 %v1066, %v1070
    %v1072 = vadd.s32 %v1071, 536870912
    %v1073 = vshrl.u32 %v1072, 30
    %v1074 = vshll.u32 %v1073, 30
    %v1075 = vsub.s32 %v1071, %v1074
    %vm1076 = vcmp.lt.s32.totalorder %v1075, 0
    %v1077 = vsub.s32 0, %v1075
    %v1078 = vsel %vm1076, %v1077, %v1075
    %v1079 = vclz %v1078
    %v1080 = vsub.s32 %v1079, 2
    %vm1081 = vcmp.gt.s32.totalorder 0, %v1080
    %v1082 = vsel %vm1081, 0, %v1080
    %v1083 = vsub.s32 32, %v1082
    %v1084 = vshll.u32 %v1075, %v1082
    %v1085 = vshrl.u32 %v1067, %v1083
    %v1086 = vor.u32 %v1084, %v1085
    %v1087 = vsub.s32 4294967266, %v1082
    %v1088 = vadd.s32 %v1087, 127
    %v1089 = vshll.u32 %v1088, 23
    %v1090 = vor.u32 4788187, %v1089
    %v1091 = vand.u32 2147483647, %v1090
    %v1093 = vcvt.s32.f32 %v1086
    %v1094 = vmul.f32 %v1093, %v1091
    %v1095 = vxor.u32 %v1094, 2147483648
    %v1096 = vsel %vm1013, %v1095, %v1094
    %v1097 = vsub.s32 4, %v1073
    %v1098 = vsel %vm1013, %v1097, %v1073
    %v1099 = vsel %vm1012, %v906, %v1096
    %v1100 = vsel %vm1012, 0, %v1098
    %v1101 = vcosq.f32.pop %v1099
    %v1102 = vsinq.f32.pop %v1099
    %vm1103 = vweird.f32 %v906
    %v1104 = vadd.s32 %v1100, 3
    %v1105 = vand.u32 %v1104, 3
    %vm1106 = vcmp.lt.s32.totalorder %v1105, 2
    %vm1107 = vcmp.eq.s32.totalorder %v1105, 0
    %v1108 = vxor.u32 %v1102, 2147483648
    %v1109 = vsel %vm1107, %v1101, %v1108
    %vm1110 = vcmp.eq.s32.totalorder %v1105, 2
    %v1111 = vxor.u32 %v1101, 2147483648
    %v1112 = vsel %vm1110, %v1111, %v1102
    %v1113 = vsel %vm1106, %v1109, %v1112
    %v1114 = vsel %vm1103, nan, %v1113
    %v1115 = vand.u32 2147483647, %v905
    %vm1116 = vcmp.le.f32.partialorder %v1115, 0.7853982
    %vm1117 = vcmp.lt.s32.totalorder %v905, 0
    %v1118 = vand.u32 %v905, 2139095040
    %v1119 = vshrl.u32 %v1118, 23
    %v1120 = vsub.s32 %v1119, 127
    %v1121 = vand.u32 2147483647, %v905
    %v1122 = vand.u32 %v1121, 8388607
    %v1123 = vor.u32 %v1122, 8388608
    %v1124 = vsub.s32 0, %v1123
    %v1125 = vadd.s32 %v1120, 1
    %vm1126 = vcmp.gt.s32.totalorder %v1125, 0
    %v1127 = vsel %vm1126, %v1125, 0
    %v1128 = vshrl.u32 %v1127, 5
    %v1129 = vand.u32 %v1127, 31
    %v1130 = vsub.s32 32, %v1129
    %v1131 = vshrl.u32 683565275, %v1130
    %v1132 = vshll.u32 683565275, %v1129
    %v1133 = vshrl.u32 2475754826, %v1130
    %v1134 = vor.u32 %v1132, %v1133
    %v1135 = vshll.u32 2475754826, %v1129
    %v1136 = vshrl.u32 2131351028, %v1130
    %v1137 = vor.u32 %v1135, %v1136
    %v1138 = vshll.u32 2131351028, %v1129
    %v1139 = vshrl.u32 2102212464, %v1130
    %v1140 = vor.u32 %v1138, %v1139
    %v1141 = vshll.u32 2102212464, %v1129
    %v1142 = vshrl.u32 920167782, %v1130
    %v1143 = vor.u32 %v1141, %v1142
    %v1144 = vshll.u32 920167782, %v1129
    %v1145 = vshrl.u32 1326507024, %v1130
    %v1146 = vor.u32 %v1144, %v1145
    %vm1147 = vcmp.lt.s32.totalorder %v1128, 1
    %vm1148 = vcmp.lt.s32.totalorder %v1128, 2
    %vm1149 = vcmp.lt.s32.totalorder %v1128, 3
    %vm1150 = vcmp.lt.s32.totalorder %v1128, 4
    %v1151 = vsel %vm1147, %v1131, %v1134
    %v1152 = vsel %vm1150, %v1140, 2102212464
    %v1153 = vsel %vm1149, %v1137, %v1152
    %v1154 = vsel %vm1148, %v1151, %v1153
    %v1155 = vsel %vm1147, %v1134, %v1137
    %v1156 = vsel %vm1150, %v1143, 920167782
    %v1157 = vsel %vm1149, %v1140, %v1156
    %v1158 = vsel %vm1148, %v1155, %v1157
    %v1159 = vsel %vm1147, %v1137, %v1140
    %v1160 = vsel %vm1150, %v1146, 1326507024
    %v1161 = vsel %vm1149, %v1143, %v1160
    %v1162 = vsel %vm1148, %v1159, %v1161
    %v1163 = vshll.u32 %v1123, 8
    %v1164 = vmul.u32.u64.compose %v1163, %v1162
    %v1165 = vextract.low.u32 %v1164
    %v1166 = vextract.high.u32 %v1164
    %v1167 = vmul.u32.u64.compose %v1163, %v1158
    %v1168 = vextract.low.u32 %v1167
    %v1169 = vextract.high.u32 %v1167
    %v1170 = vmul.u32 %v1163, %v1154
    %v1171 = vadd.s32 %v1166, %v1168
    %vm1172 = vc.u32 %v1166, %v1168
    %v1173 = vadd.s32 %v1169, 1
    %v1174 = vsel %vm1172, %v1173, %v1169
    %v1175 = vadd.s32 %v1170, %v1174
    %v1176 = vadd.s32 %v1175, 536870912
    %v1177 = vshrl.u32 %v1176, 30
    %v1178 = vshll.u32 %v1177, 30
    %v1179 = vsub.s32 %v1175, %v1178
    %vm1180 = vcmp.lt.s32.totalorder %v1179, 0
    %v1181 = vsub.s32 0, %v1179
    %v1182 = vsel %vm1180, %v1181, %v1179
    %v1183 = vclz %v1182
    %v1184 = vsub.s32 %v1183, 2
    %vm1185 = vcmp.gt.s32.totalorder 0, %v1184
    %v1186 = vsel %vm1185, 0, %v1184
    %v1187 = vsub.s32 32, %v1186
    %v1188 = vshll.u32 %v1179, %v1186
    %v1189 = vshrl.u32 %v1171, %v1187
    %v1190 = vor.u32 %v1188, %v1189
    %v1191 = vsub.s32 4294967266, %v1186
    %v1192 = vadd.s32 %v1191, 127
    %v1193 = vshll.u32 %v1192, 23
    %v1194 = vor.u32 4788187, %v1193
    %v1195 = vand.u32 2147483647, %v1194
    %v1197 = vcvt.s32.f32 %v1190
    %v1198 = vmul.f32 %v1197, %v1195
    %v1199 = vxor.u32 %v1198, 2147483648
    %v1200 = vsel %vm1117, %v1199, %v1198
    %v1201 = vsub.s32 4, %v1177
    %v1202 = vsel %vm1117, %v1201, %v1177
    %v1203 = vsel %vm1116, %v905, %v1200
    %v1204 = vsel %vm1116, 0, %v1202
    %v1205 = vcosq.f32.pop %v1203
    %v1206 = vsinq.f32.pop %v1203
    %vm1207 = vweird.f32 %v905
    %v1208 = vand.u32 %v1204, 3
    %vm1209 = vcmp.lt.s32.totalorder %v1208, 2
    %vm1210 = vcmp.eq.s32.totalorder %v1208, 0
    %v1211 = vxor.u32 %v1206, 2147483648
    %v1212 = vsel %vm1210, %v1205, %v1211
    %vm1213 = vcmp.eq.s32.totalorder %v1208, 2
    %v1214 = vxor.u32 %v1205, 2147483648
    %v1215 = vsel %vm1213, %v1214, %v1206
    %v1216 = vsel %vm1209, %v1212, %v1215
    %v1217 = vsel %vm1207, nan, %v1216
    %v1218 = vand.u32 2147483647, %v906
    %vm1219 = vcmp.le.f32.partialorder %v1218, 0.7853982
    %vm1220 = vcmp.lt.s32.totalorder %v906, 0
    %v1221 = vand.u32 %v906, 2139095040
    %v1222 = vshrl.u32 %v1221, 23
    %v1223 = vsub.s32 %v1222, 127
    %v1224 = vand.u32 2147483647, %v906
    %v1225 = vand.u32 %v1224, 8388607
    %v1226 = vor.u32 %v1225, 8388608
    %v1227 = vsub.s32 0, %v1226
    %v1228 = vadd.s32 %v1223, 1
    %vm1229 = vcmp.gt.s32.totalorder %v1228, 0
    %v1230 = vsel %vm1229, %v1228, 0
    %v1231 = vshrl.u32 %v1230, 5
    %v1232 = vand.u32 %v1230, 31
    %v1233 = vsub.s32 32, %v1232
    %v1234 = vshrl.u32 683565275, %v1233
    %v1235 = vshll.u32 683565275, %v1232
    %v1236 = vshrl.u32 2475754826, %v1233
    %v1237 = vor.u32 %v1235, %v1236
    %v1238 = vshll.u32 2475754826, %v1232
    %v1239 = vshrl.u32 2131351028, %v1233
    %v1240 = vor.u32 %v1238, %v1239
    %v1241 = vshll.u32 2131351028, %v1232
    %v1242 = vshrl.u32 2102212464, %v1233
    %v1243 = vor.u32 %v1241, %v1242
    %v1244 = vshll.u32 2102212464, %v1232
    %v1245 = vshrl.u32 920167782, %v1233
    %v1246 = vor.u32 %v1244, %v1245
    %v1247 = vshll.u32 920167782, %v1232
    %v1248 = vshrl.u32 1326507024, %v1233
    %v1249 = vor.u32 %v1247, %v1248
    %vm1250 = vcmp.lt.s32.totalorder %v1231, 1
    %vm1251 = vcmp.lt.s32.totalorder %v1231, 2
    %vm1252 = vcmp.lt.s32.totalorder %v1231, 3
    %vm1253 = vcmp.lt.s32.totalorder %v1231, 4
    %v1254 = vsel %vm1250, %v1234, %v1237
    %v1255 = vsel %vm1253, %v1243, 2102212464
    %v1256 = vsel %vm1252, %v1240, %v1255
    %v1257 = vsel %vm1251, %v1254, %v1256
    %v1258 = vsel %vm1250, %v1237, %v1240
    %v1259 = vsel %vm1253, %v1246, 920167782
    %v1260 = vsel %vm1252, %v1243, %v1259
    %v1261 = vsel %vm1251, %v1258, %v1260
    %v1262 = vsel %vm1250, %v1240, %v1243
    %v1263 = vsel %vm1253, %v1249, 1326507024
    %v1264 = vsel %vm1252, %v1246, %v1263
    %v1265 = vsel %vm1251, %v1262, %v1264
    %v1266 = vshll.u32 %v1226, 8
    %v1267 = vmul.u32.u64.compose %v1266, %v1265
    %v1268 = vextract.low.u32 %v1267
    %v1269 = vextract.high.u32 %v1267
    %v1270 = vmul.u32.u64.compose %v1266, %v1261
    %v1271 = vextract.low.u32 %v1270
    %v1272 = vextract.high.u32 %v1270
    %v1273 = vmul.u32 %v1266, %v1257
    %v1274 = vadd.s32 %v1269, %v1271
    %vm1275 = vc.u32 %v1269, %v1271
    %v1276 = vadd.s32 %v1272, 1
    %v1277 = vsel %vm1275, %v1276, %v1272
    %v1278 = vadd.s32 %v1273, %v1277
    %v1279 = vadd.s32 %v1278, 536870912
    %v1280 = vshrl.u32 %v1279, 30
    %v1281 = vshll.u32 %v1280, 30
    %v1282 = vsub.s32 %v1278, %v1281
    %vm1283 = vcmp.lt.s32.totalorder %v1282, 0
    %v1284 = vsub.s32 0, %v1282
    %v1285 = vsel %vm1283, %v1284, %v1282
    %v1286 = vclz %v1285
    %v1287 = vsub.s32 %v1286, 2
    %vm1288 = vcmp.gt.s32.totalorder 0, %v1287
    %v1289 = vsel %vm1288, 0, %v1287
    %v1290 = vsub.s32 32, %v1289
    %v1291 = vshll.u32 %v1282, %v1289
    %v1292 = vshrl.u32 %v1274, %v1290
    %v1293 = vor.u32 %v1291, %v1292
    %v1294 = vsub.s32 4294967266, %v1289
    %v1295 = vadd.s32 %v1294, 127
    %v1296 = vshll.u32 %v1295, 23
    %v1297 = vor.u32 4788187, %v1296
    %v1298 = vand.u32 2147483647, %v1297
    %v1300 = vcvt.s32.f32 %v1293
    %v1301 = vmul.f32 %v1300, %v1298
    %v1302 = vxor.u32 %v1301, 2147483648
    %v1303 = vsel %vm1220, %v1302, %v1301
    %v1304 = vsub.s32 4, %v1280
    %v1305 = vsel %vm1220, %v1304, %v1280
    %v1306 = vsel %vm1219, %v906, %v1303
    %v1307 = vsel %vm1219, 0, %v1305
    %v1308 = vcosq.f32.pop %v1306
    %v1309 = vsinq.f32.pop %v1306
    %vm1310 = vweird.f32 %v906
    %v1311 = vand.u32 %v1307, 3
    %vm1312 = vcmp.lt.s32.totalorder %v1311, 2
    %vm1313 = vcmp.eq.s32.totalorder %v1311, 0
    %v1314 = vxor.u32 %v1309, 2147483648
    %v1315 = vsel %vm1313, %v1308, %v1314
    %vm1316 = vcmp.eq.s32.totalorder %v1311, 2
    %v1317 = vxor.u32 %v1308, 2147483648
    %v1318 = vsel %vm1316, %v1317, %v1309
    %v1319 = vsel %vm1312, %v1315, %v1318
    %v1320 = vsel %vm1310, nan, %v1319
    %1323 = vrot.lane.b32.xlu0 %v1217, 32
    %v1324 = vpop.permute.xlu0 %1323
    %1325 = vrot.lane.b32.xlu0 %v1320, 32
    %v1326 = vpop.permute.xlu0 %1325
    %v1329 = vsel %vm316, %v1010, %v1324
    %v1330 = vsel %vm316, %v1114, %v1326
    %1331 = vset.pattern.permute.xlu0 12
    %1332 = vperm.xlu0 %1331, %v402
    %v1333 = vpop.permute.xlu0 %1332
    %1335 = vset.pattern.permute.xlu0 12
    %1336 = vperm.xlu0 %1335, %v403
    %v1337 = vpop.permute.xlu0 %1336
    %v1339 = vmul.f32 %v1333, %v58
    %v1340 = vmul.f32 %v1337, %v58
    %v1341 = vand.u32 2147483647, %v1339
    %vm1342 = vcmp.le.f32.partialorder %v1341, 0.7853982
    %vm1343 = vcmp.lt.s32.totalorder %v1339, 0
    %v1344 = vand.u32 %v1339, 2139095040
    %v1345 = vshrl.u32 %v1344, 23
    %v1346 = vsub.s32 %v1345, 127
    %v1347 = vand.u32 2147483647, %v1339
    %v1348 = vand.u32 %v1347, 8388607
    %v1349 = vor.u32 %v1348, 8388608
    %v1350 = vsub.s32 0, %v1349
    %v1351 = vadd.s32 %v1346, 1
    %vm1352 = vcmp.gt.s32.totalorder %v1351, 0
    %v1353 = vsel %vm1352, %v1351, 0
    %v1354 = vshrl.u32 %v1353, 5
    %v1355 = vand.u32 %v1353, 31
    %v1356 = vsub.s32 32, %v1355
    %v1357 = vshrl.u32 683565275, %v1356
    %v1358 = vshll.u32 683565275, %v1355
    %v1359 = vshrl.u32 2475754826, %v1356
    %v1360 = vor.u32 %v1358, %v1359
    %v1361 = vshll.u32 2475754826, %v1355
    %v1362 = vshrl.u32 2131351028, %v1356
    %v1363 = vor.u32 %v1361, %v1362
    %v1364 = vshll.u32 2131351028, %v1355
    %v1365 = vshrl.u32 2102212464, %v1356
    %v1366 = vor.u32 %v1364, %v1365
    %v1367 = vshll.u32 2102212464, %v1355
    %v1368 = vshrl.u32 920167782, %v1356
    %v1369 = vor.u32 %v1367, %v1368
    %v1370 = vshll.u32 920167782, %v1355
    %v1371 = vshrl.u32 1326507024, %v1356
    %v1372 = vor.u32 %v1370, %v1371
    %vm1373 = vcmp.lt.s32.totalorder %v1354, 1
    %vm1374 = vcmp.lt.s32.totalorder %v1354, 2
    %vm1375 = vcmp.lt.s32.totalorder %v1354, 3
    %vm1376 = vcmp.lt.s32.totalorder %v1354, 4
    %v1377 = vsel %vm1373, %v1357, %v1360
    %v1378 = vsel %vm1376, %v1366, 2102212464
    %v1379 = vsel %vm1375, %v1363, %v1378
    %v1380 = vsel %vm1374, %v1377, %v1379
    %v1381 = vsel %vm1373, %v1360, %v1363
    %v1382 = vsel %vm1376, %v1369, 920167782
    %v1383 = vsel %vm1375, %v1366, %v1382
    %v1384 = vsel %vm1374, %v1381, %v1383
    %v1385 = vsel %vm1373, %v1363, %v1366
    %v1386 = vsel %vm1376, %v1372, 1326507024
    %v1387 = vsel %vm1375, %v1369, %v1386
    %v1388 = vsel %vm1374, %v1385, %v1387
    %v1389 = vshll.u32 %v1349, 8
    %v1390 = vmul.u32.u64.compose %v1389, %v1388
    %v1391 = vextract.low.u32 %v1390
    %v1392 = vextract.high.u32 %v1390
    %v1393 = vmul.u32.u64.compose %v1389, %v1384
    %v1394 = vextract.low.u32 %v1393
    %v1395 = vextract.high.u32 %v1393
    %v1396 = vmul.u32 %v1389, %v1380
    %v1397 = vadd.s32 %v1392, %v1394
    %vm1398 = vc.u32 %v1392, %v1394
    %v1399 = vadd.s32 %v1395, 1
    %v1400 = vsel %vm1398, %v1399, %v1395
    %v1401 = vadd.s32 %v1396, %v1400
    %v1402 = vadd.s32 %v1401, 536870912
    %v1403 = vshrl.u32 %v1402, 30
    %v1404 = vshll.u32 %v1403, 30
    %v1405 = vsub.s32 %v1401, %v1404
    %vm1406 = vcmp.lt.s32.totalorder %v1405, 0
    %v1407 = vsub.s32 0, %v1405
    %v1408 = vsel %vm1406, %v1407, %v1405
    %v1409 = vclz %v1408
    %v1410 = vsub.s32 %v1409, 2
    %vm1411 = vcmp.gt.s32.totalorder 0, %v1410
    %v1412 = vsel %vm1411, 0, %v1410
    %v1413 = vsub.s32 32, %v1412
    %v1414 = vshll.u32 %v1405, %v1412
    %v1415 = vshrl.u32 %v1397, %v1413
    %v1416 = vor.u32 %v1414, %v1415
    %v1417 = vsub.s32 4294967266, %v1412
    %v1418 = vadd.s32 %v1417, 127
    %v1419 = vshll.u32 %v1418, 23
    %v1420 = vor.u32 4788187, %v1419
    %v1421 = vand.u32 2147483647, %v1420
    %v1423 = vcvt.s32.f32 %v1416
    %v1424 = vmul.f32 %v1423, %v1421
    %v1425 = vxor.u32 %v1424, 2147483648
    %v1426 = vsel %vm1343, %v1425, %v1424
    %v1427 = vsub.s32 4, %v1403
    %v1428 = vsel %vm1343, %v1427, %v1403
    %v1429 = vsel %vm1342, %v1339, %v1426
    %v1430 = vsel %vm1342, 0, %v1428
    %v1431 = vcosq.f32.pop %v1429
    %v1432 = vsinq.f32.pop %v1429
    %vm1433 = vweird.f32 %v1339
    %v1434 = vadd.s32 %v1430, 3
    %v1435 = vand.u32 %v1434, 3
    %vm1436 = vcmp.lt.s32.totalorder %v1435, 2
    %vm1437 = vcmp.eq.s32.totalorder %v1435, 0
    %v1438 = vxor.u32 %v1432, 2147483648
    %v1439 = vsel %vm1437, %v1431, %v1438
    %vm1440 = vcmp.eq.s32.totalorder %v1435, 2
    %v1441 = vxor.u32 %v1431, 2147483648
    %v1442 = vsel %vm1440, %v1441, %v1432
    %v1443 = vsel %vm1436, %v1439, %v1442
    %v1444 = vsel %vm1433, nan, %v1443
    %v1445 = vand.u32 2147483647, %v1340
    %vm1446 = vcmp.le.f32.partialorder %v1445, 0.7853982
    %vm1447 = vcmp.lt.s32.totalorder %v1340, 0
    %v1448 = vand.u32 %v1340, 2139095040
    %v1449 = vshrl.u32 %v1448, 23
    %v1450 = vsub.s32 %v1449, 127
    %v1451 = vand.u32 2147483647, %v1340
    %v1452 = vand.u32 %v1451, 8388607
    %v1453 = vor.u32 %v1452, 8388608
    %v1454 = vsub.s32 0, %v1453
    %v1455 = vadd.s32 %v1450, 1
    %vm1456 = vcmp.gt.s32.totalorder %v1455, 0
    %v1457 = vsel %vm1456, %v1455, 0
    %v1458 = vshrl.u32 %v1457, 5
    %v1459 = vand.u32 %v1457, 31
    %v1460 = vsub.s32 32, %v1459
    %v1461 = vshrl.u32 683565275, %v1460
    %v1462 = vshll.u32 683565275, %v1459
    %v1463 = vshrl.u32 2475754826, %v1460
    %v1464 = vor.u32 %v1462, %v1463
    %v1465 = vshll.u32 2475754826, %v1459
    %v1466 = vshrl.u32 2131351028, %v1460
    %v1467 = vor.u32 %v1465, %v1466
    %v1468 = vshll.u32 2131351028, %v1459
    %v1469 = vshrl.u32 2102212464, %v1460
    %v1470 = vor.u32 %v1468, %v1469
    %v1471 = vshll.u32 2102212464, %v1459
    %v1472 = vshrl.u32 920167782, %v1460
    %v1473 = vor.u32 %v1471, %v1472
    %v1474 = vshll.u32 920167782, %v1459
    %v1475 = vshrl.u32 1326507024, %v1460
    %v1476 = vor.u32 %v1474, %v1475
    %vm1477 = vcmp.lt.s32.totalorder %v1458, 1
    %vm1478 = vcmp.lt.s32.totalorder %v1458, 2
    %vm1479 = vcmp.lt.s32.totalorder %v1458, 3
    %vm1480 = vcmp.lt.s32.totalorder %v1458, 4
    %v1481 = vsel %vm1477, %v1461, %v1464
    %v1482 = vsel %vm1480, %v1470, 2102212464
    %v1483 = vsel %vm1479, %v1467, %v1482
    %v1484 = vsel %vm1478, %v1481, %v1483
    %v1485 = vsel %vm1477, %v1464, %v1467
    %v1486 = vsel %vm1480, %v1473, 920167782
    %v1487 = vsel %vm1479, %v1470, %v1486
    %v1488 = vsel %vm1478, %v1485, %v1487
    %v1489 = vsel %vm1477, %v1467, %v1470
    %v1490 = vsel %vm1480, %v1476, 1326507024
    %v1491 = vsel %vm1479, %v1473, %v1490
    %v1492 = vsel %vm1478, %v1489, %v1491
    %v1493 = vshll.u32 %v1453, 8
    %v1494 = vmul.u32.u64.compose %v1493, %v1492
    %v1495 = vextract.low.u32 %v1494
    %v1496 = vextract.high.u32 %v1494
    %v1497 = vmul.u32.u64.compose %v1493, %v1488
    %v1498 = vextract.low.u32 %v1497
    %v1499 = vextract.high.u32 %v1497
    %v1500 = vmul.u32 %v1493, %v1484
    %v1501 = vadd.s32 %v1496, %v1498
    %vm1502 = vc.u32 %v1496, %v1498
    %v1503 = vadd.s32 %v1499, 1
    %v1504 = vsel %vm1502, %v1503, %v1499
    %v1505 = vadd.s32 %v1500, %v1504
    %v1506 = vadd.s32 %v1505, 536870912
    %v1507 = vshrl.u32 %v1506, 30
    %v1508 = vshll.u32 %v1507, 30
    %v1509 = vsub.s32 %v1505, %v1508
    %vm1510 = vcmp.lt.s32.totalorder %v1509, 0
    %v1511 = vsub.s32 0, %v1509
    %v1512 = vsel %vm1510, %v1511, %v1509
    %v1513 = vclz %v1512
    %v1514 = vsub.s32 %v1513, 2
    %vm1515 = vcmp.gt.s32.totalorder 0, %v1514
    %v1516 = vsel %vm1515, 0, %v1514
    %v1517 = vsub.s32 32, %v1516
    %v1518 = vshll.u32 %v1509, %v1516
    %v1519 = vshrl.u32 %v1501, %v1517
    %v1520 = vor.u32 %v1518, %v1519
    %v1521 = vsub.s32 4294967266, %v1516
    %v1522 = vadd.s32 %v1521, 127
    %v1523 = vshll.u32 %v1522, 23
    %v1524 = vor.u32 4788187, %v1523
    %v1525 = vand.u32 2147483647, %v1524
    %v1527 = vcvt.s32.f32 %v1520
    %v1528 = vmul.f32 %v1527, %v1525
    %v1529 = vxor.u32 %v1528, 2147483648
    %v1530 = vsel %vm1447, %v1529, %v1528
    %v1531 = vsub.s32 4, %v1507
    %v1532 = vsel %vm1447, %v1531, %v1507
    %v1533 = vsel %vm1446, %v1340, %v1530
    %v1534 = vsel %vm1446, 0, %v1532
    %v1535 = vcosq.f32.pop %v1533
    %v1536 = vsinq.f32.pop %v1533
    %vm1537 = vweird.f32 %v1340
    %v1538 = vadd.s32 %v1534, 3
    %v1539 = vand.u32 %v1538, 3
    %vm1540 = vcmp.lt.s32.totalorder %v1539, 2
    %vm1541 = vcmp.eq.s32.totalorder %v1539, 0
    %v1542 = vxor.u32 %v1536, 2147483648
    %v1543 = vsel %vm1541, %v1535, %v1542
    %vm1544 = vcmp.eq.s32.totalorder %v1539, 2
    %v1545 = vxor.u32 %v1535, 2147483648
    %v1546 = vsel %vm1544, %v1545, %v1536
    %v1547 = vsel %vm1540, %v1543, %v1546
    %v1548 = vsel %vm1537, nan, %v1547
    %v1549 = vand.u32 2147483647, %v1339
    %vm1550 = vcmp.le.f32.partialorder %v1549, 0.7853982
    %vm1551 = vcmp.lt.s32.totalorder %v1339, 0
    %v1552 = vand.u32 %v1339, 2139095040
    %v1553 = vshrl.u32 %v1552, 23
    %v1554 = vsub.s32 %v1553, 127
    %v1555 = vand.u32 2147483647, %v1339
    %v1556 = vand.u32 %v1555, 8388607
    %v1557 = vor.u32 %v1556, 8388608
    %v1558 = vsub.s32 0, %v1557
    %v1559 = vadd.s32 %v1554, 1
    %vm1560 = vcmp.gt.s32.totalorder %v1559, 0
    %v1561 = vsel %vm1560, %v1559, 0
    %v1562 = vshrl.u32 %v1561, 5
    %v1563 = vand.u32 %v1561, 31
    %v1564 = vsub.s32 32, %v1563
    %v1565 = vshrl.u32 683565275, %v1564
    %v1566 = vshll.u32 683565275, %v1563
    %v1567 = vshrl.u32 2475754826, %v1564
    %v1568 = vor.u32 %v1566, %v1567
    %v1569 = vshll.u32 2475754826, %v1563
    %v1570 = vshrl.u32 2131351028, %v1564
    %v1571 = vor.u32 %v1569, %v1570
    %v1572 = vshll.u32 2131351028, %v1563
    %v1573 = vshrl.u32 2102212464, %v1564
    %v1574 = vor.u32 %v1572, %v1573
    %v1575 = vshll.u32 2102212464, %v1563
    %v1576 = vshrl.u32 920167782, %v1564
    %v1577 = vor.u32 %v1575, %v1576
    %v1578 = vshll.u32 920167782, %v1563
    %v1579 = vshrl.u32 1326507024, %v1564
    %v1580 = vor.u32 %v1578, %v1579
    %vm1581 = vcmp.lt.s32.totalorder %v1562, 1
    %vm1582 = vcmp.lt.s32.totalorder %v1562, 2
    %vm1583 = vcmp.lt.s32.totalorder %v1562, 3
    %vm1584 = vcmp.lt.s32.totalorder %v1562, 4
    %v1585 = vsel %vm1581, %v1565, %v1568
    %v1586 = vsel %vm1584, %v1574, 2102212464
    %v1587 = vsel %vm1583, %v1571, %v1586
    %v1588 = vsel %vm1582, %v1585, %v1587
    %v1589 = vsel %vm1581, %v1568, %v1571
    %v1590 = vsel %vm1584, %v1577, 920167782
    %v1591 = vsel %vm1583, %v1574, %v1590
    %v1592 = vsel %vm1582, %v1589, %v1591
    %v1593 = vsel %vm1581, %v1571, %v1574
    %v1594 = vsel %vm1584, %v1580, 1326507024
    %v1595 = vsel %vm1583, %v1577, %v1594
    %v1596 = vsel %vm1582, %v1593, %v1595
    %v1597 = vshll.u32 %v1557, 8
    %v1598 = vmul.u32.u64.compose %v1597, %v1596
    %v1599 = vextract.low.u32 %v1598
    %v1600 = vextract.high.u32 %v1598
    %v1601 = vmul.u32.u64.compose %v1597, %v1592
    %v1602 = vextract.low.u32 %v1601
    %v1603 = vextract.high.u32 %v1601
    %v1604 = vmul.u32 %v1597, %v1588
    %v1605 = vadd.s32 %v1600, %v1602
    %vm1606 = vc.u32 %v1600, %v1602
    %v1607 = vadd.s32 %v1603, 1
    %v1608 = vsel %vm1606, %v1607, %v1603
    %v1609 = vadd.s32 %v1604, %v1608
    %v1610 = vadd.s32 %v1609, 536870912
    %v1611 = vshrl.u32 %v1610, 30
    %v1612 = vshll.u32 %v1611, 30
    %v1613 = vsub.s32 %v1609, %v1612
    %vm1614 = vcmp.lt.s32.totalorder %v1613, 0
    %v1615 = vsub.s32 0, %v1613
    %v1616 = vsel %vm1614, %v1615, %v1613
    %v1617 = vclz %v1616
    %v1618 = vsub.s32 %v1617, 2
    %vm1619 = vcmp.gt.s32.totalorder 0, %v1618
    %v1620 = vsel %vm1619, 0, %v1618
    %v1621 = vsub.s32 32, %v1620
    %v1622 = vshll.u32 %v1613, %v1620
    %v1623 = vshrl.u32 %v1605, %v1621
    %v1624 = vor.u32 %v1622, %v1623
    %v1625 = vsub.s32 4294967266, %v1620
    %v1626 = vadd.s32 %v1625, 127
    %v1627 = vshll.u32 %v1626, 23
    %v1628 = vor.u32 4788187, %v1627
    %v1629 = vand.u32 2147483647, %v1628
    %v1631 = vcvt.s32.f32 %v1624
    %v1632 = vmul.f32 %v1631, %v1629
    %v1633 = vxor.u32 %v1632, 2147483648
    %v1634 = vsel %vm1551, %v1633, %v1632
    %v1635 = vsub.s32 4, %v1611
    %v1636 = vsel %vm1551, %v1635, %v1611
    %v1637 = vsel %vm1550, %v1339, %v1634
    %v1638 = vsel %vm1550, 0, %v1636
    %v1639 = vcosq.f32.pop %v1637
    %v1640 = vsinq.f32.pop %v1637
    %vm1641 = vweird.f32 %v1339
    %v1642 = vand.u32 %v1638, 3
    %vm1643 = vcmp.lt.s32.totalorder %v1642, 2
    %vm1644 = vcmp.eq.s32.totalorder %v1642, 0
    %v1645 = vxor.u32 %v1640, 2147483648
    %v1646 = vsel %vm1644, %v1639, %v1645
    %vm1647 = vcmp.eq.s32.totalorder %v1642, 2
    %v1648 = vxor.u32 %v1639, 2147483648
    %v1649 = vsel %vm1647, %v1648, %v1640
    %v1650 = vsel %vm1643, %v1646, %v1649
    %v1651 = vsel %vm1641, nan, %v1650
    %v1652 = vand.u32 2147483647, %v1340
    %vm1653 = vcmp.le.f32.partialorder %v1652, 0.7853982
    %vm1654 = vcmp.lt.s32.totalorder %v1340, 0
    %v1655 = vand.u32 %v1340, 2139095040
    %v1656 = vshrl.u32 %v1655, 23
    %v1657 = vsub.s32 %v1656, 127
    %v1658 = vand.u32 2147483647, %v1340
    %v1659 = vand.u32 %v1658, 8388607
    %v1660 = vor.u32 %v1659, 8388608
    %v1661 = vsub.s32 0, %v1660
    %v1662 = vadd.s32 %v1657, 1
    %vm1663 = vcmp.gt.s32.totalorder %v1662, 0
    %v1664 = vsel %vm1663, %v1662, 0
    %v1665 = vshrl.u32 %v1664, 5
    %v1666 = vand.u32 %v1664, 31
    %v1667 = vsub.s32 32, %v1666
    %v1668 = vshrl.u32 683565275, %v1667
    %v1669 = vshll.u32 683565275, %v1666
    %v1670 = vshrl.u32 2475754826, %v1667
    %v1671 = vor.u32 %v1669, %v1670
    %v1672 = vshll.u32 2475754826, %v1666
    %v1673 = vshrl.u32 2131351028, %v1667
    %v1674 = vor.u32 %v1672, %v1673
    %v1675 = vshll.u32 2131351028, %v1666
    %v1676 = vshrl.u32 2102212464, %v1667
    %v1677 = vor.u32 %v1675, %v1676
    %v1678 = vshll.u32 2102212464, %v1666
    %v1679 = vshrl.u32 920167782, %v1667
    %v1680 = vor.u32 %v1678, %v1679
    %v1681 = vshll.u32 920167782, %v1666
    %v1682 = vshrl.u32 1326507024, %v1667
    %v1683 = vor.u32 %v1681, %v1682
    %vm1684 = vcmp.lt.s32.totalorder %v1665, 1
    %vm1685 = vcmp.lt.s32.totalorder %v1665, 2
    %vm1686 = vcmp.lt.s32.totalorder %v1665, 3
    %vm1687 = vcmp.lt.s32.totalorder %v1665, 4
    %v1688 = vsel %vm1684, %v1668, %v1671
    %v1689 = vsel %vm1687, %v1677, 2102212464
    %v1690 = vsel %vm1686, %v1674, %v1689
    %v1691 = vsel %vm1685, %v1688, %v1690
    %v1692 = vsel %vm1684, %v1671, %v1674
    %v1693 = vsel %vm1687, %v1680, 920167782
    %v1694 = vsel %vm1686, %v1677, %v1693
    %v1695 = vsel %vm1685, %v1692, %v1694
    %v1696 = vsel %vm1684, %v1674, %v1677
    %v1697 = vsel %vm1687, %v1683, 1326507024
    %v1698 = vsel %vm1686, %v1680, %v1697
    %v1699 = vsel %vm1685, %v1696, %v1698
    %v1700 = vshll.u32 %v1660, 8
    %v1701 = vmul.u32.u64.compose %v1700, %v1699
    %v1702 = vextract.low.u32 %v1701
    %v1703 = vextract.high.u32 %v1701
    %v1704 = vmul.u32.u64.compose %v1700, %v1695
    %v1705 = vextract.low.u32 %v1704
    %v1706 = vextract.high.u32 %v1704
    %v1707 = vmul.u32 %v1700, %v1691
    %v1708 = vadd.s32 %v1703, %v1705
    %vm1709 = vc.u32 %v1703, %v1705
    %v1710 = vadd.s32 %v1706, 1
    %v1711 = vsel %vm1709, %v1710, %v1706
    %v1712 = vadd.s32 %v1707, %v1711
    %v1713 = vadd.s32 %v1712, 536870912
    %v1714 = vshrl.u32 %v1713, 30
    %v1715 = vshll.u32 %v1714, 30
    %v1716 = vsub.s32 %v1712, %v1715
    %vm1717 = vcmp.lt.s32.totalorder %v1716, 0
    %v1718 = vsub.s32 0, %v1716
    %v1719 = vsel %vm1717, %v1718, %v1716
    %v1720 = vclz %v1719
    %v1721 = vsub.s32 %v1720, 2
    %vm1722 = vcmp.gt.s32.totalorder 0, %v1721
    %v1723 = vsel %vm1722, 0, %v1721
    %v1724 = vsub.s32 32, %v1723
    %v1725 = vshll.u32 %v1716, %v1723
    %v1726 = vshrl.u32 %v1708, %v1724
    %v1727 = vor.u32 %v1725, %v1726
    %v1728 = vsub.s32 4294967266, %v1723
    %v1729 = vadd.s32 %v1728, 127
    %v1730 = vshll.u32 %v1729, 23
    %v1731 = vor.u32 4788187, %v1730
    %v1732 = vand.u32 2147483647, %v1731
    %v1734 = vcvt.s32.f32 %v1727
    %v1735 = vmul.f32 %v1734, %v1732
    %v1736 = vxor.u32 %v1735, 2147483648
    %v1737 = vsel %vm1654, %v1736, %v1735
    %v1738 = vsub.s32 4, %v1714
    %v1739 = vsel %vm1654, %v1738, %v1714
    %v1740 = vsel %vm1653, %v1340, %v1737
    %v1741 = vsel %vm1653, 0, %v1739
    %v1742 = vcosq.f32.pop %v1740
    %v1743 = vsinq.f32.pop %v1740
    %vm1744 = vweird.f32 %v1340
    %v1745 = vand.u32 %v1741, 3
    %vm1746 = vcmp.lt.s32.totalorder %v1745, 2
    %vm1747 = vcmp.eq.s32.totalorder %v1745, 0
    %v1748 = vxor.u32 %v1743, 2147483648
    %v1749 = vsel %vm1747, %v1742, %v1748
    %vm1750 = vcmp.eq.s32.totalorder %v1745, 2
    %v1751 = vxor.u32 %v1742, 2147483648
    %v1752 = vsel %vm1750, %v1751, %v1743
    %v1753 = vsel %vm1746, %v1749, %v1752
    %v1754 = vsel %vm1744, nan, %v1753
    %1757 = vrot.lane.b32.xlu0 %v1651, 32
    %v1758 = vpop.permute.xlu0 %1757
    %1759 = vrot.lane.b32.xlu0 %v1754, 32
    %v1760 = vpop.permute.xlu0 %1759
    %v1763 = vsel %vm316, %v1444, %v1758
    %v1764 = vsel %vm316, %v1548, %v1760
    %1765 = vset.pattern.permute.xlu0 13
    %1766 = vperm.xlu0 %1765, %v402
    %v1767 = vpop.permute.xlu0 %1766
    %1769 = vset.pattern.permute.xlu0 13
    %1770 = vperm.xlu0 %1769, %v403
    %v1771 = vpop.permute.xlu0 %1770
    %v1773 = vmul.f32 %v1767, %v58
    %v1774 = vmul.f32 %v1771, %v58
    %v1775 = vand.u32 2147483647, %v1773
    %vm1776 = vcmp.le.f32.partialorder %v1775, 0.7853982
    %vm1777 = vcmp.lt.s32.totalorder %v1773, 0
    %v1778 = vand.u32 %v1773, 2139095040
    %v1779 = vshrl.u32 %v1778, 23
    %v1780 = vsub.s32 %v1779, 127
    %v1781 = vand.u32 2147483647, %v1773
    %v1782 = vand.u32 %v1781, 8388607
    %v1783 = vor.u32 %v1782, 8388608
    %v1784 = vsub.s32 0, %v1783
    %v1785 = vadd.s32 %v1780, 1
    %vm1786 = vcmp.gt.s32.totalorder %v1785, 0
    %v1787 = vsel %vm1786, %v1785, 0
    %v1788 = vshrl.u32 %v1787, 5
    %v1789 = vand.u32 %v1787, 31
    %v1790 = vsub.s32 32, %v1789
    %v1791 = vshrl.u32 683565275, %v1790
    %v1792 = vshll.u32 683565275, %v1789
    %v1793 = vshrl.u32 2475754826, %v1790
    %v1794 = vor.u32 %v1792, %v1793
    %v1795 = vshll.u32 2475754826, %v1789
    %v1796 = vshrl.u32 2131351028, %v1790
    %v1797 = vor.u32 %v1795, %v1796
    %v1798 = vshll.u32 2131351028, %v1789
    %v1799 = vshrl.u32 2102212464, %v1790
    %v1800 = vor.u32 %v1798, %v1799
    %v1801 = vshll.u32 2102212464, %v1789
    %v1802 = vshrl.u32 920167782, %v1790
    %v1803 = vor.u32 %v1801, %v1802
    %v1804 = vshll.u32 920167782, %v1789
    %v1805 = vshrl.u32 1326507024, %v1790
    %v1806 = vor.u32 %v1804, %v1805
    %vm1807 = vcmp.lt.s32.totalorder %v1788, 1
    %vm1808 = vcmp.lt.s32.totalorder %v1788, 2
    %vm1809 = vcmp.lt.s32.totalorder %v1788, 3
    %vm1810 = vcmp.lt.s32.totalorder %v1788, 4
    %v1811 = vsel %vm1807, %v1791, %v1794
    %v1812 = vsel %vm1810, %v1800, 2102212464
    %v1813 = vsel %vm1809, %v1797, %v1812
    %v1814 = vsel %vm1808, %v1811, %v1813
    %v1815 = vsel %vm1807, %v1794, %v1797
    %v1816 = vsel %vm1810, %v1803, 920167782
    %v1817 = vsel %vm1809, %v1800, %v1816
    %v1818 = vsel %vm1808, %v1815, %v1817
    %v1819 = vsel %vm1807, %v1797, %v1800
    %v1820 = vsel %vm1810, %v1806, 1326507024
    %v1821 = vsel %vm1809, %v1803, %v1820
    %v1822 = vsel %vm1808, %v1819, %v1821
    %v1823 = vshll.u32 %v1783, 8
    %v1824 = vmul.u32.u64.compose %v1823, %v1822
    %v1825 = vextract.low.u32 %v1824
    %v1826 = vextract.high.u32 %v1824
    %v1827 = vmul.u32.u64.compose %v1823, %v1818
    %v1828 = vextract.low.u32 %v1827
    %v1829 = vextract.high.u32 %v1827
    %v1830 = vmul.u32 %v1823, %v1814
    %v1831 = vadd.s32 %v1826, %v1828
    %vm1832 = vc.u32 %v1826, %v1828
    %v1833 = vadd.s32 %v1829, 1
    %v1834 = vsel %vm1832, %v1833, %v1829
    %v1835 = vadd.s32 %v1830, %v1834
    %v1836 = vadd.s32 %v1835, 536870912
    %v1837 = vshrl.u32 %v1836, 30
    %v1838 = vshll.u32 %v1837, 30
    %v1839 = vsub.s32 %v1835, %v1838
    %vm1840 = vcmp.lt.s32.totalorder %v1839, 0
    %v1841 = vsub.s32 0, %v1839
    %v1842 = vsel %vm1840, %v1841, %v1839
    %v1843 = vclz %v1842
    %v1844 = vsub.s32 %v1843, 2
    %vm1845 = vcmp.gt.s32.totalorder 0, %v1844
    %v1846 = vsel %vm1845, 0, %v1844
    %v1847 = vsub.s32 32, %v1846
    %v1848 = vshll.u32 %v1839, %v1846
    %v1849 = vshrl.u32 %v1831, %v1847
    %v1850 = vor.u32 %v1848, %v1849
    %v1851 = vsub.s32 4294967266, %v1846
    %v1852 = vadd.s32 %v1851, 127
    %v1853 = vshll.u32 %v1852, 23
    %v1854 = vor.u32 4788187, %v1853
    %v1855 = vand.u32 2147483647, %v1854
    %v1857 = vcvt.s32.f32 %v1850
    %v1858 = vmul.f32 %v1857, %v1855
    %v1859 = vxor.u32 %v1858, 2147483648
    %v1860 = vsel %vm1777, %v1859, %v1858
    %v1861 = vsub.s32 4, %v1837
    %v1862 = vsel %vm1777, %v1861, %v1837
    %v1863 = vsel %vm1776, %v1773, %v1860
    %v1864 = vsel %vm1776, 0, %v1862
    %v1865 = vcosq.f32.pop %v1863
    %v1866 = vsinq.f32.pop %v1863
    %vm1867 = vweird.f32 %v1773
    %v1868 = vadd.s32 %v1864, 3
    %v1869 = vand.u32 %v1868, 3
    %vm1870 = vcmp.lt.s32.totalorder %v1869, 2
    %vm1871 = vcmp.eq.s32.totalorder %v1869, 0
    %v1872 = vxor.u32 %v1866, 2147483648
    %v1873 = vsel %vm1871, %v1865, %v1872
    %vm1874 = vcmp.eq.s32.totalorder %v1869, 2
    %v1875 = vxor.u32 %v1865, 2147483648
    %v1876 = vsel %vm1874, %v1875, %v1866
    %v1877 = vsel %vm1870, %v1873, %v1876
    %v1878 = vsel %vm1867, nan, %v1877
    %v1879 = vand.u32 2147483647, %v1774
    %vm1880 = vcmp.le.f32.partialorder %v1879, 0.7853982
    %vm1881 = vcmp.lt.s32.totalorder %v1774, 0
    %v1882 = vand.u32 %v1774, 2139095040
    %v1883 = vshrl.u32 %v1882, 23
    %v1884 = vsub.s32 %v1883, 127
    %v1885 = vand.u32 2147483647, %v1774
    %v1886 = vand.u32 %v1885, 8388607
    %v1887 = vor.u32 %v1886, 8388608
    %v1888 = vsub.s32 0, %v1887
    %v1889 = vadd.s32 %v1884, 1
    %vm1890 = vcmp.gt.s32.totalorder %v1889, 0
    %v1891 = vsel %vm1890, %v1889, 0
    %v1892 = vshrl.u32 %v1891, 5
    %v1893 = vand.u32 %v1891, 31
    %v1894 = vsub.s32 32, %v1893
    %v1895 = vshrl.u32 683565275, %v1894
    %v1896 = vshll.u32 683565275, %v1893
    %v1897 = vshrl.u32 2475754826, %v1894
    %v1898 = vor.u32 %v1896, %v1897
    %v1899 = vshll.u32 2475754826, %v1893
    %v1900 = vshrl.u32 2131351028, %v1894
    %v1901 = vor.u32 %v1899, %v1900
    %v1902 = vshll.u32 2131351028, %v1893
    %v1903 = vshrl.u32 2102212464, %v1894
    %v1904 = vor.u32 %v1902, %v1903
    %v1905 = vshll.u32 2102212464, %v1893
    %v1906 = vshrl.u32 920167782, %v1894
    %v1907 = vor.u32 %v1905, %v1906
    %v1908 = vshll.u32 920167782, %v1893
    %v1909 = vshrl.u32 1326507024, %v1894
    %v1910 = vor.u32 %v1908, %v1909
    %vm1911 = vcmp.lt.s32.totalorder %v1892, 1
    %vm1912 = vcmp.lt.s32.totalorder %v1892, 2
    %vm1913 = vcmp.lt.s32.totalorder %v1892, 3
    %vm1914 = vcmp.lt.s32.totalorder %v1892, 4
    %v1915 = vsel %vm1911, %v1895, %v1898
    %v1916 = vsel %vm1914, %v1904, 2102212464
    %v1917 = vsel %vm1913, %v1901, %v1916
    %v1918 = vsel %vm1912, %v1915, %v1917
    %v1919 = vsel %vm1911, %v1898, %v1901
    %v1920 = vsel %vm1914, %v1907, 920167782
    %v1921 = vsel %vm1913, %v1904, %v1920
    %v1922 = vsel %vm1912, %v1919, %v1921
    %v1923 = vsel %vm1911, %v1901, %v1904
    %v1924 = vsel %vm1914, %v1910, 1326507024
    %v1925 = vsel %vm1913, %v1907, %v1924
    %v1926 = vsel %vm1912, %v1923, %v1925
    %v1927 = vshll.u32 %v1887, 8
    %v1928 = vmul.u32.u64.compose %v1927, %v1926
    %v1929 = vextract.low.u32 %v1928
    %v1930 = vextract.high.u32 %v1928
    %v1931 = vmul.u32.u64.compose %v1927, %v1922
    %v1932 = vextract.low.u32 %v1931
    %v1933 = vextract.high.u32 %v1931
    %v1934 = vmul.u32 %v1927, %v1918
    %v1935 = vadd.s32 %v1930, %v1932
    %vm1936 = vc.u32 %v1930, %v1932
    %v1937 = vadd.s32 %v1933, 1
    %v1938 = vsel %vm1936, %v1937, %v1933
    %v1939 = vadd.s32 %v1934, %v1938
    %v1940 = vadd.s32 %v1939, 536870912
    %v1941 = vshrl.u32 %v1940, 30
    %v1942 = vshll.u32 %v1941, 30
    %v1943 = vsub.s32 %v1939, %v1942
    %vm1944 = vcmp.lt.s32.totalorder %v1943, 0
    %v1945 = vsub.s32 0, %v1943
    %v1946 = vsel %vm1944, %v1945, %v1943
    %v1947 = vclz %v1946
    %v1948 = vsub.s32 %v1947, 2
    %vm1949 = vcmp.gt.s32.totalorder 0, %v1948
    %v1950 = vsel %vm1949, 0, %v1948
    %v1951 = vsub.s32 32, %v1950
    %v1952 = vshll.u32 %v1943, %v1950
    %v1953 = vshrl.u32 %v1935, %v1951
    %v1954 = vor.u32 %v1952, %v1953
    %v1955 = vsub.s32 4294967266, %v1950
    %v1956 = vadd.s32 %v1955, 127
    %v1957 = vshll.u32 %v1956, 23
    %v1958 = vor.u32 4788187, %v1957
    %v1959 = vand.u32 2147483647, %v1958
    %v1961 = vcvt.s32.f32 %v1954
    %v1962 = vmul.f32 %v1961, %v1959
    %v1963 = vxor.u32 %v1962, 2147483648
    %v1964 = vsel %vm1881, %v1963, %v1962
    %v1965 = vsub.s32 4, %v1941
    %v1966 = vsel %vm1881, %v1965, %v1941
    %v1967 = vsel %vm1880, %v1774, %v1964
    %v1968 = vsel %vm1880, 0, %v1966
    %v1969 = vcosq.f32.pop %v1967
    %v1970 = vsinq.f32.pop %v1967
    %vm1971 = vweird.f32 %v1774
    %v1972 = vadd.s32 %v1968, 3
    %v1973 = vand.u32 %v1972, 3
    %vm1974 = vcmp.lt.s32.totalorder %v1973, 2
    %vm1975 = vcmp.eq.s32.totalorder %v1973, 0
    %v1976 = vxor.u32 %v1970, 2147483648
    %v1977 = vsel %vm1975, %v1969, %v1976
    %vm1978 = vcmp.eq.s32.totalorder %v1973, 2
    %v1979 = vxor.u32 %v1969, 2147483648
    %v1980 = vsel %vm1978, %v1979, %v1970
    %v1981 = vsel %vm1974, %v1977, %v1980
    %v1982 = vsel %vm1971, nan, %v1981
    %v1983 = vand.u32 2147483647, %v1773
    %vm1984 = vcmp.le.f32.partialorder %v1983, 0.7853982
    %vm1985 = vcmp.lt.s32.totalorder %v1773, 0
    %v1986 = vand.u32 %v1773, 2139095040
    %v1987 = vshrl.u32 %v1986, 23
    %v1988 = vsub.s32 %v1987, 127
    %v1989 = vand.u32 2147483647, %v1773
    %v1990 = vand.u32 %v1989, 8388607
    %v1991 = vor.u32 %v1990, 8388608
    %v1992 = vsub.s32 0, %v1991
    %v1993 = vadd.s32 %v1988, 1
    %vm1994 = vcmp.gt.s32.totalorder %v1993, 0
    %v1995 = vsel %vm1994, %v1993, 0
    %v1996 = vshrl.u32 %v1995, 5
    %v1997 = vand.u32 %v1995, 31
    %v1998 = vsub.s32 32, %v1997
    %v1999 = vshrl.u32 683565275, %v1998
    %v2000 = vshll.u32 683565275, %v1997
    %v2001 = vshrl.u32 2475754826, %v1998
    %v2002 = vor.u32 %v2000, %v2001
    %v2003 = vshll.u32 2475754826, %v1997
    %v2004 = vshrl.u32 2131351028, %v1998
    %v2005 = vor.u32 %v2003, %v2004
    %v2006 = vshll.u32 2131351028, %v1997
    %v2007 = vshrl.u32 2102212464, %v1998
    %v2008 = vor.u32 %v2006, %v2007
    %v2009 = vshll.u32 2102212464, %v1997
    %v2010 = vshrl.u32 920167782, %v1998
    %v2011 = vor.u32 %v2009, %v2010
    %v2012 = vshll.u32 920167782, %v1997
    %v2013 = vshrl.u32 1326507024, %v1998
    %v2014 = vor.u32 %v2012, %v2013
    %vm2015 = vcmp.lt.s32.totalorder %v1996, 1
    %vm2016 = vcmp.lt.s32.totalorder %v1996, 2
    %vm2017 = vcmp.lt.s32.totalorder %v1996, 3
    %vm2018 = vcmp.lt.s32.totalorder %v1996, 4
    %v2019 = vsel %vm2015, %v1999, %v2002
    %v2020 = vsel %vm2018, %v2008, 2102212464
    %v2021 = vsel %vm2017, %v2005, %v2020
    %v2022 = vsel %vm2016, %v2019, %v2021
    %v2023 = vsel %vm2015, %v2002, %v2005
    %v2024 = vsel %vm2018, %v2011, 920167782
    %v2025 = vsel %vm2017, %v2008, %v2024
    %v2026 = vsel %vm2016, %v2023, %v2025
    %v2027 = vsel %vm2015, %v2005, %v2008
    %v2028 = vsel %vm2018, %v2014, 1326507024
    %v2029 = vsel %vm2017, %v2011, %v2028
    %v2030 = vsel %vm2016, %v2027, %v2029
    %v2031 = vshll.u32 %v1991, 8
    %v2032 = vmul.u32.u64.compose %v2031, %v2030
    %v2033 = vextract.low.u32 %v2032
    %v2034 = vextract.high.u32 %v2032
    %v2035 = vmul.u32.u64.compose %v2031, %v2026
    %v2036 = vextract.low.u32 %v2035
    %v2037 = vextract.high.u32 %v2035
    %v2038 = vmul.u32 %v2031, %v2022
    %v2039 = vadd.s32 %v2034, %v2036
    %vm2040 = vc.u32 %v2034, %v2036
    %v2041 = vadd.s32 %v2037, 1
    %v2042 = vsel %vm2040, %v2041, %v2037
    %v2043 = vadd.s32 %v2038, %v2042
    %v2044 = vadd.s32 %v2043, 536870912
    %v2045 = vshrl.u32 %v2044, 30
    %v2046 = vshll.u32 %v2045, 30
    %v2047 = vsub.s32 %v2043, %v2046
    %vm2048 = vcmp.lt.s32.totalorder %v2047, 0
    %v2049 = vsub.s32 0, %v2047
    %v2050 = vsel %vm2048, %v2049, %v2047
    %v2051 = vclz %v2050
    %v2052 = vsub.s32 %v2051, 2
    %vm2053 = vcmp.gt.s32.totalorder 0, %v2052
    %v2054 = vsel %vm2053, 0, %v2052
    %v2055 = vsub.s32 32, %v2054
    %v2056 = vshll.u32 %v2047, %v2054
    %v2057 = vshrl.u32 %v2039, %v2055
    %v2058 = vor.u32 %v2056, %v2057
    %v2059 = vsub.s32 4294967266, %v2054
    %v2060 = vadd.s32 %v2059, 127
    %v2061 = vshll.u32 %v2060, 23
    %v2062 = vor.u32 4788187, %v2061
    %v2063 = vand.u32 2147483647, %v2062
    %v2065 = vcvt.s32.f32 %v2058
    %v2066 = vmul.f32 %v2065, %v2063
    %v2067 = vxor.u32 %v2066, 2147483648
    %v2068 = vsel %vm1985, %v2067, %v2066
    %v2069 = vsub.s32 4, %v2045
    %v2070 = vsel %vm1985, %v2069, %v2045
    %v2071 = vsel %vm1984, %v1773, %v2068
    %v2072 = vsel %vm1984, 0, %v2070
    %v2073 = vcosq.f32.pop %v2071
    %v2074 = vsinq.f32.pop %v2071
    %vm2075 = vweird.f32 %v1773
    %v2076 = vand.u32 %v2072, 3
    %vm2077 = vcmp.lt.s32.totalorder %v2076, 2
    %vm2078 = vcmp.eq.s32.totalorder %v2076, 0
    %v2079 = vxor.u32 %v2074, 2147483648
    %v2080 = vsel %vm2078, %v2073, %v2079
    %vm2081 = vcmp.eq.s32.totalorder %v2076, 2
    %v2082 = vxor.u32 %v2073, 2147483648
    %v2083 = vsel %vm2081, %v2082, %v2074
    %v2084 = vsel %vm2077, %v2080, %v2083
    %v2085 = vsel %vm2075, nan, %v2084
    %v2086 = vand.u32 2147483647, %v1774
    %vm2087 = vcmp.le.f32.partialorder %v2086, 0.7853982
    %vm2088 = vcmp.lt.s32.totalorder %v1774, 0
    %v2089 = vand.u32 %v1774, 2139095040
    %v2090 = vshrl.u32 %v2089, 23
    %v2091 = vsub.s32 %v2090, 127
    %v2092 = vand.u32 2147483647, %v1774
    %v2093 = vand.u32 %v2092, 8388607
    %v2094 = vor.u32 %v2093, 8388608
    %v2095 = vsub.s32 0, %v2094
    %v2096 = vadd.s32 %v2091, 1
    %vm2097 = vcmp.gt.s32.totalorder %v2096, 0
    %v2098 = vsel %vm2097, %v2096, 0
    %v2099 = vshrl.u32 %v2098, 5
    %v2100 = vand.u32 %v2098, 31
    %v2101 = vsub.s32 32, %v2100
    %v2102 = vshrl.u32 683565275, %v2101
    %v2103 = vshll.u32 683565275, %v2100
    %v2104 = vshrl.u32 2475754826, %v2101
    %v2105 = vor.u32 %v2103, %v2104
    %v2106 = vshll.u32 2475754826, %v2100
    %v2107 = vshrl.u32 2131351028, %v2101
    %v2108 = vor.u32 %v2106, %v2107
    %v2109 = vshll.u32 2131351028, %v2100
    %v2110 = vshrl.u32 2102212464, %v2101
    %v2111 = vor.u32 %v2109, %v2110
    %v2112 = vshll.u32 2102212464, %v2100
    %v2113 = vshrl.u32 920167782, %v2101
    %v2114 = vor.u32 %v2112, %v2113
    %v2115 = vshll.u32 920167782, %v2100
    %v2116 = vshrl.u32 1326507024, %v2101
    %v2117 = vor.u32 %v2115, %v2116
    %vm2118 = vcmp.lt.s32.totalorder %v2099, 1
    %vm2119 = vcmp.lt.s32.totalorder %v2099, 2
    %vm2120 = vcmp.lt.s32.totalorder %v2099, 3
    %vm2121 = vcmp.lt.s32.totalorder %v2099, 4
    %v2122 = vsel %vm2118, %v2102, %v2105
    %v2123 = vsel %vm2121, %v2111, 2102212464
    %v2124 = vsel %vm2120, %v2108, %v2123
    %v2125 = vsel %vm2119, %v2122, %v2124
    %v2126 = vsel %vm2118, %v2105, %v2108
    %v2127 = vsel %vm2121, %v2114, 920167782
    %v2128 = vsel %vm2120, %v2111, %v2127
    %v2129 = vsel %vm2119, %v2126, %v2128
    %v2130 = vsel %vm2118, %v2108, %v2111
    %v2131 = vsel %vm2121, %v2117, 1326507024
    %v2132 = vsel %vm2120, %v2114, %v2131
    %v2133 = vsel %vm2119, %v2130, %v2132
    %v2134 = vshll.u32 %v2094, 8
    %v2135 = vmul.u32.u64.compose %v2134, %v2133
    %v2136 = vextract.low.u32 %v2135
    %v2137 = vextract.high.u32 %v2135
    %v2138 = vmul.u32.u64.compose %v2134, %v2129
    %v2139 = vextract.low.u32 %v2138
    %v2140 = vextract.high.u32 %v2138
    %v2141 = vmul.u32 %v2134, %v2125
    %v2142 = vadd.s32 %v2137, %v2139
    %vm2143 = vc.u32 %v2137, %v2139
    %v2144 = vadd.s32 %v2140, 1
    %v2145 = vsel %vm2143, %v2144, %v2140
    %v2146 = vadd.s32 %v2141, %v2145
    %v2147 = vadd.s32 %v2146, 536870912
    %v2148 = vshrl.u32 %v2147, 30
    %v2149 = vshll.u32 %v2148, 30
    %v2150 = vsub.s32 %v2146, %v2149
    %vm2151 = vcmp.lt.s32.totalorder %v2150, 0
    %v2152 = vsub.s32 0, %v2150
    %v2153 = vsel %vm2151, %v2152, %v2150
    %v2154 = vclz %v2153
    %v2155 = vsub.s32 %v2154, 2
    %vm2156 = vcmp.gt.s32.totalorder 0, %v2155
    %v2157 = vsel %vm2156, 0, %v2155
    %v2158 = vsub.s32 32, %v2157
    %v2159 = vshll.u32 %v2150, %v2157
    %v2160 = vshrl.u32 %v2142, %v2158
    %v2161 = vor.u32 %v2159, %v2160
    %v2162 = vsub.s32 4294967266, %v2157
    %v2163 = vadd.s32 %v2162, 127
    %v2164 = vshll.u32 %v2163, 23
    %v2165 = vor.u32 4788187, %v2164
    %v2166 = vand.u32 2147483647, %v2165
    %v2168 = vcvt.s32.f32 %v2161
    %v2169 = vmul.f32 %v2168, %v2166
    %v2170 = vxor.u32 %v2169, 2147483648
    %v2171 = vsel %vm2088, %v2170, %v2169
    %v2172 = vsub.s32 4, %v2148
    %v2173 = vsel %vm2088, %v2172, %v2148
    %v2174 = vsel %vm2087, %v1774, %v2171
    %v2175 = vsel %vm2087, 0, %v2173
    %v2176 = vcosq.f32.pop %v2174
    %v2177 = vsinq.f32.pop %v2174
    %vm2178 = vweird.f32 %v1774
    %v2179 = vand.u32 %v2175, 3
    %vm2180 = vcmp.lt.s32.totalorder %v2179, 2
    %vm2181 = vcmp.eq.s32.totalorder %v2179, 0
    %v2182 = vxor.u32 %v2177, 2147483648
    %v2183 = vsel %vm2181, %v2176, %v2182
    %vm2184 = vcmp.eq.s32.totalorder %v2179, 2
    %v2185 = vxor.u32 %v2176, 2147483648
    %v2186 = vsel %vm2184, %v2185, %v2177
    %v2187 = vsel %vm2180, %v2183, %v2186
    %v2188 = vsel %vm2178, nan, %v2187
    %2191 = vrot.lane.b32.xlu0 %v2085, 32
    %v2192 = vpop.permute.xlu0 %2191
    %2193 = vrot.lane.b32.xlu0 %v2188, 32
    %v2194 = vpop.permute.xlu0 %2193
    %v2197 = vsel %vm316, %v1878, %v2192
    %v2198 = vsel %vm316, %v1982, %v2194
    %2199 = vset.pattern.permute.xlu0 14
    %2200 = vperm.xlu0 %2199, %v402
    %v2201 = vpop.permute.xlu0 %2200
    %2203 = vset.pattern.permute.xlu0 14
    %2204 = vperm.xlu0 %2203, %v403
    %v2205 = vpop.permute.xlu0 %2204
    %v2207 = vmul.f32 %v2201, %v58
    %v2208 = vmul.f32 %v2205, %v58
    %v2209 = vand.u32 2147483647, %v2207
    %vm2210 = vcmp.le.f32.partialorder %v2209, 0.7853982
    %vm2211 = vcmp.lt.s32.totalorder %v2207, 0
    %v2212 = vand.u32 %v2207, 2139095040
    %v2213 = vshrl.u32 %v2212, 23
    %v2214 = vsub.s32 %v2213, 127
    %v2215 = vand.u32 2147483647, %v2207
    %v2216 = vand.u32 %v2215, 8388607
    %v2217 = vor.u32 %v2216, 8388608
    %v2218 = vsub.s32 0, %v2217
    %v2219 = vadd.s32 %v2214, 1
    %vm2220 = vcmp.gt.s32.totalorder %v2219, 0
    %v2221 = vsel %vm2220, %v2219, 0
    %v2222 = vshrl.u32 %v2221, 5
    %v2223 = vand.u32 %v2221, 31
    %v2224 = vsub.s32 32, %v2223
    %v2225 = vshrl.u32 683565275, %v2224
    %v2226 = vshll.u32 683565275, %v2223
    %v2227 = vshrl.u32 2475754826, %v2224
    %v2228 = vor.u32 %v2226, %v2227
    %v2229 = vshll.u32 2475754826, %v2223
    %v2230 = vshrl.u32 2131351028, %v2224
    %v2231 = vor.u32 %v2229, %v2230
    %v2232 = vshll.u32 2131351028, %v2223
    %v2233 = vshrl.u32 2102212464, %v2224
    %v2234 = vor.u32 %v2232, %v2233
    %v2235 = vshll.u32 2102212464, %v2223
    %v2236 = vshrl.u32 920167782, %v2224
    %v2237 = vor.u32 %v2235, %v2236
    %v2238 = vshll.u32 920167782, %v2223
    %v2239 = vshrl.u32 1326507024, %v2224
    %v2240 = vor.u32 %v2238, %v2239
    %vm2241 = vcmp.lt.s32.totalorder %v2222, 1
    %vm2242 = vcmp.lt.s32.totalorder %v2222, 2
    %vm2243 = vcmp.lt.s32.totalorder %v2222, 3
    %vm2244 = vcmp.lt.s32.totalorder %v2222, 4
    %v2245 = vsel %vm2241, %v2225, %v2228
    %v2246 = vsel %vm2244, %v2234, 2102212464
    %v2247 = vsel %vm2243, %v2231, %v2246
    %v2248 = vsel %vm2242, %v2245, %v2247
    %v2249 = vsel %vm2241, %v2228, %v2231
    %v2250 = vsel %vm2244, %v2237, 920167782
    %v2251 = vsel %vm2243, %v2234, %v2250
    %v2252 = vsel %vm2242, %v2249, %v2251
    %v2253 = vsel %vm2241, %v2231, %v2234
    %v2254 = vsel %vm2244, %v2240, 1326507024
    %v2255 = vsel %vm2243, %v2237, %v2254
    %v2256 = vsel %vm2242, %v2253, %v2255
    %v2257 = vshll.u32 %v2217, 8
    %v2258 = vmul.u32.u64.compose %v2257, %v2256
    %v2259 = vextract.low.u32 %v2258
    %v2260 = vextract.high.u32 %v2258
    %v2261 = vmul.u32.u64.compose %v2257, %v2252
    %v2262 = vextract.low.u32 %v2261
    %v2263 = vextract.high.u32 %v2261
    %v2264 = vmul.u32 %v2257, %v2248
    %v2265 = vadd.s32 %v2260, %v2262
    %vm2266 = vc.u32 %v2260, %v2262
    %v2267 = vadd.s32 %v2263, 1
    %v2268 = vsel %vm2266, %v2267, %v2263
    %v2269 = vadd.s32 %v2264, %v2268
    %v2270 = vadd.s32 %v2269, 536870912
    %v2271 = vshrl.u32 %v2270, 30
    %v2272 = vshll.u32 %v2271, 30
    %v2273 = vsub.s32 %v2269, %v2272
    %vm2274 = vcmp.lt.s32.totalorder %v2273, 0
    %v2275 = vsub.s32 0, %v2273
    %v2276 = vsel %vm2274, %v2275, %v2273
    %v2277 = vclz %v2276
    %v2278 = vsub.s32 %v2277, 2
    %vm2279 = vcmp.gt.s32.totalorder 0, %v2278
    %v2280 = vsel %vm2279, 0, %v2278
    %v2281 = vsub.s32 32, %v2280
    %v2282 = vshll.u32 %v2273, %v2280
    %v2283 = vshrl.u32 %v2265, %v2281
    %v2284 = vor.u32 %v2282, %v2283
    %v2285 = vsub.s32 4294967266, %v2280
    %v2286 = vadd.s32 %v2285, 127
    %v2287 = vshll.u32 %v2286, 23
    %v2288 = vor.u32 4788187, %v2287
    %v2289 = vand.u32 2147483647, %v2288
    %v2291 = vcvt.s32.f32 %v2284
    %v2292 = vmul.f32 %v2291, %v2289
    %v2293 = vxor.u32 %v2292, 2147483648
    %v2294 = vsel %vm2211, %v2293, %v2292
    %v2295 = vsub.s32 4, %v2271
    %v2296 = vsel %vm2211, %v2295, %v2271
    %v2297 = vsel %vm2210, %v2207, %v2294
    %v2298 = vsel %vm2210, 0, %v2296
    %v2299 = vcosq.f32.pop %v2297
    %v2300 = vsinq.f32.pop %v2297
    %vm2301 = vweird.f32 %v2207
    %v2302 = vadd.s32 %v2298, 3
    %v2303 = vand.u32 %v2302, 3
    %vm2304 = vcmp.lt.s32.totalorder %v2303, 2
    %vm2305 = vcmp.eq.s32.totalorder %v2303, 0
    %v2306 = vxor.u32 %v2300, 2147483648
    %v2307 = vsel %vm2305, %v2299, %v2306
    %vm2308 = vcmp.eq.s32.totalorder %v2303, 2
    %v2309 = vxor.u32 %v2299, 2147483648
    %v2310 = vsel %vm2308, %v2309, %v2300
    %v2311 = vsel %vm2304, %v2307, %v2310
    %v2312 = vsel %vm2301, nan, %v2311
    %v2313 = vand.u32 2147483647, %v2208
    %vm2314 = vcmp.le.f32.partialorder %v2313, 0.7853982
    %vm2315 = vcmp.lt.s32.totalorder %v2208, 0
    %v2316 = vand.u32 %v2208, 2139095040
    %v2317 = vshrl.u32 %v2316, 23
    %v2318 = vsub.s32 %v2317, 127
    %v2319 = vand.u32 2147483647, %v2208
    %v2320 = vand.u32 %v2319, 8388607
    %v2321 = vor.u32 %v2320, 8388608
    %v2322 = vsub.s32 0, %v2321
    %v2323 = vadd.s32 %v2318, 1
    %vm2324 = vcmp.gt.s32.totalorder %v2323, 0
    %v2325 = vsel %vm2324, %v2323, 0
    %v2326 = vshrl.u32 %v2325, 5
    %v2327 = vand.u32 %v2325, 31
    %v2328 = vsub.s32 32, %v2327
    %v2329 = vshrl.u32 683565275, %v2328
    %v2330 = vshll.u32 683565275, %v2327
    %v2331 = vshrl.u32 2475754826, %v2328
    %v2332 = vor.u32 %v2330, %v2331
    %v2333 = vshll.u32 2475754826, %v2327
    %v2334 = vshrl.u32 2131351028, %v2328
    %v2335 = vor.u32 %v2333, %v2334
    %v2336 = vshll.u32 2131351028, %v2327
    %v2337 = vshrl.u32 2102212464, %v2328
    %v2338 = vor.u32 %v2336, %v2337
    %v2339 = vshll.u32 2102212464, %v2327
    %v2340 = vshrl.u32 920167782, %v2328
    %v2341 = vor.u32 %v2339, %v2340
    %v2342 = vshll.u32 920167782, %v2327
    %v2343 = vshrl.u32 1326507024, %v2328
    %v2344 = vor.u32 %v2342, %v2343
    %vm2345 = vcmp.lt.s32.totalorder %v2326, 1
    %vm2346 = vcmp.lt.s32.totalorder %v2326, 2
    %vm2347 = vcmp.lt.s32.totalorder %v2326, 3
    %vm2348 = vcmp.lt.s32.totalorder %v2326, 4
    %v2349 = vsel %vm2345, %v2329, %v2332
    %v2350 = vsel %vm2348, %v2338, 2102212464
    %v2351 = vsel %vm2347, %v2335, %v2350
    %v2352 = vsel %vm2346, %v2349, %v2351
    %v2353 = vsel %vm2345, %v2332, %v2335
    %v2354 = vsel %vm2348, %v2341, 920167782
    %v2355 = vsel %vm2347, %v2338, %v2354
    %v2356 = vsel %vm2346, %v2353, %v2355
    %v2357 = vsel %vm2345, %v2335, %v2338
    %v2358 = vsel %vm2348, %v2344, 1326507024
    %v2359 = vsel %vm2347, %v2341, %v2358
    %v2360 = vsel %vm2346, %v2357, %v2359
    %v2361 = vshll.u32 %v2321, 8
    %v2362 = vmul.u32.u64.compose %v2361, %v2360
    %v2363 = vextract.low.u32 %v2362
    %v2364 = vextract.high.u32 %v2362
    %v2365 = vmul.u32.u64.compose %v2361, %v2356
    %v2366 = vextract.low.u32 %v2365
    %v2367 = vextract.high.u32 %v2365
    %v2368 = vmul.u32 %v2361, %v2352
    %v2369 = vadd.s32 %v2364, %v2366
    %vm2370 = vc.u32 %v2364, %v2366
    %v2371 = vadd.s32 %v2367, 1
    %v2372 = vsel %vm2370, %v2371, %v2367
    %v2373 = vadd.s32 %v2368, %v2372
    %v2374 = vadd.s32 %v2373, 536870912
    %v2375 = vshrl.u32 %v2374, 30
    %v2376 = vshll.u32 %v2375, 30
    %v2377 = vsub.s32 %v2373, %v2376
    %vm2378 = vcmp.lt.s32.totalorder %v2377, 0
    %v2379 = vsub.s32 0, %v2377
    %v2380 = vsel %vm2378, %v2379, %v2377
    %v2381 = vclz %v2380
    %v2382 = vsub.s32 %v2381, 2
    %vm2383 = vcmp.gt.s32.totalorder 0, %v2382
    %v2384 = vsel %vm2383, 0, %v2382
    %v2385 = vsub.s32 32, %v2384
    %v2386 = vshll.u32 %v2377, %v2384
    %v2387 = vshrl.u32 %v2369, %v2385
    %v2388 = vor.u32 %v2386, %v2387
    %v2389 = vsub.s32 4294967266, %v2384
    %v2390 = vadd.s32 %v2389, 127
    %v2391 = vshll.u32 %v2390, 23
    %v2392 = vor.u32 4788187, %v2391
    %v2393 = vand.u32 2147483647, %v2392
    %v2395 = vcvt.s32.f32 %v2388
    %v2396 = vmul.f32 %v2395, %v2393
    %v2397 = vxor.u32 %v2396, 2147483648
    %v2398 = vsel %vm2315, %v2397, %v2396
    %v2399 = vsub.s32 4, %v2375
    %v2400 = vsel %vm2315, %v2399, %v2375
    %v2401 = vsel %vm2314, %v2208, %v2398
    %v2402 = vsel %vm2314, 0, %v2400
    %v2403 = vcosq.f32.pop %v2401
    %v2404 = vsinq.f32.pop %v2401
    %vm2405 = vweird.f32 %v2208
    %v2406 = vadd.s32 %v2402, 3
    %v2407 = vand.u32 %v2406, 3
    %vm2408 = vcmp.lt.s32.totalorder %v2407, 2
    %vm2409 = vcmp.eq.s32.totalorder %v2407, 0
    %v2410 = vxor.u32 %v2404, 2147483648
    %v2411 = vsel %vm2409, %v2403, %v2410
    %vm2412 = vcmp.eq.s32.totalorder %v2407, 2
    %v2413 = vxor.u32 %v2403, 2147483648
    %v2414 = vsel %vm2412, %v2413, %v2404
    %v2415 = vsel %vm2408, %v2411, %v2414
    %v2416 = vsel %vm2405, nan, %v2415
    %v2417 = vand.u32 2147483647, %v2207
    %vm2418 = vcmp.le.f32.partialorder %v2417, 0.7853982
    %vm2419 = vcmp.lt.s32.totalorder %v2207, 0
    %v2420 = vand.u32 %v2207, 2139095040
    %v2421 = vshrl.u32 %v2420, 23
    %v2422 = vsub.s32 %v2421, 127
    %v2423 = vand.u32 2147483647, %v2207
    %v2424 = vand.u32 %v2423, 8388607
    %v2425 = vor.u32 %v2424, 8388608
    %v2426 = vsub.s32 0, %v2425
    %v2427 = vadd.s32 %v2422, 1
    %vm2428 = vcmp.gt.s32.totalorder %v2427, 0
    %v2429 = vsel %vm2428, %v2427, 0
    %v2430 = vshrl.u32 %v2429, 5
    %v2431 = vand.u32 %v2429, 31
    %v2432 = vsub.s32 32, %v2431
    %v2433 = vshrl.u32 683565275, %v2432
    %v2434 = vshll.u32 683565275, %v2431
    %v2435 = vshrl.u32 2475754826, %v2432
    %v2436 = vor.u32 %v2434, %v2435
    %v2437 = vshll.u32 2475754826, %v2431
    %v2438 = vshrl.u32 2131351028, %v2432
    %v2439 = vor.u32 %v2437, %v2438
    %v2440 = vshll.u32 2131351028, %v2431
    %v2441 = vshrl.u32 2102212464, %v2432
    %v2442 = vor.u32 %v2440, %v2441
    %v2443 = vshll.u32 2102212464, %v2431
    %v2444 = vshrl.u32 920167782, %v2432
    %v2445 = vor.u32 %v2443, %v2444
    %v2446 = vshll.u32 920167782, %v2431
    %v2447 = vshrl.u32 1326507024, %v2432
    %v2448 = vor.u32 %v2446, %v2447
    %vm2449 = vcmp.lt.s32.totalorder %v2430, 1
    %vm2450 = vcmp.lt.s32.totalorder %v2430, 2
    %vm2451 = vcmp.lt.s32.totalorder %v2430, 3
    %vm2452 = vcmp.lt.s32.totalorder %v2430, 4
    %v2453 = vsel %vm2449, %v2433, %v2436
    %v2454 = vsel %vm2452, %v2442, 2102212464
    %v2455 = vsel %vm2451, %v2439, %v2454
    %v2456 = vsel %vm2450, %v2453, %v2455
    %v2457 = vsel %vm2449, %v2436, %v2439
    %v2458 = vsel %vm2452, %v2445, 920167782
    %v2459 = vsel %vm2451, %v2442, %v2458
    %v2460 = vsel %vm2450, %v2457, %v2459
    %v2461 = vsel %vm2449, %v2439, %v2442
    %v2462 = vsel %vm2452, %v2448, 1326507024
    %v2463 = vsel %vm2451, %v2445, %v2462
    %v2464 = vsel %vm2450, %v2461, %v2463
    %v2465 = vshll.u32 %v2425, 8
    %v2466 = vmul.u32.u64.compose %v2465, %v2464
    %v2467 = vextract.low.u32 %v2466
    %v2468 = vextract.high.u32 %v2466
    %v2469 = vmul.u32.u64.compose %v2465, %v2460
    %v2470 = vextract.low.u32 %v2469
    %v2471 = vextract.high.u32 %v2469
    %v2472 = vmul.u32 %v2465, %v2456
    %v2473 = vadd.s32 %v2468, %v2470
    %vm2474 = vc.u32 %v2468, %v2470
    %v2475 = vadd.s32 %v2471, 1
    %v2476 = vsel %vm2474, %v2475, %v2471
    %v2477 = vadd.s32 %v2472, %v2476
    %v2478 = vadd.s32 %v2477, 536870912
    %v2479 = vshrl.u32 %v2478, 30
    %v2480 = vshll.u32 %v2479, 30
    %v2481 = vsub.s32 %v2477, %v2480
    %vm2482 = vcmp.lt.s32.totalorder %v2481, 0
    %v2483 = vsub.s32 0, %v2481
    %v2484 = vsel %vm2482, %v2483, %v2481
    %v2485 = vclz %v2484
    %v2486 = vsub.s32 %v2485, 2
    %vm2487 = vcmp.gt.s32.totalorder 0, %v2486
    %v2488 = vsel %vm2487, 0, %v2486
    %v2489 = vsub.s32 32, %v2488
    %v2490 = vshll.u32 %v2481, %v2488
    %v2491 = vshrl.u32 %v2473, %v2489
    %v2492 = vor.u32 %v2490, %v2491
    %v2493 = vsub.s32 4294967266, %v2488
    %v2494 = vadd.s32 %v2493, 127
    %v2495 = vshll.u32 %v2494, 23
    %v2496 = vor.u32 4788187, %v2495
    %v2497 = vand.u32 2147483647, %v2496
    %v2499 = vcvt.s32.f32 %v2492
    %v2500 = vmul.f32 %v2499, %v2497
    %v2501 = vxor.u32 %v2500, 2147483648
    %v2502 = vsel %vm2419, %v2501, %v2500
    %v2503 = vsub.s32 4, %v2479
    %v2504 = vsel %vm2419, %v2503, %v2479
    %v2505 = vsel %vm2418, %v2207, %v2502
    %v2506 = vsel %vm2418, 0, %v2504
    %v2507 = vcosq.f32.pop %v2505
    %v2508 = vsinq.f32.pop %v2505
    %vm2509 = vweird.f32 %v2207
    %v2510 = vand.u32 %v2506, 3
    %vm2511 = vcmp.lt.s32.totalorder %v2510, 2
    %vm2512 = vcmp.eq.s32.totalorder %v2510, 0
    %v2513 = vxor.u32 %v2508, 2147483648
    %v2514 = vsel %vm2512, %v2507, %v2513
    %vm2515 = vcmp.eq.s32.totalorder %v2510, 2
    %v2516 = vxor.u32 %v2507, 2147483648
    %v2517 = vsel %vm2515, %v2516, %v2508
    %v2518 = vsel %vm2511, %v2514, %v2517
    %v2519 = vsel %vm2509, nan, %v2518
    %v2520 = vand.u32 2147483647, %v2208
    %vm2521 = vcmp.le.f32.partialorder %v2520, 0.7853982
    %vm2522 = vcmp.lt.s32.totalorder %v2208, 0
    %v2523 = vand.u32 %v2208, 2139095040
    %v2524 = vshrl.u32 %v2523, 23
    %v2525 = vsub.s32 %v2524, 127
    %v2526 = vand.u32 2147483647, %v2208
    %v2527 = vand.u32 %v2526, 8388607
    %v2528 = vor.u32 %v2527, 8388608
    %v2529 = vsub.s32 0, %v2528
    %v2530 = vadd.s32 %v2525, 1
    %vm2531 = vcmp.gt.s32.totalorder %v2530, 0
    %v2532 = vsel %vm2531, %v2530, 0
    %v2533 = vshrl.u32 %v2532, 5
    %v2534 = vand.u32 %v2532, 31
    %v2535 = vsub.s32 32, %v2534
    %v2536 = vshrl.u32 683565275, %v2535
    %v2537 = vshll.u32 683565275, %v2534
    %v2538 = vshrl.u32 2475754826, %v2535
    %v2539 = vor.u32 %v2537, %v2538
    %v2540 = vshll.u32 2475754826, %v2534
    %v2541 = vshrl.u32 2131351028, %v2535
    %v2542 = vor.u32 %v2540, %v2541
    %v2543 = vshll.u32 2131351028, %v2534
    %v2544 = vshrl.u32 2102212464, %v2535
    %v2545 = vor.u32 %v2543, %v2544
    %v2546 = vshll.u32 2102212464, %v2534
    %v2547 = vshrl.u32 920167782, %v2535
    %v2548 = vor.u32 %v2546, %v2547
    %v2549 = vshll.u32 920167782, %v2534
    %v2550 = vshrl.u32 1326507024, %v2535
    %v2551 = vor.u32 %v2549, %v2550
    %vm2552 = vcmp.lt.s32.totalorder %v2533, 1
    %vm2553 = vcmp.lt.s32.totalorder %v2533, 2
    %vm2554 = vcmp.lt.s32.totalorder %v2533, 3
    %vm2555 = vcmp.lt.s32.totalorder %v2533, 4
    %v2556 = vsel %vm2552, %v2536, %v2539
    %v2557 = vsel %vm2555, %v2545, 2102212464
    %v2558 = vsel %vm2554, %v2542, %v2557
    %v2559 = vsel %vm2553, %v2556, %v2558
    %v2560 = vsel %vm2552, %v2539, %v2542
    %v2561 = vsel %vm2555, %v2548, 920167782
    %v2562 = vsel %vm2554, %v2545, %v2561
    %v2563 = vsel %vm2553, %v2560, %v2562
    %v2564 = vsel %vm2552, %v2542, %v2545
    %v2565 = vsel %vm2555, %v2551, 1326507024
    %v2566 = vsel %vm2554, %v2548, %v2565
    %v2567 = vsel %vm2553, %v2564, %v2566
    %v2568 = vshll.u32 %v2528, 8
    %v2569 = vmul.u32.u64.compose %v2568, %v2567
    %v2570 = vextract.low.u32 %v2569
    %v2571 = vextract.high.u32 %v2569
    %v2572 = vmul.u32.u64.compose %v2568, %v2563
    %v2573 = vextract.low.u32 %v2572
    %v2574 = vextract.high.u32 %v2572
    %v2575 = vmul.u32 %v2568, %v2559
    %v2576 = vadd.s32 %v2571, %v2573
    %vm2577 = vc.u32 %v2571, %v2573
    %v2578 = vadd.s32 %v2574, 1
    %v2579 = vsel %vm2577, %v2578, %v2574
    %v2580 = vadd.s32 %v2575, %v2579
    %v2581 = vadd.s32 %v2580, 536870912
    %v2582 = vshrl.u32 %v2581, 30
    %v2583 = vshll.u32 %v2582, 30
    %v2584 = vsub.s32 %v2580, %v2583
    %vm2585 = vcmp.lt.s32.totalorder %v2584, 0
    %v2586 = vsub.s32 0, %v2584
    %v2587 = vsel %vm2585, %v2586, %v2584
    %v2588 = vclz %v2587
    %v2589 = vsub.s32 %v2588, 2
    %vm2590 = vcmp.gt.s32.totalorder 0, %v2589
    %v2591 = vsel %vm2590, 0, %v2589
    %v2592 = vsub.s32 32, %v2591
    %v2593 = vshll.u32 %v2584, %v2591
    %v2594 = vshrl.u32 %v2576, %v2592
    %v2595 = vor.u32 %v2593, %v2594
    %v2596 = vsub.s32 4294967266, %v2591
    %v2597 = vadd.s32 %v2596, 127
    %v2598 = vshll.u32 %v2597, 23
    %v2599 = vor.u32 4788187, %v2598
    %v2600 = vand.u32 2147483647, %v2599
    %v2602 = vcvt.s32.f32 %v2595
    %v2603 = vmul.f32 %v2602, %v2600
    %v2604 = vxor.u32 %v2603, 2147483648
    %v2605 = vsel %vm2522, %v2604, %v2603
    %v2606 = vsub.s32 4, %v2582
    %v2607 = vsel %vm2522, %v2606, %v2582
    %v2608 = vsel %vm2521, %v2208, %v2605
    %v2609 = vsel %vm2521, 0, %v2607
    %v2610 = vcosq.f32.pop %v2608
    %v2611 = vsinq.f32.pop %v2608
    %vm2612 = vweird.f32 %v2208
    %v2613 = vand.u32 %v2609, 3
    %vm2614 = vcmp.lt.s32.totalorder %v2613, 2
    %vm2615 = vcmp.eq.s32.totalorder %v2613, 0
    %v2616 = vxor.u32 %v2611, 2147483648
    %v2617 = vsel %vm2615, %v2610, %v2616
    %vm2618 = vcmp.eq.s32.totalorder %v2613, 2
    %v2619 = vxor.u32 %v2610, 2147483648
    %v2620 = vsel %vm2618, %v2619, %v2611
    %v2621 = vsel %vm2614, %v2617, %v2620
    %v2622 = vsel %vm2612, nan, %v2621
    %2625 = vrot.lane.b32.xlu0 %v2519, 32
    %v2626 = vpop.permute.xlu0 %2625
    %2627 = vrot.lane.b32.xlu0 %v2622, 32
    %v2628 = vpop.permute.xlu0 %2627
    %v2631 = vsel %vm316, %v2312, %v2626
    %v2632 = vsel %vm316, %v2416, %v2628
    %2633 = vset.pattern.permute.xlu0 15
    %2634 = vperm.xlu0 %2633, %v402
    %v2635 = vpop.permute.xlu0 %2634
    %2637 = vset.pattern.permute.xlu0 15
    %2638 = vperm.xlu0 %2637, %v403
    %v2639 = vpop.permute.xlu0 %2638
    %v2641 = vmul.f32 %v2635, %v58
    %v2642 = vmul.f32 %v2639, %v58
    %v2643 = vand.u32 2147483647, %v2641
    %vm2644 = vcmp.le.f32.partialorder %v2643, 0.7853982
    %vm2645 = vcmp.lt.s32.totalorder %v2641, 0
    %v2646 = vand.u32 %v2641, 2139095040
    %v2647 = vshrl.u32 %v2646, 23
    %v2648 = vsub.s32 %v2647, 127
    %v2649 = vand.u32 2147483647, %v2641
    %v2650 = vand.u32 %v2649, 8388607
    %v2651 = vor.u32 %v2650, 8388608
    %v2652 = vsub.s32 0, %v2651
    %v2653 = vadd.s32 %v2648, 1
    %vm2654 = vcmp.gt.s32.totalorder %v2653, 0
    %v2655 = vsel %vm2654, %v2653, 0
    %v2656 = vshrl.u32 %v2655, 5
    %v2657 = vand.u32 %v2655, 31
    %v2658 = vsub.s32 32, %v2657
    %v2659 = vshrl.u32 683565275, %v2658
    %v2660 = vshll.u32 683565275, %v2657
    %v2661 = vshrl.u32 2475754826, %v2658
    %v2662 = vor.u32 %v2660, %v2661
    %v2663 = vshll.u32 2475754826, %v2657
    %v2664 = vshrl.u32 2131351028, %v2658
    %v2665 = vor.u32 %v2663, %v2664
    %v2666 = vshll.u32 2131351028, %v2657
    %v2667 = vshrl.u32 2102212464, %v2658
    %v2668 = vor.u32 %v2666, %v2667
    %v2669 = vshll.u32 2102212464, %v2657
    %v2670 = vshrl.u32 920167782, %v2658
    %v2671 = vor.u32 %v2669, %v2670
    %v2672 = vshll.u32 920167782, %v2657
    %v2673 = vshrl.u32 1326507024, %v2658
    %v2674 = vor.u32 %v2672, %v2673
    %vm2675 = vcmp.lt.s32.totalorder %v2656, 1
    %vm2676 = vcmp.lt.s32.totalorder %v2656, 2
    %vm2677 = vcmp.lt.s32.totalorder %v2656, 3
    %vm2678 = vcmp.lt.s32.totalorder %v2656, 4
    %v2679 = vsel %vm2675, %v2659, %v2662
    %v2680 = vsel %vm2678, %v2668, 2102212464
    %v2681 = vsel %vm2677, %v2665, %v2680
    %v2682 = vsel %vm2676, %v2679, %v2681
    %v2683 = vsel %vm2675, %v2662, %v2665
    %v2684 = vsel %vm2678, %v2671, 920167782
    %v2685 = vsel %vm2677, %v2668, %v2684
    %v2686 = vsel %vm2676, %v2683, %v2685
    %v2687 = vsel %vm2675, %v2665, %v2668
    %v2688 = vsel %vm2678, %v2674, 1326507024
    %v2689 = vsel %vm2677, %v2671, %v2688
    %v2690 = vsel %vm2676, %v2687, %v2689
    %v2691 = vshll.u32 %v2651, 8
    %v2692 = vmul.u32.u64.compose %v2691, %v2690
    %v2693 = vextract.low.u32 %v2692
    %v2694 = vextract.high.u32 %v2692
    %v2695 = vmul.u32.u64.compose %v2691, %v2686
    %v2696 = vextract.low.u32 %v2695
    %v2697 = vextract.high.u32 %v2695
    %v2698 = vmul.u32 %v2691, %v2682
    %v2699 = vadd.s32 %v2694, %v2696
    %vm2700 = vc.u32 %v2694, %v2696
    %v2701 = vadd.s32 %v2697, 1
    %v2702 = vsel %vm2700, %v2701, %v2697
    %v2703 = vadd.s32 %v2698, %v2702
    %v2704 = vadd.s32 %v2703, 536870912
    %v2705 = vshrl.u32 %v2704, 30
    %v2706 = vshll.u32 %v2705, 30
    %v2707 = vsub.s32 %v2703, %v2706
    %vm2708 = vcmp.lt.s32.totalorder %v2707, 0
    %v2709 = vsub.s32 0, %v2707
    %v2710 = vsel %vm2708, %v2709, %v2707
    %v2711 = vclz %v2710
    %v2712 = vsub.s32 %v2711, 2
    %vm2713 = vcmp.gt.s32.totalorder 0, %v2712
    %v2714 = vsel %vm2713, 0, %v2712
    %v2715 = vsub.s32 32, %v2714
    %v2716 = vshll.u32 %v2707, %v2714
    %v2717 = vshrl.u32 %v2699, %v2715
    %v2718 = vor.u32 %v2716, %v2717
    %v2719 = vsub.s32 4294967266, %v2714
    %v2720 = vadd.s32 %v2719, 127
    %v2721 = vshll.u32 %v2720, 23
    %v2722 = vor.u32 4788187, %v2721
    %v2723 = vand.u32 2147483647, %v2722
    %v2725 = vcvt.s32.f32 %v2718
    %v2726 = vmul.f32 %v2725, %v2723
    %v2727 = vxor.u32 %v2726, 2147483648
    %v2728 = vsel %vm2645, %v2727, %v2726
    %v2729 = vsub.s32 4, %v2705
    %v2730 = vsel %vm2645, %v2729, %v2705
    %v2731 = vsel %vm2644, %v2641, %v2728
    %v2732 = vsel %vm2644, 0, %v2730
    %v2733 = vcosq.f32.pop %v2731
    %v2734 = vsinq.f32.pop %v2731
    %vm2735 = vweird.f32 %v2641
    %v2736 = vadd.s32 %v2732, 3
    %v2737 = vand.u32 %v2736, 3
    %vm2738 = vcmp.lt.s32.totalorder %v2737, 2
    %vm2739 = vcmp.eq.s32.totalorder %v2737, 0
    %v2740 = vxor.u32 %v2734, 2147483648
    %v2741 = vsel %vm2739, %v2733, %v2740
    %vm2742 = vcmp.eq.s32.totalorder %v2737, 2
    %v2743 = vxor.u32 %v2733, 2147483648
    %v2744 = vsel %vm2742, %v2743, %v2734
    %v2745 = vsel %vm2738, %v2741, %v2744
    %v2746 = vsel %vm2735, nan, %v2745
    %v2747 = vand.u32 2147483647, %v2642
    %vm2748 = vcmp.le.f32.partialorder %v2747, 0.7853982
    %vm2749 = vcmp.lt.s32.totalorder %v2642, 0
    %v2750 = vand.u32 %v2642, 2139095040
    %v2751 = vshrl.u32 %v2750, 23
    %v2752 = vsub.s32 %v2751, 127
    %v2753 = vand.u32 2147483647, %v2642
    %v2754 = vand.u32 %v2753, 8388607
    %v2755 = vor.u32 %v2754, 8388608
    %v2756 = vsub.s32 0, %v2755
    %v2757 = vadd.s32 %v2752, 1
    %vm2758 = vcmp.gt.s32.totalorder %v2757, 0
    %v2759 = vsel %vm2758, %v2757, 0
    %v2760 = vshrl.u32 %v2759, 5
    %v2761 = vand.u32 %v2759, 31
    %v2762 = vsub.s32 32, %v2761
    %v2763 = vshrl.u32 683565275, %v2762
    %v2764 = vshll.u32 683565275, %v2761
    %v2765 = vshrl.u32 2475754826, %v2762
    %v2766 = vor.u32 %v2764, %v2765
    %v2767 = vshll.u32 2475754826, %v2761
    %v2768 = vshrl.u32 2131351028, %v2762
    %v2769 = vor.u32 %v2767, %v2768
    %v2770 = vshll.u32 2131351028, %v2761
    %v2771 = vshrl.u32 2102212464, %v2762
    %v2772 = vor.u32 %v2770, %v2771
    %v2773 = vshll.u32 2102212464, %v2761
    %v2774 = vshrl.u32 920167782, %v2762
    %v2775 = vor.u32 %v2773, %v2774
    %v2776 = vshll.u32 920167782, %v2761
    %v2777 = vshrl.u32 1326507024, %v2762
    %v2778 = vor.u32 %v2776, %v2777
    %vm2779 = vcmp.lt.s32.totalorder %v2760, 1
    %vm2780 = vcmp.lt.s32.totalorder %v2760, 2
    %vm2781 = vcmp.lt.s32.totalorder %v2760, 3
    %vm2782 = vcmp.lt.s32.totalorder %v2760, 4
    %v2783 = vsel %vm2779, %v2763, %v2766
    %v2784 = vsel %vm2782, %v2772, 2102212464
    %v2785 = vsel %vm2781, %v2769, %v2784
    %v2786 = vsel %vm2780, %v2783, %v2785
    %v2787 = vsel %vm2779, %v2766, %v2769
    %v2788 = vsel %vm2782, %v2775, 920167782
    %v2789 = vsel %vm2781, %v2772, %v2788
    %v2790 = vsel %vm2780, %v2787, %v2789
    %v2791 = vsel %vm2779, %v2769, %v2772
    %v2792 = vsel %vm2782, %v2778, 1326507024
    %v2793 = vsel %vm2781, %v2775, %v2792
    %v2794 = vsel %vm2780, %v2791, %v2793
    %v2795 = vshll.u32 %v2755, 8
    %v2796 = vmul.u32.u64.compose %v2795, %v2794
    %v2797 = vextract.low.u32 %v2796
    %v2798 = vextract.high.u32 %v2796
    %v2799 = vmul.u32.u64.compose %v2795, %v2790
    %v2800 = vextract.low.u32 %v2799
    %v2801 = vextract.high.u32 %v2799
    %v2802 = vmul.u32 %v2795, %v2786
    %v2803 = vadd.s32 %v2798, %v2800
    %vm2804 = vc.u32 %v2798, %v2800
    %v2805 = vadd.s32 %v2801, 1
    %v2806 = vsel %vm2804, %v2805, %v2801
    %v2807 = vadd.s32 %v2802, %v2806
    %v2808 = vadd.s32 %v2807, 536870912
    %v2809 = vshrl.u32 %v2808, 30
    %v2810 = vshll.u32 %v2809, 30
    %v2811 = vsub.s32 %v2807, %v2810
    %vm2812 = vcmp.lt.s32.totalorder %v2811, 0
    %v2813 = vsub.s32 0, %v2811
    %v2814 = vsel %vm2812, %v2813, %v2811
    %v2815 = vclz %v2814
    %v2816 = vsub.s32 %v2815, 2
    %vm2817 = vcmp.gt.s32.totalorder 0, %v2816
    %v2818 = vsel %vm2817, 0, %v2816
    %v2819 = vsub.s32 32, %v2818
    %v2820 = vshll.u32 %v2811, %v2818
    %v2821 = vshrl.u32 %v2803, %v2819
    %v2822 = vor.u32 %v2820, %v2821
    %v2823 = vsub.s32 4294967266, %v2818
    %v2824 = vadd.s32 %v2823, 127
    %v2825 = vshll.u32 %v2824, 23
    %v2826 = vor.u32 4788187, %v2825
    %v2827 = vand.u32 2147483647, %v2826
    %v2829 = vcvt.s32.f32 %v2822
    %v2830 = vmul.f32 %v2829, %v2827
    %v2831 = vxor.u32 %v2830, 2147483648
    %v2832 = vsel %vm2749, %v2831, %v2830
    %v2833 = vsub.s32 4, %v2809
    %v2834 = vsel %vm2749, %v2833, %v2809
    %v2835 = vsel %vm2748, %v2642, %v2832
    %v2836 = vsel %vm2748, 0, %v2834
    %v2837 = vcosq.f32.pop %v2835
    %v2838 = vsinq.f32.pop %v2835
    %vm2839 = vweird.f32 %v2642
    %v2840 = vadd.s32 %v2836, 3
    %v2841 = vand.u32 %v2840, 3
    %vm2842 = vcmp.lt.s32.totalorder %v2841, 2
    %vm2843 = vcmp.eq.s32.totalorder %v2841, 0
    %v2844 = vxor.u32 %v2838, 2147483648
    %v2845 = vsel %vm2843, %v2837, %v2844
    %vm2846 = vcmp.eq.s32.totalorder %v2841, 2
    %v2847 = vxor.u32 %v2837, 2147483648
    %v2848 = vsel %vm2846, %v2847, %v2838
    %v2849 = vsel %vm2842, %v2845, %v2848
    %v2850 = vsel %vm2839, nan, %v2849
    %v2851 = vand.u32 2147483647, %v2641
    %vm2852 = vcmp.le.f32.partialorder %v2851, 0.7853982
    %vm2853 = vcmp.lt.s32.totalorder %v2641, 0
    %v2854 = vand.u32 %v2641, 2139095040
    %v2855 = vshrl.u32 %v2854, 23
    %v2856 = vsub.s32 %v2855, 127
    %v2857 = vand.u32 2147483647, %v2641
    %v2858 = vand.u32 %v2857, 8388607
    %v2859 = vor.u32 %v2858, 8388608
    %v2860 = vsub.s32 0, %v2859
    %v2861 = vadd.s32 %v2856, 1
    %vm2862 = vcmp.gt.s32.totalorder %v2861, 0
    %v2863 = vsel %vm2862, %v2861, 0
    %v2864 = vshrl.u32 %v2863, 5
    %v2865 = vand.u32 %v2863, 31
    %v2866 = vsub.s32 32, %v2865
    %v2867 = vshrl.u32 683565275, %v2866
    %v2868 = vshll.u32 683565275, %v2865
    %v2869 = vshrl.u32 2475754826, %v2866
    %v2870 = vor.u32 %v2868, %v2869
    %v2871 = vshll.u32 2475754826, %v2865
    %v2872 = vshrl.u32 2131351028, %v2866
    %v2873 = vor.u32 %v2871, %v2872
    %v2874 = vshll.u32 2131351028, %v2865
    %v2875 = vshrl.u32 2102212464, %v2866
    %v2876 = vor.u32 %v2874, %v2875
    %v2877 = vshll.u32 2102212464, %v2865
    %v2878 = vshrl.u32 920167782, %v2866
    %v2879 = vor.u32 %v2877, %v2878
    %v2880 = vshll.u32 920167782, %v2865
    %v2881 = vshrl.u32 1326507024, %v2866
    %v2882 = vor.u32 %v2880, %v2881
    %vm2883 = vcmp.lt.s32.totalorder %v2864, 1
    %vm2884 = vcmp.lt.s32.totalorder %v2864, 2
    %vm2885 = vcmp.lt.s32.totalorder %v2864, 3
    %vm2886 = vcmp.lt.s32.totalorder %v2864, 4
    %v2887 = vsel %vm2883, %v2867, %v2870
    %v2888 = vsel %vm2886, %v2876, 2102212464
    %v2889 = vsel %vm2885, %v2873, %v2888
    %v2890 = vsel %vm2884, %v2887, %v2889
    %v2891 = vsel %vm2883, %v2870, %v2873
    %v2892 = vsel %vm2886, %v2879, 920167782
    %v2893 = vsel %vm2885, %v2876, %v2892
    %v2894 = vsel %vm2884, %v2891, %v2893
    %v2895 = vsel %vm2883, %v2873, %v2876
    %v2896 = vsel %vm2886, %v2882, 1326507024
    %v2897 = vsel %vm2885, %v2879, %v2896
    %v2898 = vsel %vm2884, %v2895, %v2897
    %v2899 = vshll.u32 %v2859, 8
    %v2900 = vmul.u32.u64.compose %v2899, %v2898
    %v2901 = vextract.low.u32 %v2900
    %v2902 = vextract.high.u32 %v2900
    %v2903 = vmul.u32.u64.compose %v2899, %v2894
    %v2904 = vextract.low.u32 %v2903
    %v2905 = vextract.high.u32 %v2903
    %v2906 = vmul.u32 %v2899, %v2890
    %v2907 = vadd.s32 %v2902, %v2904
    %vm2908 = vc.u32 %v2902, %v2904
    %v2909 = vadd.s32 %v2905, 1
    %v2910 = vsel %vm2908, %v2909, %v2905
    %v2911 = vadd.s32 %v2906, %v2910
    %v2912 = vadd.s32 %v2911, 536870912
    %v2913 = vshrl.u32 %v2912, 30
    %v2914 = vshll.u32 %v2913, 30
    %v2915 = vsub.s32 %v2911, %v2914
    %vm2916 = vcmp.lt.s32.totalorder %v2915, 0
    %v2917 = vsub.s32 0, %v2915
    %v2918 = vsel %vm2916, %v2917, %v2915
    %v2919 = vclz %v2918
    %v2920 = vsub.s32 %v2919, 2
    %vm2921 = vcmp.gt.s32.totalorder 0, %v2920
    %v2922 = vsel %vm2921, 0, %v2920
    %v2923 = vsub.s32 32, %v2922
    %v2924 = vshll.u32 %v2915, %v2922
    %v2925 = vshrl.u32 %v2907, %v2923
    %v2926 = vor.u32 %v2924, %v2925
    %v2927 = vsub.s32 4294967266, %v2922
    %v2928 = vadd.s32 %v2927, 127
    %v2929 = vshll.u32 %v2928, 23
    %v2930 = vor.u32 4788187, %v2929
    %v2931 = vand.u32 2147483647, %v2930
    %v2933 = vcvt.s32.f32 %v2926
    %v2934 = vmul.f32 %v2933, %v2931
    %v2935 = vxor.u32 %v2934, 2147483648
    %v2936 = vsel %vm2853, %v2935, %v2934
    %v2937 = vsub.s32 4, %v2913
    %v2938 = vsel %vm2853, %v2937, %v2913
    %v2939 = vsel %vm2852, %v2641, %v2936
    %v2940 = vsel %vm2852, 0, %v2938
    %v2941 = vcosq.f32.pop %v2939
    %v2942 = vsinq.f32.pop %v2939
    %vm2943 = vweird.f32 %v2641
    %v2944 = vand.u32 %v2940, 3
    %vm2945 = vcmp.lt.s32.totalorder %v2944, 2
    %vm2946 = vcmp.eq.s32.totalorder %v2944, 0
    %v2947 = vxor.u32 %v2942, 2147483648
    %v2948 = vsel %vm2946, %v2941, %v2947
    %vm2949 = vcmp.eq.s32.totalorder %v2944, 2
    %v2950 = vxor.u32 %v2941, 2147483648
    %v2951 = vsel %vm2949, %v2950, %v2942
    %v2952 = vsel %vm2945, %v2948, %v2951
    %v2953 = vsel %vm2943, nan, %v2952
    %v2954 = vand.u32 2147483647, %v2642
    %vm2955 = vcmp.le.f32.partialorder %v2954, 0.7853982
    %vm2956 = vcmp.lt.s32.totalorder %v2642, 0
    %v2957 = vand.u32 %v2642, 2139095040
    %v2958 = vshrl.u32 %v2957, 23
    %v2959 = vsub.s32 %v2958, 127
    %v2960 = vand.u32 2147483647, %v2642
    %v2961 = vand.u32 %v2960, 8388607
    %v2962 = vor.u32 %v2961, 8388608
    %v2963 = vsub.s32 0, %v2962
    %v2964 = vadd.s32 %v2959, 1
    %vm2965 = vcmp.gt.s32.totalorder %v2964, 0
    %v2966 = vsel %vm2965, %v2964, 0
    %v2967 = vshrl.u32 %v2966, 5
    %v2968 = vand.u32 %v2966, 31
    %v2969 = vsub.s32 32, %v2968
    %v2970 = vshrl.u32 683565275, %v2969
    %v2971 = vshll.u32 683565275, %v2968
    %v2972 = vshrl.u32 2475754826, %v2969
    %v2973 = vor.u32 %v2971, %v2972
    %v2974 = vshll.u32 2475754826, %v2968
    %v2975 = vshrl.u32 2131351028, %v2969
    %v2976 = vor.u32 %v2974, %v2975
    %v2977 = vshll.u32 2131351028, %v2968
    %v2978 = vshrl.u32 2102212464, %v2969
    %v2979 = vor.u32 %v2977, %v2978
    %v2980 = vshll.u32 2102212464, %v2968
    %v2981 = vshrl.u32 920167782, %v2969
    %v2982 = vor.u32 %v2980, %v2981
    %v2983 = vshll.u32 920167782, %v2968
    %v2984 = vshrl.u32 1326507024, %v2969
    %v2985 = vor.u32 %v2983, %v2984
    %vm2986 = vcmp.lt.s32.totalorder %v2967, 1
    %vm2987 = vcmp.lt.s32.totalorder %v2967, 2
    %vm2988 = vcmp.lt.s32.totalorder %v2967, 3
    %vm2989 = vcmp.lt.s32.totalorder %v2967, 4
    %v2990 = vsel %vm2986, %v2970, %v2973
    %v2991 = vsel %vm2989, %v2979, 2102212464
    %v2992 = vsel %vm2988, %v2976, %v2991
    %v2993 = vsel %vm2987, %v2990, %v2992
    %v2994 = vsel %vm2986, %v2973, %v2976
    %v2995 = vsel %vm2989, %v2982, 920167782
    %v2996 = vsel %vm2988, %v2979, %v2995
    %v2997 = vsel %vm2987, %v2994, %v2996
    %v2998 = vsel %vm2986, %v2976, %v2979
    %v2999 = vsel %vm2989, %v2985, 1326507024
    %v3000 = vsel %vm2988, %v2982, %v2999
    %v3001 = vsel %vm2987, %v2998, %v3000
    %v3002 = vshll.u32 %v2962, 8
    %v3003 = vmul.u32.u64.compose %v3002, %v3001
    %v3004 = vextract.low.u32 %v3003
    %v3005 = vextract.high.u32 %v3003
    %v3006 = vmul.u32.u64.compose %v3002, %v2997
    %v3007 = vextract.low.u32 %v3006
    %v3008 = vextract.high.u32 %v3006
    %v3009 = vmul.u32 %v3002, %v2993
    %v3010 = vadd.s32 %v3005, %v3007
    %vm3011 = vc.u32 %v3005, %v3007
    %v3012 = vadd.s32 %v3008, 1
    %v3013 = vsel %vm3011, %v3012, %v3008
    %v3014 = vadd.s32 %v3009, %v3013
    %v3015 = vadd.s32 %v3014, 536870912
    %v3016 = vshrl.u32 %v3015, 30
    %v3017 = vshll.u32 %v3016, 30
    %v3018 = vsub.s32 %v3014, %v3017
    %vm3019 = vcmp.lt.s32.totalorder %v3018, 0
    %v3020 = vsub.s32 0, %v3018
    %v3021 = vsel %vm3019, %v3020, %v3018
    %v3022 = vclz %v3021
    %v3023 = vsub.s32 %v3022, 2
    %vm3024 = vcmp.gt.s32.totalorder 0, %v3023
    %v3025 = vsel %vm3024, 0, %v3023
    %v3026 = vsub.s32 32, %v3025
    %v3027 = vshll.u32 %v3018, %v3025
    %v3028 = vshrl.u32 %v3010, %v3026
    %v3029 = vor.u32 %v3027, %v3028
    %v3030 = vsub.s32 4294967266, %v3025
    %v3031 = vadd.s32 %v3030, 127
    %v3032 = vshll.u32 %v3031, 23
    %v3033 = vor.u32 4788187, %v3032
    %v3034 = vand.u32 2147483647, %v3033
    %v3036 = vcvt.s32.f32 %v3029
    %v3037 = vmul.f32 %v3036, %v3034
    %v3038 = vxor.u32 %v3037, 2147483648
    %v3039 = vsel %vm2956, %v3038, %v3037
    %v3040 = vsub.s32 4, %v3016
    %v3041 = vsel %vm2956, %v3040, %v3016
    %v3042 = vsel %vm2955, %v2642, %v3039
    %v3043 = vsel %vm2955, 0, %v3041
    %v3044 = vcosq.f32.pop %v3042
    %v3045 = vsinq.f32.pop %v3042
    %vm3046 = vweird.f32 %v2642
    %v3047 = vand.u32 %v3043, 3
    %vm3048 = vcmp.lt.s32.totalorder %v3047, 2
    %vm3049 = vcmp.eq.s32.totalorder %v3047, 0
    %v3050 = vxor.u32 %v3045, 2147483648
    %v3051 = vsel %vm3049, %v3044, %v3050
    %vm3052 = vcmp.eq.s32.totalorder %v3047, 2
    %v3053 = vxor.u32 %v3044, 2147483648
    %v3054 = vsel %vm3052, %v3053, %v3045
    %v3055 = vsel %vm3048, %v3051, %v3054
    %v3056 = vsel %vm3046, nan, %v3055
    %3059 = vrot.lane.b32.xlu0 %v2953, 32
    %v3060 = vpop.permute.xlu0 %3059
    %3061 = vrot.lane.b32.xlu0 %v3056, 32
    %v3062 = vpop.permute.xlu0 %3061
    %v3065 = vsel %vm316, %v2746, %v3060
    %v3066 = vsel %vm316, %v2850, %v3062
    %3067 = vset.pattern.permute.xlu0 16
    %3068 = vperm.xlu0 %3067, %v402
    %v3069 = vpop.permute.xlu0 %3068
    %3071 = vset.pattern.permute.xlu0 16
    %3072 = vperm.xlu0 %3071, %v403
    %v3073 = vpop.permute.xlu0 %3072
    %v3075 = vmul.f32 %v3069, %v58
    %v3076 = vmul.f32 %v3073, %v58
    %v3077 = vand.u32 2147483647, %v3075
    %vm3078 = vcmp.le.f32.partialorder %v3077, 0.7853982
    %vm3079 = vcmp.lt.s32.totalorder %v3075, 0
    %v3080 = vand.u32 %v3075, 2139095040
    %v3081 = vshrl.u32 %v3080, 23
    %v3082 = vsub.s32 %v3081, 127
    %v3083 = vand.u32 2147483647, %v3075
    %v3084 = vand.u32 %v3083, 8388607
    %v3085 = vor.u32 %v3084, 8388608
    %v3086 = vsub.s32 0, %v3085
    %v3087 = vadd.s32 %v3082, 1
    %vm3088 = vcmp.gt.s32.totalorder %v3087, 0
    %v3089 = vsel %vm3088, %v3087, 0
    %v3090 = vshrl.u32 %v3089, 5
    %v3091 = vand.u32 %v3089, 31
    %v3092 = vsub.s32 32, %v3091
    %v3093 = vshrl.u32 683565275, %v3092
    %v3094 = vshll.u32 683565275, %v3091
    %v3095 = vshrl.u32 2475754826, %v3092
    %v3096 = vor.u32 %v3094, %v3095
    %v3097 = vshll.u32 2475754826, %v3091
    %v3098 = vshrl.u32 2131351028, %v3092
    %v3099 = vor.u32 %v3097, %v3098
    %v3100 = vshll.u32 2131351028, %v3091
    %v3101 = vshrl.u32 2102212464, %v3092
    %v3102 = vor.u32 %v3100, %v3101
    %v3103 = vshll.u32 2102212464, %v3091
    %v3104 = vshrl.u32 920167782, %v3092
    %v3105 = vor.u32 %v3103, %v3104
    %v3106 = vshll.u32 920167782, %v3091
    %v3107 = vshrl.u32 1326507024, %v3092
    %v3108 = vor.u32 %v3106, %v3107
    %vm3109 = vcmp.lt.s32.totalorder %v3090, 1
    %vm3110 = vcmp.lt.s32.totalorder %v3090, 2
    %vm3111 = vcmp.lt.s32.totalorder %v3090, 3
    %vm3112 = vcmp.lt.s32.totalorder %v3090, 4
    %v3113 = vsel %vm3109, %v3093, %v3096
    %v3114 = vsel %vm3112, %v3102, 2102212464
    %v3115 = vsel %vm3111, %v3099, %v3114
    %v3116 = vsel %vm3110, %v3113, %v3115
    %v3117 = vsel %vm3109, %v3096, %v3099
    %v3118 = vsel %vm3112, %v3105, 920167782
    %v3119 = vsel %vm3111, %v3102, %v3118
    %v3120 = vsel %vm3110, %v3117, %v3119
    %v3121 = vsel %vm3109, %v3099, %v3102
    %v3122 = vsel %vm3112, %v3108, 1326507024
    %v3123 = vsel %vm3111, %v3105, %v3122
    %v3124 = vsel %vm3110, %v3121, %v3123
    %v3125 = vshll.u32 %v3085, 8
    %v3126 = vmul.u32.u64.compose %v3125, %v3124
    %v3127 = vextract.low.u32 %v3126
    %v3128 = vextract.high.u32 %v3126
    %v3129 = vmul.u32.u64.compose %v3125, %v3120
    %v3130 = vextract.low.u32 %v3129
    %v3131 = vextract.high.u32 %v3129
    %v3132 = vmul.u32 %v3125, %v3116
    %v3133 = vadd.s32 %v3128, %v3130
    %vm3134 = vc.u32 %v3128, %v3130
    %v3135 = vadd.s32 %v3131, 1
    %v3136 = vsel %vm3134, %v3135, %v3131
    %v3137 = vadd.s32 %v3132, %v3136
    %v3138 = vadd.s32 %v3137, 536870912
    %v3139 = vshrl.u32 %v3138, 30
    %v3140 = vshll.u32 %v3139, 30
    %v3141 = vsub.s32 %v3137, %v3140
    %vm3142 = vcmp.lt.s32.totalorder %v3141, 0
    %v3143 = vsub.s32 0, %v3141
    %v3144 = vsel %vm3142, %v3143, %v3141
    %v3145 = vclz %v3144
    %v3146 = vsub.s32 %v3145, 2
    %vm3147 = vcmp.gt.s32.totalorder 0, %v3146
    %v3148 = vsel %vm3147, 0, %v3146
    %v3149 = vsub.s32 32, %v3148
    %v3150 = vshll.u32 %v3141, %v3148
    %v3151 = vshrl.u32 %v3133, %v3149
    %v3152 = vor.u32 %v3150, %v3151
    %v3153 = vsub.s32 4294967266, %v3148
    %v3154 = vadd.s32 %v3153, 127
    %v3155 = vshll.u32 %v3154, 23
    %v3156 = vor.u32 4788187, %v3155
    %v3157 = vand.u32 2147483647, %v3156
    %v3159 = vcvt.s32.f32 %v3152
    %v3160 = vmul.f32 %v3159, %v3157
    %v3161 = vxor.u32 %v3160, 2147483648
    %v3162 = vsel %vm3079, %v3161, %v3160
    %v3163 = vsub.s32 4, %v3139
    %v3164 = vsel %vm3079, %v3163, %v3139
    %v3165 = vsel %vm3078, %v3075, %v3162
    %v3166 = vsel %vm3078, 0, %v3164
    %v3167 = vcosq.f32.pop %v3165
    %v3168 = vsinq.f32.pop %v3165
    %vm3169 = vweird.f32 %v3075
    %v3170 = vadd.s32 %v3166, 3
    %v3171 = vand.u32 %v3170, 3
    %vm3172 = vcmp.lt.s32.totalorder %v3171, 2
    %vm3173 = vcmp.eq.s32.totalorder %v3171, 0
    %v3174 = vxor.u32 %v3168, 2147483648
    %v3175 = vsel %vm3173, %v3167, %v3174
    %vm3176 = vcmp.eq.s32.totalorder %v3171, 2
    %v3177 = vxor.u32 %v3167, 2147483648
    %v3178 = vsel %vm3176, %v3177, %v3168
    %v3179 = vsel %vm3172, %v3175, %v3178
    %v3180 = vsel %vm3169, nan, %v3179
    %v3181 = vand.u32 2147483647, %v3076
    %vm3182 = vcmp.le.f32.partialorder %v3181, 0.7853982
    %vm3183 = vcmp.lt.s32.totalorder %v3076, 0
    %v3184 = vand.u32 %v3076, 2139095040
    %v3185 = vshrl.u32 %v3184, 23
    %v3186 = vsub.s32 %v3185, 127
    %v3187 = vand.u32 2147483647, %v3076
    %v3188 = vand.u32 %v3187, 8388607
    %v3189 = vor.u32 %v3188, 8388608
    %v3190 = vsub.s32 0, %v3189
    %v3191 = vadd.s32 %v3186, 1
    %vm3192 = vcmp.gt.s32.totalorder %v3191, 0
    %v3193 = vsel %vm3192, %v3191, 0
    %v3194 = vshrl.u32 %v3193, 5
    %v3195 = vand.u32 %v3193, 31
    %v3196 = vsub.s32 32, %v3195
    %v3197 = vshrl.u32 683565275, %v3196
    %v3198 = vshll.u32 683565275, %v3195
    %v3199 = vshrl.u32 2475754826, %v3196
    %v3200 = vor.u32 %v3198, %v3199
    %v3201 = vshll.u32 2475754826, %v3195
    %v3202 = vshrl.u32 2131351028, %v3196
    %v3203 = vor.u32 %v3201, %v3202
    %v3204 = vshll.u32 2131351028, %v3195
    %v3205 = vshrl.u32 2102212464, %v3196
    %v3206 = vor.u32 %v3204, %v3205
    %v3207 = vshll.u32 2102212464, %v3195
    %v3208 = vshrl.u32 920167782, %v3196
    %v3209 = vor.u32 %v3207, %v3208
    %v3210 = vshll.u32 920167782, %v3195
    %v3211 = vshrl.u32 1326507024, %v3196
    %v3212 = vor.u32 %v3210, %v3211
    %vm3213 = vcmp.lt.s32.totalorder %v3194, 1
    %vm3214 = vcmp.lt.s32.totalorder %v3194, 2
    %vm3215 = vcmp.lt.s32.totalorder %v3194, 3
    %vm3216 = vcmp.lt.s32.totalorder %v3194, 4
    %v3217 = vsel %vm3213, %v3197, %v3200
    %v3218 = vsel %vm3216, %v3206, 2102212464
    %v3219 = vsel %vm3215, %v3203, %v3218
    %v3220 = vsel %vm3214, %v3217, %v3219
    %v3221 = vsel %vm3213, %v3200, %v3203
    %v3222 = vsel %vm3216, %v3209, 920167782
    %v3223 = vsel %vm3215, %v3206, %v3222
    %v3224 = vsel %vm3214, %v3221, %v3223
    %v3225 = vsel %vm3213, %v3203, %v3206
    %v3226 = vsel %vm3216, %v3212, 1326507024
    %v3227 = vsel %vm3215, %v3209, %v3226
    %v3228 = vsel %vm3214, %v3225, %v3227
    %v3229 = vshll.u32 %v3189, 8
    %v3230 = vmul.u32.u64.compose %v3229, %v3228
    %v3231 = vextract.low.u32 %v3230
    %v3232 = vextract.high.u32 %v3230
    %v3233 = vmul.u32.u64.compose %v3229, %v3224
    %v3234 = vextract.low.u32 %v3233
    %v3235 = vextract.high.u32 %v3233
    %v3236 = vmul.u32 %v3229, %v3220
    %v3237 = vadd.s32 %v3232, %v3234
    %vm3238 = vc.u32 %v3232, %v3234
    %v3239 = vadd.s32 %v3235, 1
    %v3240 = vsel %vm3238, %v3239, %v3235
    %v3241 = vadd.s32 %v3236, %v3240
    %v3242 = vadd.s32 %v3241, 536870912
    %v3243 = vshrl.u32 %v3242, 30
    %v3244 = vshll.u32 %v3243, 30
    %v3245 = vsub.s32 %v3241, %v3244
    %vm3246 = vcmp.lt.s32.totalorder %v3245, 0
    %v3247 = vsub.s32 0, %v3245
    %v3248 = vsel %vm3246, %v3247, %v3245
    %v3249 = vclz %v3248
    %v3250 = vsub.s32 %v3249, 2
    %vm3251 = vcmp.gt.s32.totalorder 0, %v3250
    %v3252 = vsel %vm3251, 0, %v3250
    %v3253 = vsub.s32 32, %v3252
    %v3254 = vshll.u32 %v3245, %v3252
    %v3255 = vshrl.u32 %v3237, %v3253
    %v3256 = vor.u32 %v3254, %v3255
    %v3257 = vsub.s32 4294967266, %v3252
    %v3258 = vadd.s32 %v3257, 127
    %v3259 = vshll.u32 %v3258, 23
    %v3260 = vor.u32 4788187, %v3259
    %v3261 = vand.u32 2147483647, %v3260
    %v3263 = vcvt.s32.f32 %v3256
    %v3264 = vmul.f32 %v3263, %v3261
    %v3265 = vxor.u32 %v3264, 2147483648
    %v3266 = vsel %vm3183, %v3265, %v3264
    %v3267 = vsub.s32 4, %v3243
    %v3268 = vsel %vm3183, %v3267, %v3243
    %v3269 = vsel %vm3182, %v3076, %v3266
    %v3270 = vsel %vm3182, 0, %v3268
    %v3271 = vcosq.f32.pop %v3269
    %v3272 = vsinq.f32.pop %v3269
    %vm3273 = vweird.f32 %v3076
    %v3274 = vadd.s32 %v3270, 3
    %v3275 = vand.u32 %v3274, 3
    %vm3276 = vcmp.lt.s32.totalorder %v3275, 2
    %vm3277 = vcmp.eq.s32.totalorder %v3275, 0
    %v3278 = vxor.u32 %v3272, 2147483648
    %v3279 = vsel %vm3277, %v3271, %v3278
    %vm3280 = vcmp.eq.s32.totalorder %v3275, 2
    %v3281 = vxor.u32 %v3271, 2147483648
    %v3282 = vsel %vm3280, %v3281, %v3272
    %v3283 = vsel %vm3276, %v3279, %v3282
    %v3284 = vsel %vm3273, nan, %v3283
    %v3285 = vand.u32 2147483647, %v3075
    %vm3286 = vcmp.le.f32.partialorder %v3285, 0.7853982
    %vm3287 = vcmp.lt.s32.totalorder %v3075, 0
    %v3288 = vand.u32 %v3075, 2139095040
    %v3289 = vshrl.u32 %v3288, 23
    %v3290 = vsub.s32 %v3289, 127
    %v3291 = vand.u32 2147483647, %v3075
    %v3292 = vand.u32 %v3291, 8388607
    %v3293 = vor.u32 %v3292, 8388608
    %v3294 = vsub.s32 0, %v3293
    %v3295 = vadd.s32 %v3290, 1
    %vm3296 = vcmp.gt.s32.totalorder %v3295, 0
    %v3297 = vsel %vm3296, %v3295, 0
    %v3298 = vshrl.u32 %v3297, 5
    %v3299 = vand.u32 %v3297, 31
    %v3300 = vsub.s32 32, %v3299
    %v3301 = vshrl.u32 683565275, %v3300
    %v3302 = vshll.u32 683565275, %v3299
    %v3303 = vshrl.u32 2475754826, %v3300
    %v3304 = vor.u32 %v3302, %v3303
    %v3305 = vshll.u32 2475754826, %v3299
    %v3306 = vshrl.u32 2131351028, %v3300
    %v3307 = vor.u32 %v3305, %v3306
    %v3308 = vshll.u32 2131351028, %v3299
    %v3309 = vshrl.u32 2102212464, %v3300
    %v3310 = vor.u32 %v3308, %v3309
    %v3311 = vshll.u32 2102212464, %v3299
    %v3312 = vshrl.u32 920167782, %v3300
    %v3313 = vor.u32 %v3311, %v3312
    %v3314 = vshll.u32 920167782, %v3299
    %v3315 = vshrl.u32 1326507024, %v3300
    %v3316 = vor.u32 %v3314, %v3315
    %vm3317 = vcmp.lt.s32.totalorder %v3298, 1
    %vm3318 = vcmp.lt.s32.totalorder %v3298, 2
    %vm3319 = vcmp.lt.s32.totalorder %v3298, 3
    %vm3320 = vcmp.lt.s32.totalorder %v3298, 4
    %v3321 = vsel %vm3317, %v3301, %v3304
    %v3322 = vsel %vm3320, %v3310, 2102212464
    %v3323 = vsel %vm3319, %v3307, %v3322
    %v3324 = vsel %vm3318, %v3321, %v3323
    %v3325 = vsel %vm3317, %v3304, %v3307
    %v3326 = vsel %vm3320, %v3313, 920167782
    %v3327 = vsel %vm3319, %v3310, %v3326
    %v3328 = vsel %vm3318, %v3325, %v3327
    %v3329 = vsel %vm3317, %v3307, %v3310
    %v3330 = vsel %vm3320, %v3316, 1326507024
    %v3331 = vsel %vm3319, %v3313, %v3330
    %v3332 = vsel %vm3318, %v3329, %v3331
    %v3333 = vshll.u32 %v3293, 8
    %v3334 = vmul.u32.u64.compose %v3333, %v3332
    %v3335 = vextract.low.u32 %v3334
    %v3336 = vextract.high.u32 %v3334
    %v3337 = vmul.u32.u64.compose %v3333, %v3328
    %v3338 = vextract.low.u32 %v3337
    %v3339 = vextract.high.u32 %v3337
    %v3340 = vmul.u32 %v3333, %v3324
    %v3341 = vadd.s32 %v3336, %v3338
    %vm3342 = vc.u32 %v3336, %v3338
    %v3343 = vadd.s32 %v3339, 1
    %v3344 = vsel %vm3342, %v3343, %v3339
    %v3345 = vadd.s32 %v3340, %v3344
    %v3346 = vadd.s32 %v3345, 536870912
    %v3347 = vshrl.u32 %v3346, 30
    %v3348 = vshll.u32 %v3347, 30
    %v3349 = vsub.s32 %v3345, %v3348
    %vm3350 = vcmp.lt.s32.totalorder %v3349, 0
    %v3351 = vsub.s32 0, %v3349
    %v3352 = vsel %vm3350, %v3351, %v3349
    %v3353 = vclz %v3352
    %v3354 = vsub.s32 %v3353, 2
    %vm3355 = vcmp.gt.s32.totalorder 0, %v3354
    %v3356 = vsel %vm3355, 0, %v3354
    %v3357 = vsub.s32 32, %v3356
    %v3358 = vshll.u32 %v3349, %v3356
    %v3359 = vshrl.u32 %v3341, %v3357
    %v3360 = vor.u32 %v3358, %v3359
    %v3361 = vsub.s32 4294967266, %v3356
    %v3362 = vadd.s32 %v3361, 127
    %v3363 = vshll.u32 %v3362, 23
    %v3364 = vor.u32 4788187, %v3363
    %v3365 = vand.u32 2147483647, %v3364
    %v3367 = vcvt.s32.f32 %v3360
    %v3368 = vmul.f32 %v3367, %v3365
    %v3369 = vxor.u32 %v3368, 2147483648
    %v3370 = vsel %vm3287, %v3369, %v3368
    %v3371 = vsub.s32 4, %v3347
    %v3372 = vsel %vm3287, %v3371, %v3347
    %v3373 = vsel %vm3286, %v3075, %v3370
    %v3374 = vsel %vm3286, 0, %v3372
    %v3375 = vcosq.f32.pop %v3373
    %v3376 = vsinq.f32.pop %v3373
    %vm3377 = vweird.f32 %v3075
    %v3378 = vand.u32 %v3374, 3
    %vm3379 = vcmp.lt.s32.totalorder %v3378, 2
    %vm3380 = vcmp.eq.s32.totalorder %v3378, 0
    %v3381 = vxor.u32 %v3376, 2147483648
    %v3382 = vsel %vm3380, %v3375, %v3381
    %vm3383 = vcmp.eq.s32.totalorder %v3378, 2
    %v3384 = vxor.u32 %v3375, 2147483648
    %v3385 = vsel %vm3383, %v3384, %v3376
    %v3386 = vsel %vm3379, %v3382, %v3385
    %v3387 = vsel %vm3377, nan, %v3386
    %v3388 = vand.u32 2147483647, %v3076
    %vm3389 = vcmp.le.f32.partialorder %v3388, 0.7853982
    %vm3390 = vcmp.lt.s32.totalorder %v3076, 0
    %v3391 = vand.u32 %v3076, 2139095040
    %v3392 = vshrl.u32 %v3391, 23
    %v3393 = vsub.s32 %v3392, 127
    %v3394 = vand.u32 2147483647, %v3076
    %v3395 = vand.u32 %v3394, 8388607
    %v3396 = vor.u32 %v3395, 8388608
    %v3397 = vsub.s32 0, %v3396
    %v3398 = vadd.s32 %v3393, 1
    %vm3399 = vcmp.gt.s32.totalorder %v3398, 0
    %v3400 = vsel %vm3399, %v3398, 0
    %v3401 = vshrl.u32 %v3400, 5
    %v3402 = vand.u32 %v3400, 31
    %v3403 = vsub.s32 32, %v3402
    %v3404 = vshrl.u32 683565275, %v3403
    %v3405 = vshll.u32 683565275, %v3402
    %v3406 = vshrl.u32 2475754826, %v3403
    %v3407 = vor.u32 %v3405, %v3406
    %v3408 = vshll.u32 2475754826, %v3402
    %v3409 = vshrl.u32 2131351028, %v3403
    %v3410 = vor.u32 %v3408, %v3409
    %v3411 = vshll.u32 2131351028, %v3402
    %v3412 = vshrl.u32 2102212464, %v3403
    %v3413 = vor.u32 %v3411, %v3412
    %v3414 = vshll.u32 2102212464, %v3402
    %v3415 = vshrl.u32 920167782, %v3403
    %v3416 = vor.u32 %v3414, %v3415
    %v3417 = vshll.u32 920167782, %v3402
    %v3418 = vshrl.u32 1326507024, %v3403
    %v3419 = vor.u32 %v3417, %v3418
    %vm3420 = vcmp.lt.s32.totalorder %v3401, 1
    %vm3421 = vcmp.lt.s32.totalorder %v3401, 2
    %vm3422 = vcmp.lt.s32.totalorder %v3401, 3
    %vm3423 = vcmp.lt.s32.totalorder %v3401, 4
    %v3424 = vsel %vm3420, %v3404, %v3407
    %v3425 = vsel %vm3423, %v3413, 2102212464
    %v3426 = vsel %vm3422, %v3410, %v3425
    %v3427 = vsel %vm3421, %v3424, %v3426
    %v3428 = vsel %vm3420, %v3407, %v3410
    %v3429 = vsel %vm3423, %v3416, 920167782
    %v3430 = vsel %vm3422, %v3413, %v3429
    %v3431 = vsel %vm3421, %v3428, %v3430
    %v3432 = vsel %vm3420, %v3410, %v3413
    %v3433 = vsel %vm3423, %v3419, 1326507024
    %v3434 = vsel %vm3422, %v3416, %v3433
    %v3435 = vsel %vm3421, %v3432, %v3434
    %v3436 = vshll.u32 %v3396, 8
    %v3437 = vmul.u32.u64.compose %v3436, %v3435
    %v3438 = vextract.low.u32 %v3437
    %v3439 = vextract.high.u32 %v3437
    %v3440 = vmul.u32.u64.compose %v3436, %v3431
    %v3441 = vextract.low.u32 %v3440
    %v3442 = vextract.high.u32 %v3440
    %v3443 = vmul.u32 %v3436, %v3427
    %v3444 = vadd.s32 %v3439, %v3441
    %vm3445 = vc.u32 %v3439, %v3441
    %v3446 = vadd.s32 %v3442, 1
    %v3447 = vsel %vm3445, %v3446, %v3442
    %v3448 = vadd.s32 %v3443, %v3447
    %v3449 = vadd.s32 %v3448, 536870912
    %v3450 = vshrl.u32 %v3449, 30
    %v3451 = vshll.u32 %v3450, 30
    %v3452 = vsub.s32 %v3448, %v3451
    %vm3453 = vcmp.lt.s32.totalorder %v3452, 0
    %v3454 = vsub.s32 0, %v3452
    %v3455 = vsel %vm3453, %v3454, %v3452
    %v3456 = vclz %v3455
    %v3457 = vsub.s32 %v3456, 2
    %vm3458 = vcmp.gt.s32.totalorder 0, %v3457
    %v3459 = vsel %vm3458, 0, %v3457
    %v3460 = vsub.s32 32, %v3459
    %v3461 = vshll.u32 %v3452, %v3459
    %v3462 = vshrl.u32 %v3444, %v3460
    %v3463 = vor.u32 %v3461, %v3462
    %v3464 = vsub.s32 4294967266, %v3459
    %v3465 = vadd.s32 %v3464, 127
    %v3466 = vshll.u32 %v3465, 23
    %v3467 = vor.u32 4788187, %v3466
    %v3468 = vand.u32 2147483647, %v3467
    %v3470 = vcvt.s32.f32 %v3463
    %v3471 = vmul.f32 %v3470, %v3468
    %v3472 = vxor.u32 %v3471, 2147483648
    %v3473 = vsel %vm3390, %v3472, %v3471
    %v3474 = vsub.s32 4, %v3450
    %v3475 = vsel %vm3390, %v3474, %v3450
    %v3476 = vsel %vm3389, %v3076, %v3473
    %v3477 = vsel %vm3389, 0, %v3475
    %v3478 = vcosq.f32.pop %v3476
    %v3479 = vsinq.f32.pop %v3476
    %vm3480 = vweird.f32 %v3076
    %v3481 = vand.u32 %v3477, 3
    %vm3482 = vcmp.lt.s32.totalorder %v3481, 2
    %vm3483 = vcmp.eq.s32.totalorder %v3481, 0
    %v3484 = vxor.u32 %v3479, 2147483648
    %v3485 = vsel %vm3483, %v3478, %v3484
    %vm3486 = vcmp.eq.s32.totalorder %v3481, 2
    %v3487 = vxor.u32 %v3478, 2147483648
    %v3488 = vsel %vm3486, %v3487, %v3479
    %v3489 = vsel %vm3482, %v3485, %v3488
    %v3490 = vsel %vm3480, nan, %v3489
    %3493 = vrot.lane.b32.xlu0 %v3387, 32
    %v3494 = vpop.permute.xlu0 %3493
    %3495 = vrot.lane.b32.xlu0 %v3490, 32
    %v3496 = vpop.permute.xlu0 %3495
    %v3499 = vsel %vm316, %v3180, %v3494
    %v3500 = vsel %vm316, %v3284, %v3496
    %3503 = vrot.lane.b32.xlu0 %v895, 64
    %v3504 = vpop.permute.xlu0 %3503
    %3505 = vrot.lane.b32.xlu0 %v896, 64
    %v3506 = vpop.permute.xlu0 %3505
    %3511 = vrot.lane.b32.xlu0 %v1763, 64
    %v3512 = vpop.permute.xlu0 %3511
    %3513 = vrot.lane.b32.xlu0 %v1764, 64
    %v3514 = vpop.permute.xlu0 %3513
    %3519 = vrot.lane.b32.xlu0 %v2631, 64
    %v3520 = vpop.permute.xlu0 %3519
    %3521 = vrot.lane.b32.xlu0 %v2632, 64
    %v3522 = vpop.permute.xlu0 %3521
    %3527 = vrot.lane.b32.xlu0 %v3499, 64
    %v3528 = vpop.permute.xlu0 %3527
    %3529 = vrot.lane.b32.xlu0 %v3500, 64
    %v3530 = vpop.permute.xlu0 %3529
    %vm3533 = vcmask 523264
    %v3534 = vsel %vm3533, %v455, %v3504
    %v3535 = vsel %vm3533, %v458, %v3506
    %v3536 = vsel %vm3533, %v1329, %v3512
    %v3537 = vsel %vm3533, %v1330, %v3514
    %v3538 = vsel %vm3533, %v2197, %v3520
    %v3539 = vsel %vm3533, %v2198, %v3522
    %v3540 = vsel %vm3533, %v3065, %v3528
    %v3541 = vsel %vm3533, %v3066, %v3530
    %v3543 = vlaneseq
    %v3544 = vshrl.u32 %v3543, 7
    %v3545 = vsub.s32 0, %v3544
    %v3546 = vrot.slane %v57, %v3545
    %v3547 = vlaneseq
    %v3548 = vshrl.u32 %v3547, 7
    %v3549 = vsub.s32 1, %v3548
    %v3550 = vrot.slane %v57, %v3549
    %v3551 = vlaneseq
    %v3552 = vshrl.u32 %v3551, 7
    %v3553 = vsub.s32 2, %v3552
    %v3554 = vrot.slane %v57, %v3553
    %v3555 = vlaneseq
    %v3556 = vshrl.u32 %v3555, 7
    %v3557 = vsub.s32 3, %v3556
    %v3558 = vrot.slane %v57, %v3557
    %v3567 = vrot.slane %v3534, 6
    %v3568 = vrot.slane %v3536, 6
    %v3569 = vrot.slane %v3538, 6
    %v3570 = vrot.slane %v3540, 6
    %v3579 = vrot.slane %v355, 7
    %v3580 = vrot.slane %v357, 7
    %v3581 = vrot.slane %v396, 7
    %v3582 = vrot.slane %v398, 7
    %v3591 = vrot.slane %v3535, 4
    %v3592 = vrot.slane %v3537, 4
    %v3593 = vrot.slane %v3539, 4
    %v3594 = vrot.slane %v3541, 4
    %vm3599 = vcmask 1040384
    %v3600 = vsel %vm3599, %v355, %v3546
    %v3601 = vsel %vm3599, %v357, %v3550
    %v3602 = vsel %vm3599, %v396, %v3554
    %v3603 = vsel %vm3599, %v398, %v3558
    %vm3604 = vcmask 1041408
    %v3605 = vsel %vm3604, %v3600, %v3567
    %v3606 = vsel %vm3604, %v3601, %v3568
    %v3607 = vsel %vm3604, %v3602, %v3569
    %v3608 = vsel %vm3604, %v3603, %v3570
    %v3609 = vsel %vm3604, %v3567, %v3579
    %v3610 = vsel %vm3604, %v3568, %v3580
    %v3611 = vsel %vm3604, %v3569, %v3581
    %v3612 = vsel %vm3604, %v3570, %v3582
    %vm3613 = vcmask 1042432
    %v3614 = vsel %vm3613, %v3609, %v3546
    %v3615 = vsel %vm3613, %v3610, %v3550
    %v3616 = vsel %vm3613, %v3611, %v3554
    %v3617 = vsel %vm3613, %v3612, %v3558
    %vm3618 = vcmask 1043456
    %v3619 = vsel %vm3618, %v3614, %v3591
    %v3620 = vsel %vm3618, %v3615, %v3592
    %v3621 = vsel %vm3618, %v3616, %v3593
    %v3622 = vsel %vm3618, %v3617, %v3594
    %v3623 = vpack.c.bf16 %v3619, %v3605
    %v3624 = vpack.c.bf16 %v3620, %v3606
    %v3625 = vpack.c.bf16 %v3621, %v3607
    %v3626 = vpack.c.bf16 %v3622, %v3608
    %v3627 = vpack.c.bf16 %v3591, %v3591
    %v3628 = vpack.c.bf16 %v3592, %v3592
    %v3629 = vpack.c.bf16 %v3593, %v3593
    %v3630 = vpack.c.bf16 %v3594, %v3594
    %v3631 = vld [vmem:[%s7] sm:$0xf]
    %v3632 = vld [vmem:[%s7 + $0x4] sm:$0xf]
    %v3633 = vld [vmem:[%s7 + $0x8] sm:$0xf]
    %v3634 = vld [vmem:[%s7 + $0xc] sm:$0xf]
    %v3635 = vld [vmem:[%s7 + $0x10] sm:$0xf]
    %v3636 = vld [vmem:[%s7 + $0x14] sm:$0xf]
    %v3637 = vld [vmem:[%s7 + $0x18] sm:$0xf]
    %v3638 = vld [vmem:[%s7 + $0x1c] sm:$0xf]
    %v3639 = vld [vmem:[%s7 + $0x20] sm:$0xf]
    %v3640 = vld [vmem:[%s7 + $0x24] sm:$0xf]
    %v3641 = vld [vmem:[%s7 + $0x28] sm:$0xf]
    %v3642 = vld [vmem:[%s7 + $0x2c] sm:$0xf]
    %v3643 = vld [vmem:[%s7 + $0x30] sm:$0xf]
    %v3644 = vld [vmem:[%s7 + $0x34] sm:$0xf]
    %v3645 = vld [vmem:[%s7 + $0x38] sm:$0xf]
    %v3646 = vld [vmem:[%s7 + $0x3c] sm:$0xf]
    %v3647 = vld [vmem:[%s7 + $0x40] sm:$0xf]
    %v3648 = vld [vmem:[%s7 + $0x44] sm:$0xf]
    %v3649 = vld [vmem:[%s7 + $0x48] sm:$0xf]
    %v3650 = vld [vmem:[%s7 + $0x4c] sm:$0xf]
    %v3651 = vld [vmem:[%s7 + $0x50] sm:$0xf]
    %v3652 = vld [vmem:[%s7 + $0x54] sm:$0xf]
    %v3653 = vld [vmem:[%s7 + $0x58] sm:$0xf]
    %v3654 = vld [vmem:[%s7 + $0x5c] sm:$0xf]
    %v3655 = vld [vmem:[%s7 + $0x60] sm:$0xf]
    %v3656 = vld [vmem:[%s7 + $0x64] sm:$0xf]
    %v3657 = vld [vmem:[%s7 + $0x68] sm:$0xf]
    %v3658 = vld [vmem:[%s7 + $0x6c] sm:$0xf]
    %v3659 = vld [vmem:[%s7 + $0x70] sm:$0xf]
    %v3660 = vld [vmem:[%s7 + $0x74] sm:$0xf]
    %v3661 = vld [vmem:[%s7 + $0x78] sm:$0xf]
    %v3662 = vld [vmem:[%s7 + $0x7c] sm:$0xf]
    %v3663 = vld [vmem:[%s7 + $0x80] sm:$0xf]
    %v3664 = vld [vmem:[%s7 + $0x84] sm:$0xf]
    %v3665 = vld [vmem:[%s7 + $0x88] sm:$0xf]
    %v3666 = vld [vmem:[%s7 + $0x8c] sm:$0xf]
    %v3667 = vld [vmem:[%s7 + $0x90] sm:$0xf]
    %v3668 = vld [vmem:[%s7 + $0x94] sm:$0xf]
    %v3669 = vld [vmem:[%s7 + $0x98] sm:$0xf]
    %v3670 = vld [vmem:[%s7 + $0x9c] sm:$0xf]
    %v3671 = vld [vmem:[%s7 + $0xa0] sm:$0xf]
    %v3672 = vld [vmem:[%s7 + $0xa4] sm:$0xf]
    %v3673 = vld [vmem:[%s7 + $0xa8] sm:$0xf]
    %v3674 = vld [vmem:[%s7 + $0xac] sm:$0xf]
    %v3675 = vld [vmem:[%s7 + $0xb0] sm:$0xf]
    %v3676 = vld [vmem:[%s7 + $0xb4] sm:$0xf]
    %v3677 = vld [vmem:[%s7 + $0xb8] sm:$0xf]
    %v3678 = vld [vmem:[%s7 + $0xbc] sm:$0xf]
    %v3679 = vld [vmem:[%s7 + $0xc0] sm:$0xf]
    %v3680 = vld [vmem:[%s7 + $0xc4] sm:$0xf]
    %v3681 = vld [vmem:[%s7 + $0xc8] sm:$0xf]
    %v3682 = vld [vmem:[%s7 + $0xcc] sm:$0xf]
    %v3683 = vld [vmem:[%s7 + $0xd0] sm:$0xf]
    %v3684 = vld [vmem:[%s7 + $0xd4] sm:$0xf]
    %v3685 = vld [vmem:[%s7 + $0xd8] sm:$0xf]
    %v3686 = vld [vmem:[%s7 + $0xdc] sm:$0xf]
    %v3687 = vld [vmem:[%s7 + $0xe0] sm:$0xf]
    %v3688 = vld [vmem:[%s7 + $0xe4] sm:$0xf]
    %v3689 = vld [vmem:[%s7 + $0xe8] sm:$0xf]
    %v3690 = vld [vmem:[%s7 + $0xec] sm:$0xf]
    %v3691 = vld [vmem:[%s7 + $0xf0] sm:$0xf]
    %v3692 = vld [vmem:[%s7 + $0xf4] sm:$0xf]
    %v3693 = vld [vmem:[%s7 + $0xf8] sm:$0xf]
    %v3694 = vld [vmem:[%s7 + $0xfc] sm:$0xf]
    %v3759 = vunpack.c.l.b16 %v3631
    %v3760 = vunpack.c.l.b16 %v3632
    %v3761 = vunpack.c.l.b16 %v3633
    %v3762 = vunpack.c.l.b16 %v3634
    %v3763 = vunpack.c.l.b16 %v3635
    %v3764 = vunpack.c.l.b16 %v3636
    %v3765 = vunpack.c.l.b16 %v3637
    %v3766 = vunpack.c.l.b16 %v3638
    %v3767 = vunpack.c.l.b16 %v3639
    %v3768 = vunpack.c.l.b16 %v3640
    %v3769 = vunpack.c.l.b16 %v3641
    %v3770 = vunpack.c.l.b16 %v3642
    %v3771 = vunpack.c.l.b16 %v3643
    %v3772 = vunpack.c.l.b16 %v3644
    %v3773 = vunpack.c.l.b16 %v3645
    %v3774 = vunpack.c.l.b16 %v3646
    %v3775 = vunpack.c.l.b16 %v3647
    %v3776 = vunpack.c.l.b16 %v3648
    %v3777 = vunpack.c.l.b16 %v3649
    %v3778 = vunpack.c.l.b16 %v3650
    %v3779 = vunpack.c.l.b16 %v3651
    %v3780 = vunpack.c.l.b16 %v3652
    %v3781 = vunpack.c.l.b16 %v3653
    %v3782 = vunpack.c.l.b16 %v3654
    %v3783 = vunpack.c.l.b16 %v3655
    %v3784 = vunpack.c.l.b16 %v3656
    %v3785 = vunpack.c.l.b16 %v3657
    %v3786 = vunpack.c.l.b16 %v3658
    %v3787 = vunpack.c.l.b16 %v3659
    %v3788 = vunpack.c.l.b16 %v3660
    %v3789 = vunpack.c.l.b16 %v3661
    %v3790 = vunpack.c.l.b16 %v3662
    %v3791 = vunpack.c.l.b16 %v3663
    %v3792 = vunpack.c.l.b16 %v3664
    %v3793 = vunpack.c.l.b16 %v3665
    %v3794 = vunpack.c.l.b16 %v3666
    %v3795 = vunpack.c.l.b16 %v3667
    %v3796 = vunpack.c.l.b16 %v3668
    %v3797 = vunpack.c.l.b16 %v3669
    %v3798 = vunpack.c.l.b16 %v3670
    %v3799 = vunpack.c.l.b16 %v3671
    %v3800 = vunpack.c.l.b16 %v3672
    %v3801 = vunpack.c.l.b16 %v3673
    %v3802 = vunpack.c.l.b16 %v3674
    %v3803 = vunpack.c.l.b16 %v3675
    %v3804 = vunpack.c.l.b16 %v3676
    %v3805 = vunpack.c.l.b16 %v3677
    %v3806 = vunpack.c.l.b16 %v3678
    %v3807 = vunpack.c.l.b16 %v3679
    %v3808 = vunpack.c.l.b16 %v3680
    %v3809 = vunpack.c.l.b16 %v3681
    %v3810 = vunpack.c.l.b16 %v3682
    %v3811 = vunpack.c.l.b16 %v3683
    %v3812 = vunpack.c.l.b16 %v3684
    %v3813 = vunpack.c.l.b16 %v3685
    %v3814 = vunpack.c.l.b16 %v3686
    %v3815 = vunpack.c.l.b16 %v3687
    %v3816 = vunpack.c.l.b16 %v3688
    %v3817 = vunpack.c.l.b16 %v3689
    %v3818 = vunpack.c.l.b16 %v3690
    %v3819 = vunpack.c.l.b16 %v3691
    %v3820 = vunpack.c.l.b16 %v3692
    %v3821 = vunpack.c.l.b16 %v3693
    %v3822 = vunpack.c.l.b16 %v3694
    %v3823 = vpack.c.b16 %v3760, %v3759
    %v3824 = vpack.c.b16 %v3762, %v3761
    %v3825 = vpack.c.b16 %v3764, %v3763
    %v3826 = vpack.c.b16 %v3766, %v3765
    %v3827 = vpack.c.b16 %v3768, %v3767
    %v3828 = vpack.c.b16 %v3770, %v3769
    %v3829 = vpack.c.b16 %v3772, %v3771
    %v3830 = vpack.c.b16 %v3774, %v3773
    %v3831 = vpack.c.b16 %v3776, %v3775
    %v3832 = vpack.c.b16 %v3778, %v3777
    %v3833 = vpack.c.b16 %v3780, %v3779
    %v3834 = vpack.c.b16 %v3782, %v3781
    %v3835 = vpack.c.b16 %v3784, %v3783
    %v3836 = vpack.c.b16 %v3786, %v3785
    %v3837 = vpack.c.b16 %v3788, %v3787
    %v3838 = vpack.c.b16 %v3790, %v3789
    %v3839 = vpack.c.b16 %v3792, %v3791
    %v3840 = vpack.c.b16 %v3794, %v3793
    %v3841 = vpack.c.b16 %v3796, %v3795
    %v3842 = vpack.c.b16 %v3798, %v3797
    %v3843 = vpack.c.b16 %v3800, %v3799
    %v3844 = vpack.c.b16 %v3802, %v3801
    %v3845 = vpack.c.b16 %v3804, %v3803
    %v3846 = vpack.c.b16 %v3806, %v3805
    %v3847 = vpack.c.b16 %v3808, %v3807
    %v3848 = vpack.c.b16 %v3810, %v3809
    %v3849 = vpack.c.b16 %v3812, %v3811
    %v3850 = vpack.c.b16 %v3814, %v3813
    %v3851 = vpack.c.b16 %v3816, %v3815
    %v3852 = vpack.c.b16 %v3818, %v3817
    %v3853 = vpack.c.b16 %v3820, %v3819
    %v3854 = vpack.c.b16 %v3822, %v3821
    %3887 = vmatprep.subr.bf16.mxu0 0
    %3888 = vmatpush1.bf16.msra.mxu0 %v3830
    %3889 = vmatprep.subr.bf16.mxu0 0
    %3890 = vmatpush1.bf16.msra.mxu0 %v3829
    %3891 = vmatprep.subr.bf16.mxu0 0
    %3892 = vmatpush1.bf16.msra.mxu0 %v3828
    %3893 = vmatprep.subr.bf16.mxu0 0
    %3894 = vmatpush1.bf16.msra.mxu0 %v3827
    %3895 = vmatprep.subr.bf16.mxu0 0
    %3896 = vmatpush1.bf16.msra.mxu0 %v3826
    %3897 = vmatprep.subr.bf16.mxu0 0
    %3898 = vmatpush1.bf16.msra.mxu0 %v3825
    %3899 = vmatprep.subr.bf16.mxu0 0
    %3900 = vmatpush1.bf16.msra.mxu0 %v3824
    %3901 = vmatprep.subr.bf16.mxu0 0
    %3902 = vmatpush1.bf16.msra.mxu0 %v3823
    %3903 = vmatprep.subr.bf16.mxu0 0
    %3904 = vmatpush2.bf16.msra.mxu0 %v3838
    %3905 = vmatprep.subr.bf16.mxu0 0
    %3906 = vmatpush2.bf16.msra.mxu0 %v3837
    %3907 = vmatprep.subr.bf16.mxu0 0
    %3908 = vmatpush2.bf16.msra.mxu0 %v3836
    %3909 = vmatprep.subr.bf16.mxu0 0
    %3910 = vmatpush2.bf16.msra.mxu0 %v3835
    %3911 = vmatprep.subr.bf16.mxu0 0
    %3912 = vmatpush2.bf16.msra.mxu0 %v3834
    %3913 = vmatprep.subr.bf16.mxu0 0
    %3914 = vmatpush2.bf16.msra.mxu0 %v3833
    %3915 = vmatprep.subr.bf16.mxu0 0
    %3916 = vmatpush2.bf16.msra.mxu0 %v3832
    %3917 = vmatprep.subr.bf16.mxu0 0
    %3918 = vmatpush2.bf16.msra.mxu0 %v3831
    %3919 = vmatprep.mubr.bf16.mxu0 %v3624
    %3920 = vmatmul.mubr.bf16.gmra.mxu0 %v3623
    %v3921 = vpop.f32.mrf.mxu0
    %v3922 = vadd.f32 %v59, %v3921
    %v3923 = vpop.f32.mrf.mxu0
    %v3924 = vpop.f32.mrf.mxu0
    %v3925 = vadd.f32 %v59, %v3924
    %v3926 = vpop.f32.mrf.mxu0
    %3927 = vmatprep.mubr.bf16.mxu0 %v3628
    %3928 = vmatmul.mubr.bf16.gmra.mxu0 %v3627
    %v3929 = vpop.f32.mrf.mxu0
    %v3930 = vadd.f32 %v59, %v3929
    %v3931 = vpop.f32.mrf.mxu0
    %v3932 = vpop.f32.mrf.mxu0
    %v3933 = vpop.f32.mrf.mxu0
    %3934 = vdwg.mxu0
    %3935 = vmatprep.subr.bf16.mxu0 0
    %3936 = vmatpush1.bf16.msra.mxu0 %v3846
    %3937 = vmatprep.subr.bf16.mxu0 0
    %3938 = vmatpush1.bf16.msra.mxu0 %v3845
    %3939 = vmatprep.subr.bf16.mxu0 0
    %3940 = vmatpush1.bf16.msra.mxu0 %v3844
    %3941 = vmatprep.subr.bf16.mxu0 0
    %3942 = vmatpush1.bf16.msra.mxu0 %v3843
    %3943 = vmatprep.subr.bf16.mxu0 0
    %3944 = vmatpush1.bf16.msra.mxu0 %v3842
    %3945 = vmatprep.subr.bf16.mxu0 0
    %3946 = vmatpush1.bf16.msra.mxu0 %v3841
    %3947 = vmatprep.subr.bf16.mxu0 0
    %3948 = vmatpush1.bf16.msra.mxu0 %v3840
    %3949 = vmatprep.subr.bf16.mxu0 0
    %3950 = vmatpush1.bf16.msra.mxu0 %v3839
    %3951 = vmatprep.subr.bf16.mxu0 0
    %3952 = vmatpush2.bf16.msra.mxu0 %v3854
    %3953 = vmatprep.subr.bf16.mxu0 0
    %3954 = vmatpush2.bf16.msra.mxu0 %v3853
    %3955 = vmatprep.subr.bf16.mxu0 0
    %3956 = vmatpush2.bf16.msra.mxu0 %v3852
    %3957 = vmatprep.subr.bf16.mxu0 0
    %3958 = vmatpush2.bf16.msra.mxu0 %v3851
    %3959 = vmatprep.subr.bf16.mxu0 0
    %3960 = vmatpush2.bf16.msra.mxu0 %v3850
    %3961 = vmatprep.subr.bf16.mxu0 0
    %3962 = vmatpush2.bf16.msra.mxu0 %v3849
    %3963 = vmatprep.subr.bf16.mxu0 0
    %3964 = vmatpush2.bf16.msra.mxu0 %v3848
    %3965 = vmatprep.subr.bf16.mxu0 0
    %3966 = vmatpush2.bf16.msra.mxu0 %v3847
    %3967 = vmatprep.mubr.bf16.mxu0 %v3626
    %3968 = vmatmul.mubr.bf16.gmra.mxu0 %v3625
    %v3969 = vpop.f32.mrf.mxu0
    %v3970 = vadd.f32 %v3922, %v3969
    %v3971 = vpop.f32.mrf.mxu0
    %v3972 = vpop.f32.mrf.mxu0
    %v3973 = vadd.f32 %v3925, %v3972
    %v3974 = vpop.f32.mrf.mxu0
    %3975 = vmatprep.mubr.bf16.mxu0 %v3630
    %3976 = vmatmul.mubr.bf16.gmra.mxu0 %v3629
    %v3977 = vpop.f32.mrf.mxu0
    %v3978 = vadd.f32 %v3930, %v3977
    %v3979 = vpop.f32.mrf.mxu0
    %v3980 = vpop.f32.mrf.mxu0
    %v3981 = vpop.f32.mrf.mxu0
    %3982 = vdwg.mxu0
    %v3983 = vlaneseq
    %v3984 = vand.u32 %v3983, 127
    %s3985 = sld [smem:[#allocation2]]
    %s3986 = sadd.s32 %s3985, 2
    %v3987 = vstv %s3986
    %vm3988 = vcmp.lt.s32.totalorder %v3984, %v3987
    %v3989 = vsel %vm3988, 0.0, -1e+09
    %v3990 = vsel %vm412, %v3989, -1e+09
    %v3991 = vlaneseq
    %v3992 = vshrl.u32 %v3991, 7
    %v3993 = vsub.s32 0, %v3992
    %v3994 = vrot.slane %v3990, %v3993
    %s3995 = sld [smem:[#allocation2 + $0x1]]
    %s3996 = sadd.s32 %s3995, 2
    %v3997 = vstv %s3996
    %vm3998 = vcmp.lt.s32.totalorder %v3984, %v3997
    %v3999 = vsel %vm3998, 0.0, -1e+09
    %4001 = vrot.lane.b32.xlu0 %v3999, 10
    %v4002 = vpop.permute.xlu0 %4001
    %v4004 = vsel %vm412, -1e+09, %v4002
    %v4005 = vlaneseq
    %v4006 = vshrl.u32 %v4005, 7
    %v4007 = vsub.s32 0, %v4006
    %v4008 = vrot.slane %v4004, %v4007
    %v4009 = vsel %vm3604, %v3994, %v4008
    %v4010 = vld [vmem:[%s8] sm:$0xff]
    %v4011 = vld [vmem:[%s8 + $0x8] sm:$0xf]
    %v4012 = vld [vmem:[%s8 + $0xc] sm:$0xff]
    %v4013 = vld [vmem:[%s8 + $0x14] sm:$0xf]
    %v4014 = vld [vmem:[%s8 + $0x18] sm:$0xff]
    %v4015 = vld [vmem:[%s8 + $0x20] sm:$0xf]
    %v4016 = vld [vmem:[%s8 + $0x24] sm:$0xff]
    %v4017 = vld [vmem:[%s8 + $0x2c] sm:$0xf]
    %v4018 = vld [vmem:[%s8 + $0x30] sm:$0xff]
    %v4019 = vld [vmem:[%s8 + $0x38] sm:$0xf]
    %v4020 = vld [vmem:[%s8 + $0x3c] sm:$0xff]
    %v4021 = vld [vmem:[%s8 + $0x44] sm:$0xf]
    %v4022 = vld [vmem:[%s8 + $0x48] sm:$0xff]
    %v4023 = vld [vmem:[%s8 + $0x50] sm:$0xf]
    %v4024 = vld [vmem:[%s8 + $0x54] sm:$0xff]
    %v4025 = vld [vmem:[%s8 + $0x5c] sm:$0xf]
    %s4026 = scalar_lea.vmem %s3, 32
    %v4027 = vld [vmem:[%s4026] ss:$8 sm:$0x3]
    %v4028 = vld [vmem:[%s3 + $0x21] ss:$0 sm:$0xff]
    %v4029 = vld [vmem:[%s3 + $0x22] ss:$0 sm:$0xff]
    %v4030 = vld [vmem:[%s3 + $0x23] ss:$0 sm:$0xff]
    %v4031 = vld [vmem:[%s3 + $0x24] ss:$0 sm:$0xff]
    %v4032 = vld [vmem:[%s3 + $0x25] ss:$0 sm:$0xff]
    %v4033 = vld [vmem:[%s3 + $0x26] ss:$0 sm:$0xff]
    %v4034 = vld [vmem:[%s3 + $0x27] ss:$0 sm:$0xff]
    %v4035 = vpack.c.bf16 %v3973, %v3970
    %v4036 = vpack.c.bf16 %v3978, %v3978
    %v4038 = vlaneseq
    %v4039 = vshrl.u32 %v4038, 7
    %v4040 = vsub.s32 0, %v4039
    %v4041 = vrot.slane %v4027, %v4040
    %v4042 = vlaneseq
    %v4043 = vshrl.u32 %v4042, 7
    %v4044 = vsub.s32 1, %v4043
    %v4045 = vrot.slane %v4027, %v4044
    %v4056 = vunpack.c.l.b16 %v4010
    %v4057 = vunpack.c.h.b16 %v4010
    %v4058 = vunpack.c.l.b16 %v4012
    %v4059 = vunpack.c.h.b16 %v4012
    %v4060 = vunpack.c.l.b16 %v4014
    %v4061 = vunpack.c.h.b16 %v4014
    %v4062 = vunpack.c.l.b16 %v4016
    %v4063 = vunpack.c.h.b16 %v4016
    %v4064 = vunpack.c.l.b16 %v4018
    %v4065 = vunpack.c.h.b16 %v4018
    %v4066 = vunpack.c.l.b16 %v4020
    %v4067 = vunpack.c.h.b16 %v4020
    %v4068 = vunpack.c.l.b16 %v4022
    %v4069 = vunpack.c.h.b16 %v4022
    %v4070 = vunpack.c.l.b16 %v4024
    %v4071 = vunpack.c.h.b16 %v4024
    %v4072 = vpack.c.b16 %v4058, %v4056
    %v4073 = vpack.c.b16 %v4059, %v4057
    %v4074 = vpack.c.b16 %v4062, %v4060
    %v4075 = vpack.c.b16 %v4063, %v4061
    %v4076 = vpack.c.b16 %v4066, %v4064
    %v4077 = vpack.c.b16 %v4067, %v4065
    %v4078 = vpack.c.b16 %v4070, %v4068
    %v4079 = vpack.c.b16 %v4071, %v4069
    %v4089 = vsel %vm3533, %v4035, 0
    %v4092 = vsel %vm3533, %v4036, 0
    %4094 = vmatprep.subr.bf16.mxu0 0
    %4095 = vmatpush1.bf16.msra.mxu0 0
    %4096 = vmatprep.subr.bf16.mxu0 0
    %4097 = vmatpush1.bf16.msra.mxu0 0
    %4098 = vmatprep.subr.bf16.mxu0 0
    %4099 = vmatpush1.bf16.msra.mxu0 0
    %4100 = vmatprep.subr.bf16.mxu0 0
    %4101 = vmatpush1.bf16.msra.mxu0 0
    %4102 = vmatprep.subr.bf16.mxu0 %v4079
    %4103 = vmatpush1.bf16.msra.mxu0 %v4078
    %4104 = vmatprep.subr.bf16.mxu0 %v4077
    %4105 = vmatpush1.bf16.msra.mxu0 %v4076
    %4106 = vmatprep.subr.bf16.mxu0 %v4075
    %4107 = vmatpush1.bf16.msra.mxu0 %v4074
    %4108 = vmatprep.subr.bf16.mxu0 %v4073
    %4109 = vmatpush1.bf16.msra.mxu0 %v4072
    %4110 = vmatprep.subr.bf16.mxu0 0
    %4111 = vmatpush2.bf16.msra.mxu0 0
    %4112 = vmatprep.subr.bf16.mxu0 0
    %4113 = vmatpush2.bf16.msra.mxu0 0
    %4114 = vmatprep.subr.bf16.mxu0 0
    %4115 = vmatpush2.bf16.msra.mxu0 0
    %4116 = vmatprep.subr.bf16.mxu0 0
    %4117 = vmatpush2.bf16.msra.mxu0 0
    %4118 = vmatprep.subr.bf16.mxu0 0
    %4119 = vmatpush2.bf16.msra.mxu0 0
    %4120 = vmatprep.subr.bf16.mxu0 0
    %4121 = vmatpush2.bf16.msra.mxu0 0
    %4122 = vmatprep.subr.bf16.mxu0 0
    %4123 = vmatpush2.bf16.msra.mxu0 0
    %4124 = vmatprep.subr.bf16.mxu0 0
    %4125 = vmatpush2.bf16.msra.mxu0 0
    %4126 = vmatprep.mubr.bf16.mxu0 0
    %4127 = vmatmul.mubr.bf16.gmra.mxu0 %v4089
    %v4128 = vpop.f32.mrf.mxu0
    %v4129 = vadd.f32 %v4041, %v4128
    %v4130 = vpop.f32.mrf.mxu0
    %v4131 = vadd.f32 %v4045, %v4130
    %v4132 = vpop.f32.mrf.mxu0
    %v4133 = vadd.f32 %v4041, %v4132
    %v4134 = vpop.f32.mrf.mxu0
    %v4135 = vadd.f32 %v4045, %v4134
    %4136 = vmatprep.mubr.bf16.mxu0 0
    %4137 = vmatmul.mubr.bf16.gmra.mxu0 %v4092
    %v4138 = vpop.f32.mrf.mxu0
    %v4139 = vadd.f32 %v4041, %v4138
    %v4140 = vpop.f32.mrf.mxu0
    %v4141 = vadd.f32 %v4045, %v4140
    %v4142 = vpop.f32.mrf.mxu0
    %v4143 = vpop.f32.mrf.mxu0
    %4144 = vdwg.mxu0
    %v4145 = vpack.c.bf16 %v4133, %v4129
    %v4146 = vpack.c.bf16 %v4139, %v4139
    %v4147 = vpack.c.bf16 %v4135, %v4131
    %v4148 = vpack.c.bf16 %v4141, %v4141
    %4151 = vrot.lane.b32.xlu0 %v4145, 64
    %v4152 = vpop.permute.xlu0 %4151
    %4153 = vrot.lane.b32.xlu0 %v4146, 64
    %v4154 = vpop.permute.xlu0 %4153
    %v4156 = vsel %vm316, %v4145, 0
    %v4159 = vsel %vm316, %v4146, 0
    %v4162 = vsel %vm316, %v4152, 0
    %v4165 = vsel %vm316, %v4154, 0
    %4167 = vmatprep.subr.bf16.mxu0 0
    %4168 = vmatpush1.bf16.xpose.msra.mxu0 0
    %4169 = vmatprep.subr.bf16.mxu0 0
    %4170 = vmatpush1.bf16.xpose.msra.mxu0 0
    %4171 = vmatprep.subr.bf16.mxu0 0
    %4172 = vmatpush1.bf16.xpose.msra.mxu0 0
    %4173 = vmatprep.subr.bf16.mxu0 0
    %4174 = vmatpush1.bf16.xpose.msra.mxu0 0
    %4175 = vmatprep.subr.bf16.mxu0 0
    %4176 = vmatpush1.bf16.xpose.msra.mxu0 0
    %4177 = vmatprep.subr.bf16.mxu0 0
    %4178 = vmatpush1.bf16.xpose.msra.mxu0 0
    %4179 = vmatprep.subr.bf16.mxu0 0
    %4180 = vmatpush1.bf16.xpose.msra.mxu0 %v4165
    %4181 = vmatprep.subr.bf16.mxu0 0
    %4182 = vmatpush1.bf16.xpose.msra.mxu0 %v4162
    %4183 = vmatprep.subr.bf16.mxu0 0
    %4184 = vmatpush2.bf16.xpose.msra.mxu0 0
    %4185 = vmatprep.subr.bf16.mxu0 0
    %4186 = vmatpush2.bf16.xpose.msra.mxu0 0
    %4187 = vmatprep.subr.bf16.mxu0 0
    %4188 = vmatpush2.bf16.xpose.msra.mxu0 0
    %4189 = vmatprep.subr.bf16.mxu0 0
    %4190 = vmatpush2.bf16.xpose.msra.mxu0 0
    %4191 = vmatprep.subr.bf16.mxu0 0
    %4192 = vmatpush2.bf16.xpose.msra.mxu0 0
    %4193 = vmatprep.subr.bf16.mxu0 0
    %4194 = vmatpush2.bf16.xpose.msra.mxu0 0
    %4195 = vmatprep.subr.bf16.mxu0 0
    %4196 = vmatpush2.bf16.xpose.msra.mxu0 0
    %4197 = vmatprep.subr.bf16.mxu0 0
    %4198 = vmatpush2.bf16.xpose.msra.mxu0 0
    %4199 = vmatprep.mubr.bf16.mxu0 0
    %4200 = vmatmul.mubr.bf16.gmra.mxu0 %v4156
    %v4201 = vpop.f32.mrf.mxu0
    %v4202 = vadd.f32 0.0, %v4201
    %v4203 = vpop.f32.mrf.mxu0
    %v4204 = vpop.f32.mrf.mxu0
    %v4205 = vadd.f32 0.0, %v4204
    %v4206 = vpop.f32.mrf.mxu0
    %4207 = vmatprep.mubr.bf16.mxu0 0
    %4208 = vmatmul.mubr.bf16.gmra.mxu0 %v4159
    %v4209 = vpop.f32.mrf.mxu0
    %v4210 = vadd.f32 0.0, %v4209
    %v4211 = vpop.f32.mrf.mxu0
    %v4212 = vpop.f32.mrf.mxu0
    %v4213 = vpop.f32.mrf.mxu0
    %4214 = vdwg.mxu0
    %v4215 = vmul.f32 %v4202, 0.17677669
    %v4216 = vmul.f32 %v4205, 0.17677669
    %v4217 = vmul.f32 %v4210, 0.17677669
    %v4218 = vadd.f32 %v4215, %v3994
    %v4219 = vadd.f32 %v4216, %v4009
    %v4220 = vadd.f32 %v4217, %v4008
    %vm4221 = vcmask 162816
    %v4222 = vsel %vm4221, %v4218, -inf
    %4223 = vmax.xlane.f32.xlu0 %v4222
    %v4224 = vpop.xlane.xlu0 %4223
    %v4225 = vsel %vm4221, %v4219, -inf
    %4226 = vmax.xlane.f32.xlu0 %v4225
    %v4227 = vpop.xlane.xlu0 %4226
    %vm4228 = vcmask 158720
    %v4229 = vsel %vm4228, %v4220, -inf
    %4230 = vmax.xlane.f32.xlu0 %v4229
    %v4231 = vpop.xlane.xlu0 %4230
    %v4232 = vsub.f32 %v4218, %v4224
    %v4233 = vsub.f32 %v4219, %v4227
    %v4234 = vsub.f32 %v4220, %v4231
    %v4235 = vmul.f32 %v4232, 1.442695
    %v4236 = vpow.pop %v4235
    %v4237 = vmul.f32 %v4233, 1.442695
    %v4238 = vpow.pop %v4237
    %v4239 = vmul.f32 %v4234, 1.442695
    %v4240 = vpow.pop %v4239
    %v4241 = vsel %vm4221, %v4236, 0.0
    %4242 = vadd.xlane.f32.xlu0 %v4241
    %v4243 = vpop.xlane.xlu0 %4242
    %v4244 = vsel %vm4221, %v4238, 0.0
    %4245 = vadd.xlane.f32.xlu0 %v4244
    %v4246 = vpop.xlane.xlu0 %4245
    %v4247 = vsel %vm4228, %v4240, 0.0
    %4248 = vadd.xlane.f32.xlu0 %v4247
    %v4249 = vpop.xlane.xlu0 %4248
    %v4250 = vrcp.pop %v4243
    %v4251 = vrcp.pop %v4246
    %v4252 = vrcp.pop %v4249
    %v4253 = vmul.f32 %v4236, %v4250
    %v4254 = vmul.f32 %v4238, %v4251
    %v4255 = vmul.f32 %v4240, %v4252
    %v4256 = vpack.c.bf16 %v4254, %v4253
    %v4257 = vpack.c.bf16 %v4255, %v4255
    %v4259 = vsel %vm4221, %v4256, 0
    %v4262 = vsel %vm4221, %v4257, 0
    %v4265 = vsel %vm3604, %v4148, 0
    %4267 = vmatprep.subr.bf16.mxu0 0
    %4268 = vmatpush1.bf16.msra.mxu0 0
    %4269 = vmatprep.subr.bf16.mxu0 0
    %4270 = vmatpush1.bf16.msra.mxu0 0
    %4271 = vmatprep.subr.bf16.mxu0 0
    %4272 = vmatpush1.bf16.msra.mxu0 0
    %4273 = vmatprep.subr.bf16.mxu0 0
    %4274 = vmatpush1.bf16.msra.mxu0 0
    %4275 = vmatprep.subr.bf16.mxu0 0
    %4276 = vmatpush1.bf16.msra.mxu0 0
    %4277 = vmatprep.subr.bf16.mxu0 0
    %4278 = vmatpush1.bf16.msra.mxu0 0
    %4279 = vmatprep.subr.bf16.mxu0 0
    %4280 = vmatpush1.bf16.msra.mxu0 %v4265
    %4281 = vmatprep.subr.bf16.mxu0 0
    %4282 = vmatpush1.bf16.msra.mxu0 %v4147
    %4283 = vmatprep.subr.bf16.mxu0 0
    %4284 = vmatpush2.bf16.msra.mxu0 0
    %4285 = vmatprep.subr.bf16.mxu0 0
    %4286 = vmatpush2.bf16.msra.mxu0 0
    %4287 = vmatprep.subr.bf16.mxu0 0
    %4288 = vmatpush2.bf16.msra.mxu0 0
    %4289 = vmatprep.subr.bf16.mxu0 0
    %4290 = vmatpush2.bf16.msra.mxu0 0
    %4291 = vmatprep.subr.bf16.mxu0 0
    %4292 = vmatpush2.bf16.msra.mxu0 0
    %4293 = vmatprep.subr.bf16.mxu0 0
    %4294 = vmatpush2.bf16.msra.mxu0 0
    %4295 = vmatprep.subr.bf16.mxu0 0
    %4296 = vmatpush2.bf16.msra.mxu0 0
    %4297 = vmatprep.subr.bf16.mxu0 0
    %4298 = vmatpush2.bf16.msra.mxu0 0
    %4299 = vmatprep.mubr.bf16.mxu0 0
    %4300 = vmatmul.mubr.bf16.gmra.mxu0 %v4259
    %v4301 = vpop.f32.mrf.mxu0
    %v4302 = vadd.f32 0.0, %v4301
    %v4303 = vpop.f32.mrf.mxu0
    %v4304 = vpop.f32.mrf.mxu0
    %v4305 = vadd.f32 0.0, %v4304
    %v4306 = vpop.f32.mrf.mxu0
    %4307 = vmatprep.mubr.bf16.mxu0 0
    %4308 = vmatmul.mubr.bf16.gmra.mxu0 %v4262
    %v4309 = vpop.f32.mrf.mxu0
    %v4310 = vadd.f32 0.0, %v4309
    %v4311 = vpop.f32.mrf.mxu0
    %v4312 = vpop.f32.mrf.mxu0
    %v4313 = vpop.f32.mrf.mxu0
    %4314 = vdwg.mxu0
    %4315 = vrot.lane.b32.xlu0 %v4145, 96
    %v4316 = vpop.permute.xlu0 %4315
    %4317 = vrot.lane.b32.xlu0 %v4146, 96
    %v4318 = vpop.permute.xlu0 %4317
    %4319 = vrot.lane.b32.xlu0 %v4145, 32
    %v4320 = vpop.permute.xlu0 %4319
    %4321 = vrot.lane.b32.xlu0 %v4146, 32
    %v4322 = vpop.permute.xlu0 %4321
    %v4324 = vsel %vm316, %v4316, 0
    %v4327 = vsel %vm316, %v4318, 0
    %v4330 = vsel %vm316, %v4320, 0
    %v4333 = vsel %vm316, %v4322, 0
    %4335 = vmatprep.subr.bf16.mxu0 0
    %4336 = vmatpush1.bf16.xpose.msra.mxu0 0
    %4337 = vmatprep.subr.bf16.mxu0 0
    %4338 = vmatpush1.bf16.xpose.msra.mxu0 0
    %4339 = vmatprep.subr.bf16.mxu0 0
    %4340 = vmatpush1.bf16.xpose.msra.mxu0 0
    %4341 = vmatprep.subr.bf16.mxu0 0
    %4342 = vmatpush1.bf16.xpose.msra.mxu0 0
    %4343 = vmatprep.subr.bf16.mxu0 0
    %4344 = vmatpush1.bf16.xpose.msra.mxu0 0
    %4345 = vmatprep.subr.bf16.mxu0 0
    %4346 = vmatpush1.bf16.xpose.msra.mxu0 0
    %4347 = vmatprep.subr.bf16.mxu0 0
    %4348 = vmatpush1.bf16.xpose.msra.mxu0 %v4333
    %4349 = vmatprep.subr.bf16.mxu0 0
    %4350 = vmatpush1.bf16.xpose.msra.mxu0 %v4330
    %4351 = vmatprep.subr.bf16.mxu0 0
    %4352 = vmatpush2.bf16.xpose.msra.mxu0 0
    %4353 = vmatprep.subr.bf16.mxu0 0
    %4354 = vmatpush2.bf16.xpose.msra.mxu0 0
    %4355 = vmatprep.subr.bf16.mxu0 0
    %4356 = vmatpush2.bf16.xpose.msra.mxu0 0
    %4357 = vmatprep.subr.bf16.mxu0 0
    %4358 = vmatpush2.bf16.xpose.msra.mxu0 0
    %4359 = vmatprep.subr.bf16.mxu0 0
    %4360 = vmatpush2.bf16.xpose.msra.mxu0 0
    %4361 = vmatprep.subr.bf16.mxu0 0
    %4362 = vmatpush2.bf16.xpose.msra.mxu0 0
    %4363 = vmatprep.subr.bf16.mxu0 0
    %4364 = vmatpush2.bf16.xpose.msra.mxu0 0
    %4365 = vmatprep.subr.bf16.mxu0 0
    %4366 = vmatpush2.bf16.xpose.msra.mxu0 0
    %4367 = vmatprep.mubr.bf16.mxu0 0
    %4368 = vmatmul.mubr.bf16.gmra.mxu0 %v4324
    %v4369 = vpop.f32.mrf.mxu0
    %v4370 = vadd.f32 0.0, %v4369
    %v4371 = vpop.f32.mrf.mxu0
    %v4372 = vpop.f32.mrf.mxu0
    %v4373 = vadd.f32 0.0, %v4372
    %v4374 = vpop.f32.mrf.mxu0
    %4375 = vmatprep.mubr.bf16.mxu0 0
    %4376 = vmatmul.mubr.bf16.gmra.mxu0 %v4327
    %v4377 = vpop.f32.mrf.mxu0
    %v4378 = vadd.f32 0.0, %v4377
    %v4379 = vpop.f32.mrf.mxu0
    %v4380 = vpop.f32.mrf.mxu0
    %v4381 = vpop.f32.mrf.mxu0
    %4382 = vdwg.mxu0
    %v4383 = vmul.f32 %v4370, 0.17677669
    %v4384 = vmul.f32 %v4373, 0.17677669
    %v4385 = vmul.f32 %v4378, 0.17677669
    %v4386 = vadd.f32 %v4383, %v3994
    %v4387 = vadd.f32 %v4384, %v4009
    %v4388 = vadd.f32 %v4385, %v4008
    %v4389 = vsel %vm4221, %v4386, -inf
    %4390 = vmax.xlane.f32.xlu0 %v4389
    %v4391 = vpop.xlane.xlu0 %4390
    %v4392 = vsel %vm4221, %v4387, -inf
    %4393 = vmax.xlane.f32.xlu0 %v4392
    %v4394 = vpop.xlane.xlu0 %4393
    %v4395 = vsel %vm4228, %v4388, -inf
    %4396 = vmax.xlane.f32.xlu0 %v4395
    %v4397 = vpop.xlane.xlu0 %4396
    %v4398 = vsub.f32 %v4386, %v4391
    %v4399 = vsub.f32 %v4387, %v4394
    %v4400 = vsub.f32 %v4388, %v4397
    %v4401 = vmul.f32 %v4398, 1.442695
    %v4402 = vpow.pop %v4401
    %v4403 = vmul.f32 %v4399, 1.442695
    %v4404 = vpow.pop %v4403
    %v4405 = vmul.f32 %v4400, 1.442695
    %v4406 = vpow.pop %v4405
    %v4407 = vsel %vm4221, %v4402, 0.0
    %4408 = vadd.xlane.f32.xlu0 %v4407
    %v4409 = vpop.xlane.xlu0 %4408
    %v4410 = vsel %vm4221, %v4404, 0.0
    %4411 = vadd.xlane.f32.xlu0 %v4410
    %v4412 = vpop.xlane.xlu0 %4411
    %v4413 = vsel %vm4228, %v4406, 0.0
    %4414 = vadd.xlane.f32.xlu0 %v4413
    %v4415 = vpop.xlane.xlu0 %4414
    %v4416 = vrcp.pop %v4409
    %v4417 = vrcp.pop %v4412
    %v4418 = vrcp.pop %v4415
    %v4419 = vmul.f32 %v4402, %v4416
    %v4420 = vmul.f32 %v4404, %v4417
    %v4421 = vmul.f32 %v4406, %v4418
    %v4422 = vpack.c.bf16 %v4420, %v4419
    %v4423 = vpack.c.bf16 %v4421, %v4421
    %4426 = vrot.lane.b32.xlu0 %v4147, 96
    %v4427 = vpop.permute.xlu0 %4426
    %4428 = vrot.lane.b32.xlu0 %v4148, 96
    %v4429 = vpop.permute.xlu0 %4428
    %v4432 = vsel %vm4221, %v4422, 0
    %v4435 = vsel %vm4221, %v4423, 0
    %v4438 = vsel %vm3604, %v4429, 0
    %4440 = vmatprep.subr.bf16.mxu0 0
    %4441 = vmatpush1.bf16.msra.mxu0 0
    %4442 = vmatprep.subr.bf16.mxu0 0
    %4443 = vmatpush1.bf16.msra.mxu0 0
    %4444 = vmatprep.subr.bf16.mxu0 0
    %4445 = vmatpush1.bf16.msra.mxu0 0
    %4446 = vmatprep.subr.bf16.mxu0 0
    %4447 = vmatpush1.bf16.msra.mxu0 0
    %4448 = vmatprep.subr.bf16.mxu0 0
    %4449 = vmatpush1.bf16.msra.mxu0 0
    %4450 = vmatprep.subr.bf16.mxu0 0
    %4451 = vmatpush1.bf16.msra.mxu0 0
    %4452 = vmatprep.subr.bf16.mxu0 0
    %4453 = vmatpush1.bf16.msra.mxu0 %v4438
    %4454 = vmatprep.subr.bf16.mxu0 0
    %4455 = vmatpush1.bf16.msra.mxu0 %v4427
    %4456 = vmatprep.subr.bf16.mxu0 0
    %4457 = vmatpush2.bf16.msra.mxu0 0
    %4458 = vmatprep.subr.bf16.mxu0 0
    %4459 = vmatpush2.bf16.msra.mxu0 0
    %4460 = vmatprep.subr.bf16.mxu0 0
    %4461 = vmatpush2.bf16.msra.mxu0 0
    %4462 = vmatprep.subr.bf16.mxu0 0
    %4463 = vmatpush2.bf16.msra.mxu0 0
    %4464 = vmatprep.subr.bf16.mxu0 0
    %4465 = vmatpush2.bf16.msra.mxu0 0
    %4466 = vmatprep.subr.bf16.mxu0 0
    %4467 = vmatpush2.bf16.msra.mxu0 0
    %4468 = vmatprep.subr.bf16.mxu0 0
    %4469 = vmatpush2.bf16.msra.mxu0 0
    %4470 = vmatprep.subr.bf16.mxu0 0
    %4471 = vmatpush2.bf16.msra.mxu0 0
    %4472 = vmatprep.mubr.bf16.mxu0 0
    %4473 = vmatmul.mubr.bf16.gmra.mxu0 %v4432
    %v4474 = vpop.f32.mrf.mxu0
    %v4475 = vadd.f32 0.0, %v4474
    %v4476 = vpop.f32.mrf.mxu0
    %v4477 = vpop.f32.mrf.mxu0
    %v4478 = vadd.f32 0.0, %v4477
    %v4479 = vpop.f32.mrf.mxu0
    %4480 = vmatprep.mubr.bf16.mxu0 0
    %4481 = vmatmul.mubr.bf16.gmra.mxu0 %v4435
    %v4482 = vpop.f32.mrf.mxu0
    %v4483 = vadd.f32 0.0, %v4482
    %v4484 = vpop.f32.mrf.mxu0
    %v4485 = vpop.f32.mrf.mxu0
    %v4486 = vpop.f32.mrf.mxu0
    %4487 = vdwg.mxu0
    %4491 = vrot.lane.b32.xlu0 %v4475, 32
    %v4492 = vpop.permute.xlu0 %4491
    %4493 = vrot.lane.b32.xlu0 %v4478, 32
    %v4494 = vpop.permute.xlu0 %4493
    %4495 = vrot.lane.b32.xlu0 %v4483, 32
    %v4496 = vpop.permute.xlu0 %4495
    %v4500 = vsel %vm316, %v4302, %v4492
    %v4501 = vsel %vm316, %v4305, %v4494
    %v4502 = vsel %vm316, %v4310, %v4496
    %v4503 = vpack.c.bf16 %v4501, %v4500
    %v4504 = vpack.c.bf16 %v4502, %v4502
    %4505 = vrot.lane.b32.xlu0 %v4073, 64
    %v4506 = vpop.permute.xlu0 %4505
    %4507 = vrot.lane.b32.xlu0 %v4075, 64
    %v4508 = vpop.permute.xlu0 %4507
    %4509 = vrot.lane.b32.xlu0 %v4077, 64
    %v4510 = vpop.permute.xlu0 %4509
    %4511 = vrot.lane.b32.xlu0 %v4079, 64
    %v4512 = vpop.permute.xlu0 %4511
    %v4518 = vsel %vm3533, %v4503, 0
    %v4521 = vsel %vm3533, %v4504, 0
    %4523 = vmatprep.subr.bf16.mxu0 0
    %4524 = vmatpush1.bf16.msra.mxu0 0
    %4525 = vmatprep.subr.bf16.mxu0 0
    %4526 = vmatpush1.bf16.msra.mxu0 0
    %4527 = vmatprep.subr.bf16.mxu0 0
    %4528 = vmatpush1.bf16.msra.mxu0 0
    %4529 = vmatprep.subr.bf16.mxu0 0
    %4530 = vmatpush1.bf16.msra.mxu0 0
    %4531 = vmatprep.subr.bf16.mxu0 0
    %4532 = vmatpush1.bf16.msra.mxu0 %v4512
    %4533 = vmatprep.subr.bf16.mxu0 0
    %4534 = vmatpush1.bf16.msra.mxu0 %v4510
    %4535 = vmatprep.subr.bf16.mxu0 0
    %4536 = vmatpush1.bf16.msra.mxu0 %v4508
    %4537 = vmatprep.subr.bf16.mxu0 0
    %4538 = vmatpush1.bf16.msra.mxu0 %v4506
    %4539 = vmatprep.subr.bf16.mxu0 0
    %4540 = vmatpush2.bf16.msra.mxu0 0
    %4541 = vmatprep.subr.bf16.mxu0 0
    %4542 = vmatpush2.bf16.msra.mxu0 0
    %4543 = vmatprep.subr.bf16.mxu0 0
    %4544 = vmatpush2.bf16.msra.mxu0 0
    %4545 = vmatprep.subr.bf16.mxu0 0
    %4546 = vmatpush2.bf16.msra.mxu0 0
    %4547 = vmatprep.subr.bf16.mxu0 0
    %4548 = vmatpush2.bf16.msra.mxu0 0
    %4549 = vmatprep.subr.bf16.mxu0 0
    %4550 = vmatpush2.bf16.msra.mxu0 0
    %4551 = vmatprep.subr.bf16.mxu0 0
    %4552 = vmatpush2.bf16.msra.mxu0 0
    %4553 = vmatprep.subr.bf16.mxu0 0
    %4554 = vmatpush2.bf16.msra.mxu0 0
    %4555 = vmatprep.mubr.bf16.mxu0 0
    %4556 = vmatmul.mubr.bf16.gmra.mxu0 %v4518
    %v4557 = vpop.f32.mrf.mxu0
    %v4558 = vadd.f32 %v4028, %v4557
    %v4559 = vpop.f32.mrf.mxu0
    %v4560 = vpop.f32.mrf.mxu0
    %v4561 = vadd.f32 %v4028, %v4560
    %v4562 = vpop.f32.mrf.mxu0
    %4563 = vmatprep.mubr.bf16.mxu0 0
    %4564 = vmatmul.mubr.bf16.gmra.mxu0 %v4521
    %v4565 = vpop.f32.mrf.mxu0
    %v4566 = vadd.f32 %v4028, %v4565
    %v4567 = vpop.f32.mrf.mxu0
    %v4568 = vpop.f32.mrf.mxu0
    %v4569 = vpop.f32.mrf.mxu0
    %4570 = vdwg.mxu0
    %v4571 = vadd.f32 %v3970, %v4558
    %v4572 = vadd.f32 %v3973, %v4561
    %v4573 = vadd.f32 %v3978, %v4566
    %v4574 = vsel %vm3533, %v4571, 0.0
    %4575 = vadd.xlane.f32.xlu0 %v4574
    %v4576 = vpop.xlane.xlu0 %4575
    %v4577 = vsel %vm3533, %v4572, 0.0
    %4578 = vadd.xlane.f32.xlu0 %v4577
    %v4579 = vpop.xlane.xlu0 %4578
    %vm4580 = vcmask 519168
    %v4581 = vsel %vm4580, %v4573, 0.0
    %4582 = vadd.xlane.f32.xlu0 %v4581
    %v4583 = vpop.xlane.xlu0 %4582
    %v4584 = vrcp.pop 64.0
    %v4585 = vmul.f32 %v4576, %v4584
    %v4586 = vmul.f32 %v4579, %v4584
    %v4587 = vmul.f32 %v4583, %v4584
    %v4588 = vsub.f32 %v4571, %v4585
    %v4589 = vsub.f32 %v4572, %v4586
    %v4590 = vsub.f32 %v4573, %v4587
    %v4591 = vmul.f32 %v4588, %v4588
    %v4592 = vmul.f32 %v4589, %v4589
    %v4593 = vmul.f32 %v4590, %v4590
    %v4594 = vsel %vm3533, %v4591, 0.0
    %4595 = vadd.xlane.f32.xlu0 %v4594
    %v4596 = vpop.xlane.xlu0 %4595
    %v4597 = vsel %vm3533, %v4592, 0.0
    %4598 = vadd.xlane.f32.xlu0 %v4597
    %v4599 = vpop.xlane.xlu0 %4598
    %v4600 = vsel %vm4580, %v4593, 0.0
    %4601 = vadd.xlane.f32.xlu0 %v4600
    %v4602 = vpop.xlane.xlu0 %4601
    %v4603 = vmul.f32 %v4596, %v4584
    %v4604 = vmul.f32 %v4599, %v4584
    %v4605 = vmul.f32 %v4602, %v4584
    %v4606 = vadd.f32 %v4603, 1e-05
    %v4607 = vadd.f32 %v4604, 1e-05
    %v4608 = vadd.f32 %v4605, 1e-05
    %v4609 = vrsqrt.pop %v4606
    %v4610 = vrsqrt.pop %v4607
    %v4611 = vrsqrt.pop %v4608
    %v4612 = vmul.f32 %v4588, %v4609
    %v4613 = vmul.f32 %v4589, %v4610
    %v4614 = vmul.f32 %v4590, %v4611
    %v4615 = vmul.f32 %v4612, %v4029
    %v4616 = vmul.f32 %v4613, %v4029
    %v4617 = vmul.f32 %v4614, %v4029
    %v4618 = vadd.f32 %v4615, %v4030
    %v4619 = vadd.f32 %v4616, %v4030
    %v4620 = vadd.f32 %v4617, %v4030
    %v4621 = vpack.c.bf16 %v4619, %v4618
    %v4622 = vpack.c.bf16 %v4620, %v4620
    %v4631 = vunpack.c.l.b16 %v4011
    %v4632 = vunpack.c.l.b16 %v4013
    %v4633 = vunpack.c.l.b16 %v4015
    %v4634 = vunpack.c.l.b16 %v4017
    %v4635 = vunpack.c.l.b16 %v4019
    %v4636 = vunpack.c.l.b16 %v4021
    %v4637 = vunpack.c.l.b16 %v4023
    %v4638 = vunpack.c.l.b16 %v4025
    %v4639 = vpack.c.b16 %v4632, %v4631
    %v4640 = vpack.c.b16 %v4634, %v4633
    %v4641 = vpack.c.b16 %v4636, %v4635
    %v4642 = vpack.c.b16 %v4638, %v4637
    %v4648 = vsel %vm3533, %v4621, 0
    %v4651 = vsel %vm3533, %v4622, 0
    %4653 = vmatprep.subr.bf16.mxu0 0
    %4654 = vmatpush1.bf16.msra.mxu0 0
    %4655 = vmatprep.subr.bf16.mxu0 0
    %4656 = vmatpush1.bf16.msra.mxu0 0
    %4657 = vmatprep.subr.bf16.mxu0 0
    %4658 = vmatpush1.bf16.msra.mxu0 0
    %4659 = vmatprep.subr.bf16.mxu0 0
    %4660 = vmatpush1.bf16.msra.mxu0 0
    %4661 = vmatprep.subr.bf16.mxu0 0
    %4662 = vmatpush1.bf16.msra.mxu0 %v4642
    %4663 = vmatprep.subr.bf16.mxu0 0
    %4664 = vmatpush1.bf16.msra.mxu0 %v4641
    %4665 = vmatprep.subr.bf16.mxu0 0
    %4666 = vmatpush1.bf16.msra.mxu0 %v4640
    %4667 = vmatprep.subr.bf16.mxu0 0
    %4668 = vmatpush1.bf16.msra.mxu0 %v4639
    %4669 = vmatprep.subr.bf16.mxu0 0
    %4670 = vmatpush2.bf16.msra.mxu0 0
    %4671 = vmatprep.subr.bf16.mxu0 0
    %4672 = vmatpush2.bf16.msra.mxu0 0
    %4673 = vmatprep.subr.bf16.mxu0 0
    %4674 = vmatpush2.bf16.msra.mxu0 0
    %4675 = vmatprep.subr.bf16.mxu0 0
    %4676 = vmatpush2.bf16.msra.mxu0 0
    %4677 = vmatprep.subr.bf16.mxu0 0
    %4678 = vmatpush2.bf16.msra.mxu0 0
    %4679 = vmatprep.subr.bf16.mxu0 0
    %4680 = vmatpush2.bf16.msra.mxu0 0
    %4681 = vmatprep.subr.bf16.mxu0 0
    %4682 = vmatpush2.bf16.msra.mxu0 0
    %4683 = vmatprep.subr.bf16.mxu0 0
    %4684 = vmatpush2.bf16.msra.mxu0 0
    %4685 = vmatprep.mubr.bf16.mxu0 0
    %4686 = vmatmul.mubr.bf16.gmra.mxu0 %v4648
    %v4687 = vpop.f32.mrf.mxu0
    %v4688 = vadd.f32 %v4031, %v4687
    %v4689 = vpop.f32.mrf.mxu0
    %v4690 = vpop.f32.mrf.mxu0
    %v4691 = vadd.f32 %v4031, %v4690
    %v4692 = vpop.f32.mrf.mxu0
    %4693 = vmatprep.mubr.bf16.mxu0 0
    %4694 = vmatmul.mubr.bf16.gmra.mxu0 %v4651
    %v4695 = vpop.f32.mrf.mxu0
    %v4696 = vadd.f32 %v4031, %v4695
    %v4697 = vpop.f32.mrf.mxu0
    %v4698 = vpop.f32.mrf.mxu0
    %v4699 = vpop.f32.mrf.mxu0
    %4700 = vdwg.mxu0
    %v4701 = vmul.f32 %v4688, 0.5
    %v4702 = vmul.f32 %v4691, 0.5
    %v4703 = vmul.f32 %v4696, 0.5
    %v4704 = vmul.f32 %v4688, 0.044715
    %v4705 = vmul.f32 %v4691, 0.044715
    %v4706 = vmul.f32 %v4696, 0.044715
    %v4707 = vmul.f32 %v4704, %v4688
    %v4708 = vmul.f32 %v4705, %v4691
    %v4709 = vmul.f32 %v4706, %v4696
    %v4710 = vmul.f32 %v4707, %v4688
    %v4711 = vmul.f32 %v4708, %v4691
    %v4712 = vmul.f32 %v4709, %v4696
    %v4713 = vadd.f32 %v4688, %v4710
    %v4714 = vadd.f32 %v4691, %v4711
    %v4715 = vadd.f32 %v4696, %v4712
    %v4716 = vmul.f32 %v4713, 0.7978846
    %v4717 = vmul.f32 %v4714, 0.7978846
    %v4718 = vmul.f32 %v4715, 0.7978846
    %v4719 = vtanh.pop %v4716
    %v4720 = vtanh.pop %v4717
    %v4721 = vtanh.pop %v4718
    %v4722 = vadd.f32 %v4719, 1.0
    %v4723 = vadd.f32 %v4720, 1.0
    %v4724 = vadd.f32 %v4721, 1.0
    %v4725 = vmul.f32 %v4701, %v4722
    %v4726 = vmul.f32 %v4702, %v4723
    %v4727 = vmul.f32 %v4703, %v4724
    %v4728 = vpack.c.bf16 %v4726, %v4725
    %v4729 = vpack.c.bf16 %v4727, %v4727
    %v4730 = vld [vmem:[%s9] sm:$0xf]
    %v4731 = vld [vmem:[%s9 + $0x4] sm:$0xf]
    %v4732 = vld [vmem:[%s9 + $0x8] sm:$0xf]
    %v4733 = vld [vmem:[%s9 + $0xc] sm:$0xf]
    %v4734 = vld [vmem:[%s9 + $0x10] sm:$0xf]
    %v4735 = vld [vmem:[%s9 + $0x14] sm:$0xf]
    %v4736 = vld [vmem:[%s9 + $0x18] sm:$0xf]
    %v4737 = vld [vmem:[%s9 + $0x1c] sm:$0xf]
    %v4738 = vld [vmem:[%s9 + $0x20] sm:$0xf]
    %v4739 = vld [vmem:[%s9 + $0x24] sm:$0xf]
    %v4740 = vld [vmem:[%s9 + $0x28] sm:$0xf]
    %v4741 = vld [vmem:[%s9 + $0x2c] sm:$0xf]
    %v4742 = vld [vmem:[%s9 + $0x30] sm:$0xf]
    %v4743 = vld [vmem:[%s9 + $0x34] sm:$0xf]
    %v4744 = vld [vmem:[%s9 + $0x38] sm:$0xf]
    %v4745 = vld [vmem:[%s9 + $0x3c] sm:$0xf]
    %v4762 = vunpack.c.l.b16 %v4730
    %v4763 = vunpack.c.l.b16 %v4731
    %v4764 = vunpack.c.l.b16 %v4732
    %v4765 = vunpack.c.l.b16 %v4733
    %v4766 = vunpack.c.l.b16 %v4734
    %v4767 = vunpack.c.l.b16 %v4735
    %v4768 = vunpack.c.l.b16 %v4736
    %v4769 = vunpack.c.l.b16 %v4737
    %v4770 = vunpack.c.l.b16 %v4738
    %v4771 = vunpack.c.l.b16 %v4739
    %v4772 = vunpack.c.l.b16 %v4740
    %v4773 = vunpack.c.l.b16 %v4741
    %v4774 = vunpack.c.l.b16 %v4742
    %v4775 = vunpack.c.l.b16 %v4743
    %v4776 = vunpack.c.l.b16 %v4744
    %v4777 = vunpack.c.l.b16 %v4745
    %v4778 = vpack.c.b16 %v4763, %v4762
    %v4779 = vpack.c.b16 %v4765, %v4764
    %v4780 = vpack.c.b16 %v4767, %v4766
    %v4781 = vpack.c.b16 %v4769, %v4768
    %v4782 = vpack.c.b16 %v4771, %v4770
    %v4783 = vpack.c.b16 %v4773, %v4772
    %v4784 = vpack.c.b16 %v4775, %v4774
    %v4785 = vpack.c.b16 %v4777, %v4776
    %4794 = vmatprep.subr.bf16.mxu0 0
    %4795 = vmatpush1.bf16.msra.mxu0 %v4785
    %4796 = vmatprep.subr.bf16.mxu0 0
    %4797 = vmatpush1.bf16.msra.mxu0 %v4784
    %4798 = vmatprep.subr.bf16.mxu0 0
    %4799 = vmatpush1.bf16.msra.mxu0 %v4783
    %4800 = vmatprep.subr.bf16.mxu0 0
    %4801 = vmatpush1.bf16.msra.mxu0 %v4782
    %4802 = vmatprep.subr.bf16.mxu0 0
    %4803 = vmatpush1.bf16.msra.mxu0 %v4781
    %4804 = vmatprep.subr.bf16.mxu0 0
    %4805 = vmatpush1.bf16.msra.mxu0 %v4780
    %4806 = vmatprep.subr.bf16.mxu0 0
    %4807 = vmatpush1.bf16.msra.mxu0 %v4779
    %4808 = vmatprep.subr.bf16.mxu0 0
    %4809 = vmatpush1.bf16.msra.mxu0 %v4778
    %4810 = vmatprep.subr.bf16.mxu0 0
    %4811 = vmatpush2.bf16.msra.mxu0 0
    %4812 = vmatprep.subr.bf16.mxu0 0
    %4813 = vmatpush2.bf16.msra.mxu0 0
    %4814 = vmatprep.subr.bf16.mxu0 0
    %4815 = vmatpush2.bf16.msra.mxu0 0
    %4816 = vmatprep.subr.bf16.mxu0 0
    %4817 = vmatpush2.bf16.msra.mxu0 0
    %4818 = vmatprep.subr.bf16.mxu0 0
    %4819 = vmatpush2.bf16.msra.mxu0 0
    %4820 = vmatprep.subr.bf16.mxu0 0
    %4821 = vmatpush2.bf16.msra.mxu0 0
    %4822 = vmatprep.subr.bf16.mxu0 0
    %4823 = vmatpush2.bf16.msra.mxu0 0
    %4824 = vmatprep.subr.bf16.mxu0 0
    %4825 = vmatpush2.bf16.msra.mxu0 0
    %4826 = vmatprep.mubr.bf16.mxu0 0
    %4827 = vmatmul.mubr.bf16.gmra.mxu0 %v4728
    %v4828 = vpop.f32.mrf.mxu0
    %v4829 = vadd.f32 %v4032, %v4828
    %v4830 = vpop.f32.mrf.mxu0
    %v4831 = vpop.f32.mrf.mxu0
    %v4832 = vadd.f32 %v4032, %v4831
    %v4833 = vpop.f32.mrf.mxu0
    %4834 = vmatprep.mubr.bf16.mxu0 0
    %4835 = vmatmul.mubr.bf16.gmra.mxu0 %v4729
    %v4836 = vpop.f32.mrf.mxu0
    %v4837 = vadd.f32 %v4032, %v4836
    %v4838 = vpop.f32.mrf.mxu0
    %v4839 = vpop.f32.mrf.mxu0
    %v4840 = vpop.f32.mrf.mxu0
    %4841 = vdwg.mxu0
    %v4842 = vadd.f32 %v4618, %v4829
    %v4843 = vadd.f32 %v4619, %v4832
    %v4844 = vadd.f32 %v4620, %v4837
    %v4845 = vsel %vm3533, %v4842, 0.0
    %4846 = vadd.xlane.f32.xlu0 %v4845
    %v4847 = vpop.xlane.xlu0 %4846
    %v4848 = vsel %vm3533, %v4843, 0.0
    %4849 = vadd.xlane.f32.xlu0 %v4848
    %v4850 = vpop.xlane.xlu0 %4849
    %v4851 = vsel %vm4580, %v4844, 0.0
    %4852 = vadd.xlane.f32.xlu0 %v4851
    %v4853 = vpop.xlane.xlu0 %4852
    %v4854 = vmul.f32 %v4847, %v4584
    %v4855 = vmul.f32 %v4850, %v4584
    %v4856 = vmul.f32 %v4853, %v4584
    %v4857 = vsub.f32 %v4842, %v4854
    %v4858 = vsub.f32 %v4843, %v4855
    %v4859 = vsub.f32 %v4844, %v4856
    %v4860 = vmul.f32 %v4857, %v4857
    %v4861 = vmul.f32 %v4858, %v4858
    %v4862 = vmul.f32 %v4859, %v4859
    %v4863 = vsel %vm3533, %v4860, 0.0
    %4864 = vadd.xlane.f32.xlu0 %v4863
    %v4865 = vpop.xlane.xlu0 %4864
    %v4866 = vsel %vm3533, %v4861, 0.0
    %4867 = vadd.xlane.f32.xlu0 %v4866
    %v4868 = vpop.xlane.xlu0 %4867
    %v4869 = vsel %vm4580, %v4862, 0.0
    %4870 = vadd.xlane.f32.xlu0 %v4869
    %v4871 = vpop.xlane.xlu0 %4870
    %v4872 = vmul.f32 %v4865, %v4584
    %v4873 = vmul.f32 %v4868, %v4584
    %v4874 = vmul.f32 %v4871, %v4584
    %v4875 = vadd.f32 %v4872, 1e-05
    %v4876 = vadd.f32 %v4873, 1e-05
    %v4877 = vadd.f32 %v4874, 1e-05
    %v4878 = vrsqrt.pop %v4875
    %v4879 = vrsqrt.pop %v4876
    %v4880 = vrsqrt.pop %v4877
    %v4881 = vmul.f32 %v4857, %v4878
    %v4882 = vmul.f32 %v4858, %v4879
    %v4883 = vmul.f32 %v4859, %v4880
    %v4884 = vmul.f32 %v4881, %v4033
    %v4885 = vmul.f32 %v4882, %v4033
    %v4886 = vmul.f32 %v4883, %v4033
    %v4887 = vadd.f32 %v4884, %v4034
    %v4888 = vadd.f32 %v4885, %v4034
    %v4889 = vadd.f32 %v4886, %v4034
    %s4890 = scalar_lea.vmem %s8, 96
    %v4891 = vld [vmem:[%s4890] sm:$0xff]
    %v4892 = vld [vmem:[%s4890 + $0x8] sm:$0xf]
    %v4893 = vld [vmem:[%s4890 + $0xc] sm:$0xff]
    %v4894 = vld [vmem:[%s4890 + $0x14] sm:$0xf]
    %v4895 = vld [vmem:[%s4890 + $0x18] sm:$0xff]
    %v4896 = vld [vmem:[%s4890 + $0x20] sm:$0xf]
    %v4897 = vld [vmem:[%s4890 + $0x24] sm:$0xff]
    %v4898 = vld [vmem:[%s4890 + $0x2c] sm:$0xf]
    %v4899 = vld [vmem:[%s4890 + $0x30] sm:$0xff]
    %v4900 = vld [vmem:[%s4890 + $0x38] sm:$0xf]
    %v4901 = vld [vmem:[%s4890 + $0x3c] sm:$0xff]
    %v4902 = vld [vmem:[%s4890 + $0x44] sm:$0xf]
    %v4903 = vld [vmem:[%s4890 + $0x48] sm:$0xff]
    %v4904 = vld [vmem:[%s4890 + $0x50] sm:$0xf]
    %v4905 = vld [vmem:[%s4890 + $0x54] sm:$0xff]
    %v4906 = vld [vmem:[%s4890 + $0x5c] sm:$0xf]
    %s4907 = scalar_lea.vmem %s3, 64
    %v4908 = vld [vmem:[%s4907] ss:$8 sm:$0x3]
    %v4909 = vld [vmem:[%s3 + $0x41] ss:$0 sm:$0xff]
    %v4910 = vld [vmem:[%s3 + $0x42] ss:$0 sm:$0xff]
    %v4911 = vld [vmem:[%s3 + $0x43] ss:$0 sm:$0xff]
    %v4912 = vld [vmem:[%s3 + $0x44] ss:$0 sm:$0xff]
    %v4913 = vld [vmem:[%s3 + $0x45] ss:$0 sm:$0xff]
    %v4914 = vld [vmem:[%s3 + $0x46] ss:$0 sm:$0xff]
    %v4915 = vld [vmem:[%s3 + $0x47] ss:$0 sm:$0xff]
    %v4916 = vpack.c.bf16 %v4888, %v4887
    %v4917 = vpack.c.bf16 %v4889, %v4889
    %v4919 = vlaneseq
    %v4920 = vshrl.u32 %v4919, 7
    %v4921 = vsub.s32 0, %v4920
    %v4922 = vrot.slane %v4908, %v4921
    %v4923 = vlaneseq
    %v4924 = vshrl.u32 %v4923, 7
    %v4925 = vsub.s32 1, %v4924
    %v4926 = vrot.slane %v4908, %v4925
    %v4937 = vunpack.c.l.b16 %v4891
    %v4938 = vunpack.c.h.b16 %v4891
    %v4939 = vunpack.c.l.b16 %v4893
    %v4940 = vunpack.c.h.b16 %v4893
    %v4941 = vunpack.c.l.b16 %v4895
    %v4942 = vunpack.c.h.b16 %v4895
    %v4943 = vunpack.c.l.b16 %v4897
    %v4944 = vunpack.c.h.b16 %v4897
    %v4945 = vunpack.c.l.b16 %v4899
    %v4946 = vunpack.c.h.b16 %v4899
    %v4947 = vunpack.c.l.b16 %v4901
    %v4948 = vunpack.c.h.b16 %v4901
    %v4949 = vunpack.c.l.b16 %v4903
    %v4950 = vunpack.c.h.b16 %v4903
    %v4951 = vunpack.c.l.b16 %v4905
    %v4952 = vunpack.c.h.b16 %v4905
    %v4953 = vpack.c.b16 %v4939, %v4937
    %v4954 = vpack.c.b16 %v4940, %v4938
    %v4955 = vpack.c.b16 %v4943, %v4941
    %v4956 = vpack.c.b16 %v4944, %v4942
    %v4957 = vpack.c.b16 %v4947, %v4945
    %v4958 = vpack.c.b16 %v4948, %v4946
    %v4959 = vpack.c.b16 %v4951, %v4949
    %v4960 = vpack.c.b16 %v4952, %v4950
    %v4970 = vsel %vm3533, %v4916, 0
    %v4973 = vsel %vm3533, %v4917, 0
    %4975 = vmatprep.subr.bf16.mxu0 0
    %4976 = vmatpush1.bf16.msra.mxu0 0
    %4977 = vmatprep.subr.bf16.mxu0 0
    %4978 = vmatpush1.bf16.msra.mxu0 0
    %4979 = vmatprep.subr.bf16.mxu0 0
    %4980 = vmatpush1.bf16.msra.mxu0 0
    %4981 = vmatprep.subr.bf16.mxu0 0
    %4982 = vmatpush1.bf16.msra.mxu0 0
    %4983 = vmatprep.subr.bf16.mxu0 %v4960
    %4984 = vmatpush1.bf16.msra.mxu0 %v4959
    %4985 = vmatprep.subr.bf16.mxu0 %v4958
    %4986 = vmatpush1.bf16.msra.mxu0 %v4957
    %4987 = vmatprep.subr.bf16.mxu0 %v4956
    %4988 = vmatpush1.bf16.msra.mxu0 %v4955
    %4989 = vmatprep.subr.bf16.mxu0 %v4954
    %4990 = vmatpush1.bf16.msra.mxu0 %v4953
    %4991 = vmatprep.subr.bf16.mxu0 0
    %4992 = vmatpush2.bf16.msra.mxu0 0
    %4993 = vmatprep.subr.bf16.mxu0 0
    %4994 = vmatpush2.bf16.msra.mxu0 0
    %4995 = vmatprep.subr.bf16.mxu0 0
    %4996 = vmatpush2.bf16.msra.mxu0 0
    %4997 = vmatprep.subr.bf16.mxu0 0
    %4998 = vmatpush2.bf16.msra.mxu0 0
    %4999 = vmatprep.subr.bf16.mxu0 0
    %5000 = vmatpush2.bf16.msra.mxu0 0
    %5001 = vmatprep.subr.bf16.mxu0 0
    %5002 = vmatpush2.bf16.msra.mxu0 0
    %5003 = vmatprep.subr.bf16.mxu0 0
    %5004 = vmatpush2.bf16.msra.mxu0 0
    %5005 = vmatprep.subr.bf16.mxu0 0
    %5006 = vmatpush2.bf16.msra.mxu0 0
    %5007 = vmatprep.mubr.bf16.mxu0 0
    %5008 = vmatmul.mubr.bf16.gmra.mxu0 %v4970
    %v5009 = vpop.f32.mrf.mxu0
    %v5010 = vadd.f32 %v4922, %v5009
    %v5011 = vpop.f32.mrf.mxu0
    %v5012 = vadd.f32 %v4926, %v5011
    %v5013 = vpop.f32.mrf.mxu0
    %v5014 = vadd.f32 %v4922, %v5013
    %v5015 = vpop.f32.mrf.mxu0
    %v5016 = vadd.f32 %v4926, %v5015
    %5017 = vmatprep.mubr.bf16.mxu0 0
    %5018 = vmatmul.mubr.bf16.gmra.mxu0 %v4973
    %v5019 = vpop.f32.mrf.mxu0
    %v5020 = vadd.f32 %v4922, %v5019
    %v5021 = vpop.f32.mrf.mxu0
    %v5022 = vadd.f32 %v4926, %v5021
    %v5023 = vpop.f32.mrf.mxu0
    %v5024 = vpop.f32.mrf.mxu0
    %5025 = vdwg.mxu0
    %v5026 = vpack.c.bf16 %v5014, %v5010
    %v5027 = vpack.c.bf16 %v5020, %v5020
    %v5028 = vpack.c.bf16 %v5016, %v5012
    %v5029 = vpack.c.bf16 %v5022, %v5022
    %5032 = vrot.lane.b32.xlu0 %v5026, 64
    %v5033 = vpop.permute.xlu0 %5032
    %5034 = vrot.lane.b32.xlu0 %v5027, 64
    %v5035 = vpop.permute.xlu0 %5034
    %v5037 = vsel %vm316, %v5026, 0
    %v5040 = vsel %vm316, %v5027, 0
    %v5043 = vsel %vm316, %v5033, 0
    %v5046 = vsel %vm316, %v5035, 0
    %5048 = vmatprep.subr.bf16.mxu0 0
    %5049 = vmatpush1.bf16.xpose.msra.mxu0 0
    %5050 = vmatprep.subr.bf16.mxu0 0
    %5051 = vmatpush1.bf16.xpose.msra.mxu0 0
    %5052 = vmatprep.subr.bf16.mxu0 0
    %5053 = vmatpush1.bf16.xpose.msra.mxu0 0
    %5054 = vmatprep.subr.bf16.mxu0 0
    %5055 = vmatpush1.bf16.xpose.msra.mxu0 0
    %5056 = vmatprep.subr.bf16.mxu0 0
    %5057 = vmatpush1.bf16.xpose.msra.mxu0 0
    %5058 = vmatprep.subr.bf16.mxu0 0
    %5059 = vmatpush1.bf16.xpose.msra.mxu0 0
    %5060 = vmatprep.subr.bf16.mxu0 0
    %5061 = vmatpush1.bf16.xpose.msra.mxu0 %v5046
    %5062 = vmatprep.subr.bf16.mxu0 0
    %5063 = vmatpush1.bf16.xpose.msra.mxu0 %v5043
    %5064 = vmatprep.subr.bf16.mxu0 0
    %5065 = vmatpush2.bf16.xpose.msra.mxu0 0
    %5066 = vmatprep.subr.bf16.mxu0 0
    %5067 = vmatpush2.bf16.xpose.msra.mxu0 0
    %5068 = vmatprep.subr.bf16.mxu0 0
    %5069 = vmatpush2.bf16.xpose.msra.mxu0 0
    %5070 = vmatprep.subr.bf16.mxu0 0
    %5071 = vmatpush2.bf16.xpose.msra.mxu0 0
    %5072 = vmatprep.subr.bf16.mxu0 0
    %5073 = vmatpush2.bf16.xpose.msra.mxu0 0
    %5074 = vmatprep.subr.bf16.mxu0 0
    %5075 = vmatpush2.bf16.xpose.msra.mxu0 0
    %5076 = vmatprep.subr.bf16.mxu0 0
    %5077 = vmatpush2.bf16.xpose.msra.mxu0 0
    %5078 = vmatprep.subr.bf16.mxu0 0
    %5079 = vmatpush2.bf16.xpose.msra.mxu0 0
    %5080 = vmatprep.mubr.bf16.mxu0 0
    %5081 = vmatmul.mubr.bf16.gmra.mxu0 %v5037
    %v5082 = vpop.f32.mrf.mxu0
    %v5083 = vadd.f32 0.0, %v5082
    %v5084 = vpop.f32.mrf.mxu0
    %v5085 = vpop.f32.mrf.mxu0
    %v5086 = vadd.f32 0.0, %v5085
    %v5087 = vpop.f32.mrf.mxu0
    %5088 = vmatprep.mubr.bf16.mxu0 0
    %5089 = vmatmul.mubr.bf16.gmra.mxu0 %v5040
    %v5090 = vpop.f32.mrf.mxu0
    %v5091 = vadd.f32 0.0, %v5090
    %v5092 = vpop.f32.mrf.mxu0
    %v5093 = vpop.f32.mrf.mxu0
    %v5094 = vpop.f32.mrf.mxu0
    %5095 = vdwg.mxu0
    %v5096 = vmul.f32 %v5083, 0.17677669
    %v5097 = vmul.f32 %v5086, 0.17677669
    %v5098 = vmul.f32 %v5091, 0.17677669
    %v5099 = vadd.f32 %v5096, %v3994
    %v5100 = vadd.f32 %v5097, %v4009
    %v5101 = vadd.f32 %v5098, %v4008
    %v5102 = vsel %vm4221, %v5099, -inf
    %5103 = vmax.xlane.f32.xlu0 %v5102
    %v5104 = vpop.xlane.xlu0 %5103
    %v5105 = vsel %vm4221, %v5100, -inf
    %5106 = vmax.xlane.f32.xlu0 %v5105
    %v5107 = vpop.xlane.xlu0 %5106
    %v5108 = vsel %vm4228, %v5101, -inf
    %5109 = vmax.xlane.f32.xlu0 %v5108
    %v5110 = vpop.xlane.xlu0 %5109
    %v5111 = vsub.f32 %v5099, %v5104
    %v5112 = vsub.f32 %v5100, %v5107
    %v5113 = vsub.f32 %v5101, %v5110
    %v5114 = vmul.f32 %v5111, 1.442695
    %v5115 = vpow.pop %v5114
    %v5116 = vmul.f32 %v5112, 1.442695
    %v5117 = vpow.pop %v5116
    %v5118 = vmul.f32 %v5113, 1.442695
    %v5119 = vpow.pop %v5118
    %v5120 = vsel %vm4221, %v5115, 0.0
    %5121 = vadd.xlane.f32.xlu0 %v5120
    %v5122 = vpop.xlane.xlu0 %5121
    %v5123 = vsel %vm4221, %v5117, 0.0
    %5124 = vadd.xlane.f32.xlu0 %v5123
    %v5125 = vpop.xlane.xlu0 %5124
    %v5126 = vsel %vm4228, %v5119, 0.0
    %5127 = vadd.xlane.f32.xlu0 %v5126
    %v5128 = vpop.xlane.xlu0 %5127
    %v5129 = vrcp.pop %v5122
    %v5130 = vrcp.pop %v5125
    %v5131 = vrcp.pop %v5128
    %v5132 = vmul.f32 %v5115, %v5129
    %v5133 = vmul.f32 %v5117, %v5130
    %v5134 = vmul.f32 %v5119, %v5131
    %v5135 = vpack.c.bf16 %v5133, %v5132
    %v5136 = vpack.c.bf16 %v5134, %v5134
    %v5138 = vsel %vm4221, %v5135, 0
    %v5141 = vsel %vm4221, %v5136, 0
    %v5144 = vsel %vm3604, %v5029, 0
    %5146 = vmatprep.subr.bf16.mxu0 0
    %5147 = vmatpush1.bf16.msra.mxu0 0
    %5148 = vmatprep.subr.bf16.mxu0 0
    %5149 = vmatpush1.bf16.msra.mxu0 0
    %5150 = vmatprep.subr.bf16.mxu0 0
    %5151 = vmatpush1.bf16.msra.mxu0 0
    %5152 = vmatprep.subr.bf16.mxu0 0
    %5153 = vmatpush1.bf16.msra.mxu0 0
    %5154 = vmatprep.subr.bf16.mxu0 0
    %5155 = vmatpush1.bf16.msra.mxu0 0
    %5156 = vmatprep.subr.bf16.mxu0 0
    %5157 = vmatpush1.bf16.msra.mxu0 0
    %5158 = vmatprep.subr.bf16.mxu0 0
    %5159 = vmatpush1.bf16.msra.mxu0 %v5144
    %5160 = vmatprep.subr.bf16.mxu0 0
    %5161 = vmatpush1.bf16.msra.mxu0 %v5028
    %5162 = vmatprep.subr.bf16.mxu0 0
    %5163 = vmatpush2.bf16.msra.mxu0 0
    %5164 = vmatprep.subr.bf16.mxu0 0
    %5165 = vmatpush2.bf16.msra.mxu0 0
    %5166 = vmatprep.subr.bf16.mxu0 0
    %5167 = vmatpush2.bf16.msra.mxu0 0
    %5168 = vmatprep.subr.bf16.mxu0 0
    %5169 = vmatpush2.bf16.msra.mxu0 0
    %5170 = vmatprep.subr.bf16.mxu0 0
    %5171 = vmatpush2.bf16.msra.mxu0 0
    %5172 = vmatprep.subr.bf16.mxu0 0
    %5173 = vmatpush2.bf16.msra.mxu0 0
    %5174 = vmatprep.subr.bf16.mxu0 0
    %5175 = vmatpush2.bf16.msra.mxu0 0
    %5176 = vmatprep.subr.bf16.mxu0 0
    %5177 = vmatpush2.bf16.msra.mxu0 0
    %5178 = vmatprep.mubr.bf16.mxu0 0
    %5179 = vmatmul.mubr.bf16.gmra.mxu0 %v5138
    %v5180 = vpop.f32.mrf.mxu0
    %v5181 = vadd.f32 0.0, %v5180
    %v5182 = vpop.f32.mrf.mxu0
    %v5183 = vpop.f32.mrf.mxu0
    %v5184 = vadd.f32 0.0, %v5183
    %v5185 = vpop.f32.mrf.mxu0
    %5186 = vmatprep.mubr.bf16.mxu0 0
    %5187 = vmatmul.mubr.bf16.gmra.mxu0 %v5141
    %v5188 = vpop.f32.mrf.mxu0
    %v5189 = vadd.f32 0.0, %v5188
    %v5190 = vpop.f32.mrf.mxu0
    %v5191 = vpop.f32.mrf.mxu0
    %v5192 = vpop.f32.mrf.mxu0
    %5193 = vdwg.mxu0
    %5194 = vrot.lane.b32.xlu0 %v5026, 96
    %v5195 = vpop.permute.xlu0 %5194
    %5196 = vrot.lane.b32.xlu0 %v5027, 96
    %v5197 = vpop.permute.xlu0 %5196
    %5198 = vrot.lane.b32.xlu0 %v5026, 32
    %v5199 = vpop.permute.xlu0 %5198
    %5200 = vrot.lane.b32.xlu0 %v5027, 32
    %v5201 = vpop.permute.xlu0 %5200
    %v5203 = vsel %vm316, %v5195, 0
    %v5206 = vsel %vm316, %v5197, 0
    %v5209 = vsel %vm316, %v5199, 0
    %v5212 = vsel %vm316, %v5201, 0
    %5214 = vmatprep.subr.bf16.mxu0 0
    %5215 = vmatpush1.bf16.xpose.msra.mxu0 0
    %5216 = vmatprep.subr.bf16.mxu0 0
    %5217 = vmatpush1.bf16.xpose.msra.mxu0 0
    %5218 = vmatprep.subr.bf16.mxu0 0
    %5219 = vmatpush1.bf16.xpose.msra.mxu0 0
    %5220 = vmatprep.subr.bf16.mxu0 0
    %5221 = vmatpush1.bf16.xpose.msra.mxu0 0
    %5222 = vmatprep.subr.bf16.mxu0 0
    %5223 = vmatpush1.bf16.xpose.msra.mxu0 0
    %5224 = vmatprep.subr.bf16.mxu0 0
    %5225 = vmatpush1.bf16.xpose.msra.mxu0 0
    %5226 = vmatprep.subr.bf16.mxu0 0
    %5227 = vmatpush1.bf16.xpose.msra.mxu0 %v5212
    %5228 = vmatprep.subr.bf16.mxu0 0
    %5229 = vmatpush1.bf16.xpose.msra.mxu0 %v5209
    %5230 = vmatprep.subr.bf16.mxu0 0
    %5231 = vmatpush2.bf16.xpose.msra.mxu0 0
    %5232 = vmatprep.subr.bf16.mxu0 0
    %5233 = vmatpush2.bf16.xpose.msra.mxu0 0
    %5234 = vmatprep.subr.bf16.mxu0 0
    %5235 = vmatpush2.bf16.xpose.msra.mxu0 0
    %5236 = vmatprep.subr.bf16.mxu0 0
    %5237 = vmatpush2.bf16.xpose.msra.mxu0 0
    %5238 = vmatprep.subr.bf16.mxu0 0
    %5239 = vmatpush2.bf16.xpose.msra.mxu0 0
    %5240 = vmatprep.subr.bf16.mxu0 0
    %5241 = vmatpush2.bf16.xpose.msra.mxu0 0
    %5242 = vmatprep.subr.bf16.mxu0 0
    %5243 = vmatpush2.bf16.xpose.msra.mxu0 0
    %5244 = vmatprep.subr.bf16.mxu0 0
    %5245 = vmatpush2.bf16.xpose.msra.mxu0 0
    %5246 = vmatprep.mubr.bf16.mxu0 0
    %5247 = vmatmul.mubr.bf16.gmra.mxu0 %v5203
    %v5248 = vpop.f32.mrf.mxu0
    %v5249 = vadd.f32 0.0, %v5248
    %v5250 = vpop.f32.mrf.mxu0
    %v5251 = vpop.f32.mrf.mxu0
    %v5252 = vadd.f32 0.0, %v5251
    %v5253 = vpop.f32.mrf.mxu0
    %5254 = vmatprep.mubr.bf16.mxu0 0
    %5255 = vmatmul.mubr.bf16.gmra.mxu0 %v5206
    %v5256 = vpop.f32.mrf.mxu0
    %v5257 = vadd.f32 0.0, %v5256
    %v5258 = vpop.f32.mrf.mxu0
    %v5259 = vpop.f32.mrf.mxu0
    %v5260 = vpop.f32.mrf.mxu0
    %5261 = vdwg.mxu0
    %v5262 = vmul.f32 %v5249, 0.17677669
    %v5263 = vmul.f32 %v5252, 0.17677669
    %v5264 = vmul.f32 %v5257, 0.17677669
    %v5265 = vadd.f32 %v5262, %v3994
    %v5266 = vadd.f32 %v5263, %v4009
    %v5267 = vadd.f32 %v5264, %v4008
    %v5268 = vsel %vm4221, %v5265, -inf
    %5269 = vmax.xlane.f32.xlu0 %v5268
    %v5270 = vpop.xlane.xlu0 %5269
    %v5271 = vsel %vm4221, %v5266, -inf
    %5272 = vmax.xlane.f32.xlu0 %v5271
    %v5273 = vpop.xlane.xlu0 %5272
    %v5274 = vsel %vm4228, %v5267, -inf
    %5275 = vmax.xlane.f32.xlu0 %v5274
    %v5276 = vpop.xlane.xlu0 %5275
    %v5277 = vsub.f32 %v5265, %v5270
    %v5278 = vsub.f32 %v5266, %v5273
    %v5279 = vsub.f32 %v5267, %v5276
    %v5280 = vmul.f32 %v5277, 1.442695
    %v5281 = vpow.pop %v5280
    %v5282 = vmul.f32 %v5278, 1.442695
    %v5283 = vpow.pop %v5282
    %v5284 = vmul.f32 %v5279, 1.442695
    %v5285 = vpow.pop %v5284
    %v5286 = vsel %vm4221, %v5281, 0.0
    %5287 = vadd.xlane.f32.xlu0 %v5286
    %v5288 = vpop.xlane.xlu0 %5287
    %v5289 = vsel %vm4221, %v5283, 0.0
    %5290 = vadd.xlane.f32.xlu0 %v5289
    %v5291 = vpop.xlane.xlu0 %5290
    %v5292 = vsel %vm4228, %v5285, 0.0
    %5293 = vadd.xlane.f32.xlu0 %v5292
    %v5294 = vpop.xlane.xlu0 %5293
    %v5295 = vrcp.pop %v5288
    %v5296 = vrcp.pop %v5291
    %v5297 = vrcp.pop %v5294
    %v5298 = vmul.f32 %v5281, %v5295
    %v5299 = vmul.f32 %v5283, %v5296
    %v5300 = vmul.f32 %v5285, %v5297
    %v5301 = vpack.c.bf16 %v5299, %v5298
    %v5302 = vpack.c.bf16 %v5300, %v5300
    %5305 = vrot.lane.b32.xlu0 %v5028, 96
    %v5306 = vpop.permute.xlu0 %5305
    %5307 = vrot.lane.b32.xlu0 %v5029, 96
    %v5308 = vpop.permute.xlu0 %5307
    %v5311 = vsel %vm4221, %v5301, 0
    %v5314 = vsel %vm4221, %v5302, 0
    %v5317 = vsel %vm3604, %v5308, 0
    %5319 = vmatprep.subr.bf16.mxu0 0
    %5320 = vmatpush1.bf16.msra.mxu0 0
    %5321 = vmatprep.subr.bf16.mxu0 0
    %5322 = vmatpush1.bf16.msra.mxu0 0
    %5323 = vmatprep.subr.bf16.mxu0 0
    %5324 = vmatpush1.bf16.msra.mxu0 0
    %5325 = vmatprep.subr.bf16.mxu0 0
    %5326 = vmatpush1.bf16.msra.mxu0 0
    %5327 = vmatprep.subr.bf16.mxu0 0
    %5328 = vmatpush1.bf16.msra.mxu0 0
    %5329 = vmatprep.subr.bf16.mxu0 0
    %5330 = vmatpush1.bf16.msra.mxu0 0
    %5331 = vmatprep.subr.bf16.mxu0 0
    %5332 = vmatpush1.bf16.msra.mxu0 %v5317
    %5333 = vmatprep.subr.bf16.mxu0 0
    %5334 = vmatpush1.bf16.msra.mxu0 %v5306
    %5335 = vmatprep.subr.bf16.mxu0 0
    %5336 = vmatpush2.bf16.msra.mxu0 0
    %5337 = vmatprep.subr.bf16.mxu0 0
    %5338 = vmatpush2.bf16.msra.mxu0 0
    %5339 = vmatprep.subr.bf16.mxu0 0
    %5340 = vmatpush2.bf16.msra.mxu0 0
    %5341 = vmatprep.subr.bf16.mxu0 0
    %5342 = vmatpush2.bf16.msra.mxu0 0
    %5343 = vmatprep.subr.bf16.mxu0 0
    %5344 = vmatpush2.bf16.msra.mxu0 0
    %5345 = vmatprep.subr.bf16.mxu0 0
    %5346 = vmatpush2.bf16.msra.mxu0 0
    %5347 = vmatprep.subr.bf16.mxu0 0
    %5348 = vmatpush2.bf16.msra.mxu0 0
    %5349 = vmatprep.subr.bf16.mxu0 0
    %5350 = vmatpush2.bf16.msra.mxu0 0
    %5351 = vmatprep.mubr.bf16.mxu0 0
    %5352 = vmatmul.mubr.bf16.gmra.mxu0 %v5311
    %v5353 = vpop.f32.mrf.mxu0
    %v5354 = vadd.f32 0.0, %v5353
    %v5355 = vpop.f32.mrf.mxu0
    %v5356 = vpop.f32.mrf.mxu0
    %v5357 = vadd.f32 0.0, %v5356
    %v5358 = vpop.f32.mrf.mxu0
    %5359 = vmatprep.mubr.bf16.mxu0 0
    %5360 = vmatmul.mubr.bf16.gmra.mxu0 %v5314
    %v5361 = vpop.f32.mrf.mxu0
    %v5362 = vadd.f32 0.0, %v5361
    %v5363 = vpop.f32.mrf.mxu0
    %v5364 = vpop.f32.mrf.mxu0
    %v5365 = vpop.f32.mrf.mxu0
    %5366 = vdwg.mxu0
    %5370 = vrot.lane.b32.xlu0 %v5354, 32
    %v5371 = vpop.permute.xlu0 %5370
    %5372 = vrot.lane.b32.xlu0 %v5357, 32
    %v5373 = vpop.permute.xlu0 %5372
    %5374 = vrot.lane.b32.xlu0 %v5362, 32
    %v5375 = vpop.permute.xlu0 %5374
    %v5379 = vsel %vm316, %v5181, %v5371
    %v5380 = vsel %vm316, %v5184, %v5373
    %v5381 = vsel %vm316, %v5189, %v5375
    %v5382 = vpack.c.bf16 %v5380, %v5379
    %v5383 = vpack.c.bf16 %v5381, %v5381
    %5384 = vrot.lane.b32.xlu0 %v4954, 64
    %v5385 = vpop.permute.xlu0 %5384
    %5386 = vrot.lane.b32.xlu0 %v4956, 64
    %v5387 = vpop.permute.xlu0 %5386
    %5388 = vrot.lane.b32.xlu0 %v4958, 64
    %v5389 = vpop.permute.xlu0 %5388
    %5390 = vrot.lane.b32.xlu0 %v4960, 64
    %v5391 = vpop.permute.xlu0 %5390
    %v5397 = vsel %vm3533, %v5382, 0
    %v5400 = vsel %vm3533, %v5383, 0
    %5402 = vmatprep.subr.bf16.mxu0 0
    %5403 = vmatpush1.bf16.msra.mxu0 0
    %5404 = vmatprep.subr.bf16.mxu0 0
    %5405 = vmatpush1.bf16.msra.mxu0 0
    %5406 = vmatprep.subr.bf16.mxu0 0
    %5407 = vmatpush1.bf16.msra.mxu0 0
    %5408 = vmatprep.subr.bf16.mxu0 0
    %5409 = vmatpush1.bf16.msra.mxu0 0
    %5410 = vmatprep.subr.bf16.mxu0 0
    %5411 = vmatpush1.bf16.msra.mxu0 %v5391
    %5412 = vmatprep.subr.bf16.mxu0 0
    %5413 = vmatpush1.bf16.msra.mxu0 %v5389
    %5414 = vmatprep.subr.bf16.mxu0 0
    %5415 = vmatpush1.bf16.msra.mxu0 %v5387
    %5416 = vmatprep.subr.bf16.mxu0 0
    %5417 = vmatpush1.bf16.msra.mxu0 %v5385
    %5418 = vmatprep.subr.bf16.mxu0 0
    %5419 = vmatpush2.bf16.msra.mxu0 0
    %5420 = vmatprep.subr.bf16.mxu0 0
    %5421 = vmatpush2.bf16.msra.mxu0 0
    %5422 = vmatprep.subr.bf16.mxu0 0
    %5423 = vmatpush2.bf16.msra.mxu0 0
    %5424 = vmatprep.subr.bf16.mxu0 0
    %5425 = vmatpush2.bf16.msra.mxu0 0
    %5426 = vmatprep.subr.bf16.mxu0 0
    %5427 = vmatpush2.bf16.msra.mxu0 0
    %5428 = vmatprep.subr.bf16.mxu0 0
    %5429 = vmatpush2.bf16.msra.mxu0 0
    %5430 = vmatprep.subr.bf16.mxu0 0
    %5431 = vmatpush2.bf16.msra.mxu0 0
    %5432 = vmatprep.subr.bf16.mxu0 0
    %5433 = vmatpush2.bf16.msra.mxu0 0
    %5434 = vmatprep.mubr.bf16.mxu0 0
    %5435 = vmatmul.mubr.bf16.gmra.mxu0 %v5397
    %v5436 = vpop.f32.mrf.mxu0
    %v5437 = vadd.f32 %v4909, %v5436
    %v5438 = vpop.f32.mrf.mxu0
    %v5439 = vpop.f32.mrf.mxu0
    %v5440 = vadd.f32 %v4909, %v5439
    %v5441 = vpop.f32.mrf.mxu0
    %5442 = vmatprep.mubr.bf16.mxu0 0
    %5443 = vmatmul.mubr.bf16.gmra.mxu0 %v5400
    %v5444 = vpop.f32.mrf.mxu0
    %v5445 = vadd.f32 %v4909, %v5444
    %v5446 = vpop.f32.mrf.mxu0
    %v5447 = vpop.f32.mrf.mxu0
    %v5448 = vpop.f32.mrf.mxu0
    %5449 = vdwg.mxu0
    %v5450 = vadd.f32 %v4887, %v5437
    %v5451 = vadd.f32 %v4888, %v5440
    %v5452 = vadd.f32 %v4889, %v5445
    %v5453 = vsel %vm3533, %v5450, 0.0
    %5454 = vadd.xlane.f32.xlu0 %v5453
    %v5455 = vpop.xlane.xlu0 %5454
    %v5456 = vsel %vm3533, %v5451, 0.0
    %5457 = vadd.xlane.f32.xlu0 %v5456
    %v5458 = vpop.xlane.xlu0 %5457
    %v5459 = vsel %vm4580, %v5452, 0.0
    %5460 = vadd.xlane.f32.xlu0 %v5459
    %v5461 = vpop.xlane.xlu0 %5460
    %v5462 = vmul.f32 %v5455, %v4584
    %v5463 = vmul.f32 %v5458, %v4584
    %v5464 = vmul.f32 %v5461, %v4584
    %v5465 = vsub.f32 %v5450, %v5462
    %v5466 = vsub.f32 %v5451, %v5463
    %v5467 = vsub.f32 %v5452, %v5464
    %v5468 = vmul.f32 %v5465, %v5465
    %v5469 = vmul.f32 %v5466, %v5466
    %v5470 = vmul.f32 %v5467, %v5467
    %v5471 = vsel %vm3533, %v5468, 0.0
    %5472 = vadd.xlane.f32.xlu0 %v5471
    %v5473 = vpop.xlane.xlu0 %5472
    %v5474 = vsel %vm3533, %v5469, 0.0
    %5475 = vadd.xlane.f32.xlu0 %v5474
    %v5476 = vpop.xlane.xlu0 %5475
    %v5477 = vsel %vm4580, %v5470, 0.0
    %5478 = vadd.xlane.f32.xlu0 %v5477
    %v5479 = vpop.xlane.xlu0 %5478
    %v5480 = vmul.f32 %v5473, %v4584
    %v5481 = vmul.f32 %v5476, %v4584
    %v5482 = vmul.f32 %v5479, %v4584
    %v5483 = vadd.f32 %v5480, 1e-05
    %v5484 = vadd.f32 %v5481, 1e-05
    %v5485 = vadd.f32 %v5482, 1e-05
    %v5486 = vrsqrt.pop %v5483
    %v5487 = vrsqrt.pop %v5484
    %v5488 = vrsqrt.pop %v5485
    %v5489 = vmul.f32 %v5465, %v5486
    %v5490 = vmul.f32 %v5466, %v5487
    %v5491 = vmul.f32 %v5467, %v5488
    %v5492 = vmul.f32 %v5489, %v4910
    %v5493 = vmul.f32 %v5490, %v4910
    %v5494 = vmul.f32 %v5491, %v4910
    %v5495 = vadd.f32 %v5492, %v4911
    %v5496 = vadd.f32 %v5493, %v4911
    %v5497 = vadd.f32 %v5494, %v4911
    %v5498 = vpack.c.bf16 %v5496, %v5495
    %v5499 = vpack.c.bf16 %v5497, %v5497
    %v5508 = vunpack.c.l.b16 %v4892
    %v5509 = vunpack.c.l.b16 %v4894
    %v5510 = vunpack.c.l.b16 %v4896
    %v5511 = vunpack.c.l.b16 %v4898
    %v5512 = vunpack.c.l.b16 %v4900
    %v5513 = vunpack.c.l.b16 %v4902
    %v5514 = vunpack.c.l.b16 %v4904
    %v5515 = vunpack.c.l.b16 %v4906
    %v5516 = vpack.c.b16 %v5509, %v5508
    %v5517 = vpack.c.b16 %v5511, %v5510
    %v5518 = vpack.c.b16 %v5513, %v5512
    %v5519 = vpack.c.b16 %v5515, %v5514
    %v5525 = vsel %vm3533, %v5498, 0
    %v5528 = vsel %vm3533, %v5499, 0
    %5530 = vmatprep.subr.bf16.mxu0 0
    %5531 = vmatpush1.bf16.msra.mxu0 0
    %5532 = vmatprep.subr.bf16.mxu0 0
    %5533 = vmatpush1.bf16.msra.mxu0 0
    %5534 = vmatprep.subr.bf16.mxu0 0
    %5535 = vmatpush1.bf16.msra.mxu0 0
    %5536 = vmatprep.subr.bf16.mxu0 0
    %5537 = vmatpush1.bf16.msra.mxu0 0
    %5538 = vmatprep.subr.bf16.mxu0 0
    %5539 = vmatpush1.bf16.msra.mxu0 %v5519
    %5540 = vmatprep.subr.bf16.mxu0 0
    %5541 = vmatpush1.bf16.msra.mxu0 %v5518
    %5542 = vmatprep.subr.bf16.mxu0 0
    %5543 = vmatpush1.bf16.msra.mxu0 %v5517
    %5544 = vmatprep.subr.bf16.mxu0 0
    %5545 = vmatpush1.bf16.msra.mxu0 %v5516
    %5546 = vmatprep.subr.bf16.mxu0 0
    %5547 = vmatpush2.bf16.msra.mxu0 0
    %5548 = vmatprep.subr.bf16.mxu0 0
    %5549 = vmatpush2.bf16.msra.mxu0 0
    %5550 = vmatprep.subr.bf16.mxu0 0
    %5551 = vmatpush2.bf16.msra.mxu0 0
    %5552 = vmatprep.subr.bf16.mxu0 0
    %5553 = vmatpush2.bf16.msra.mxu0 0
    %5554 = vmatprep.subr.bf16.mxu0 0
    %5555 = vmatpush2.bf16.msra.mxu0 0
    %5556 = vmatprep.subr.bf16.mxu0 0
    %5557 = vmatpush2.bf16.msra.mxu0 0
    %5558 = vmatprep.subr.bf16.mxu0 0
    %5559 = vmatpush2.bf16.msra.mxu0 0
    %5560 = vmatprep.subr.bf16.mxu0 0
    %5561 = vmatpush2.bf16.msra.mxu0 0
    %5562 = vmatprep.mubr.bf16.mxu0 0
    %5563 = vmatmul.mubr.bf16.gmra.mxu0 %v5525
    %v5564 = vpop.f32.mrf.mxu0
    %v5565 = vadd.f32 %v4912, %v5564
    %v5566 = vpop.f32.mrf.mxu0
    %v5567 = vpop.f32.mrf.mxu0
    %v5568 = vadd.f32 %v4912, %v5567
    %v5569 = vpop.f32.mrf.mxu0
    %5570 = vmatprep.mubr.bf16.mxu0 0
    %5571 = vmatmul.mubr.bf16.gmra.mxu0 %v5528
    %v5572 = vpop.f32.mrf.mxu0
    %v5573 = vadd.f32 %v4912, %v5572
    %v5574 = vpop.f32.mrf.mxu0
    %v5575 = vpop.f32.mrf.mxu0
    %v5576 = vpop.f32.mrf.mxu0
    %5577 = vdwg.mxu0
    %v5578 = vmul.f32 %v5565, 0.5
    %v5579 = vmul.f32 %v5568, 0.5
    %v5580 = vmul.f32 %v5573, 0.5
    %v5581 = vmul.f32 %v5565, 0.044715
    %v5582 = vmul.f32 %v5568, 0.044715
    %v5583 = vmul.f32 %v5573, 0.044715
    %v5584 = vmul.f32 %v5581, %v5565
    %v5585 = vmul.f32 %v5582, %v5568
    %v5586 = vmul.f32 %v5583, %v5573
    %v5587 = vmul.f32 %v5584, %v5565
    %v5588 = vmul.f32 %v5585, %v5568
    %v5589 = vmul.f32 %v5586, %v5573
    %v5590 = vadd.f32 %v5565, %v5587
    %v5591 = vadd.f32 %v5568, %v5588
    %v5592 = vadd.f32 %v5573, %v5589
    %v5593 = vmul.f32 %v5590, 0.7978846
    %v5594 = vmul.f32 %v5591, 0.7978846
    %v5595 = vmul.f32 %v5592, 0.7978846
    %v5596 = vtanh.pop %v5593
    %v5597 = vtanh.pop %v5594
    %v5598 = vtanh.pop %v5595
    %v5599 = vadd.f32 %v5596, 1.0
    %v5600 = vadd.f32 %v5597, 1.0
    %v5601 = vadd.f32 %v5598, 1.0
    %v5602 = vmul.f32 %v5578, %v5599
    %v5603 = vmul.f32 %v5579, %v5600
    %v5604 = vmul.f32 %v5580, %v5601
    %v5605 = vpack.c.bf16 %v5603, %v5602
    %v5606 = vpack.c.bf16 %v5604, %v5604
    %s5607 = scalar_lea.vmem %s9, 64
    %v5608 = vld [vmem:[%s5607] sm:$0xf]
    %v5609 = vld [vmem:[%s5607 + $0x4] sm:$0xf]
    %v5610 = vld [vmem:[%s5607 + $0x8] sm:$0xf]
    %v5611 = vld [vmem:[%s5607 + $0xc] sm:$0xf]
    %v5612 = vld [vmem:[%s5607 + $0x10] sm:$0xf]
    %v5613 = vld [vmem:[%s5607 + $0x14] sm:$0xf]
    %v5614 = vld [vmem:[%s5607 + $0x18] sm:$0xf]
    %v5615 = vld [vmem:[%s5607 + $0x1c] sm:$0xf]
    %v5616 = vld [vmem:[%s5607 + $0x20] sm:$0xf]
    %v5617 = vld [vmem:[%s5607 + $0x24] sm:$0xf]
    %v5618 = vld [vmem:[%s5607 + $0x28] sm:$0xf]
    %v5619 = vld [vmem:[%s5607 + $0x2c] sm:$0xf]
    %v5620 = vld [vmem:[%s5607 + $0x30] sm:$0xf]
    %v5621 = vld [vmem:[%s5607 + $0x34] sm:$0xf]
    %v5622 = vld [vmem:[%s5607 + $0x38] sm:$0xf]
    %v5623 = vld [vmem:[%s5607 + $0x3c] sm:$0xf]
    %v5640 = vunpack.c.l.b16 %v5608
    %v5641 = vunpack.c.l.b16 %v5609
    %v5642 = vunpack.c.l.b16 %v5610
    %v5643 = vunpack.c.l.b16 %v5611
    %v5644 = vunpack.c.l.b16 %v5612
    %v5645 = vunpack.c.l.b16 %v5613
    %v5646 = vunpack.c.l.b16 %v5614
    %v5647 = vunpack.c.l.b16 %v5615
    %v5648 = vunpack.c.l.b16 %v5616
    %v5649 = vunpack.c.l.b16 %v5617
    %v5650 = vunpack.c.l.b16 %v5618
    %v5651 = vunpack.c.l.b16 %v5619
    %v5652 = vunpack.c.l.b16 %v5620
    %v5653 = vunpack.c.l.b16 %v5621
    %v5654 = vunpack.c.l.b16 %v5622
    %v5655 = vunpack.c.l.b16 %v5623
    %v5656 = vpack.c.b16 %v5641, %v5640
    %v5657 = vpack.c.b16 %v5643, %v5642
    %v5658 = vpack.c.b16 %v5645, %v5644
    %v5659 = vpack.c.b16 %v5647, %v5646
    %v5660 = vpack.c.b16 %v5649, %v5648
    %v5661 = vpack.c.b16 %v5651, %v5650
    %v5662 = vpack.c.b16 %v5653, %v5652
    %v5663 = vpack.c.b16 %v5655, %v5654
    %5672 = vmatprep.subr.bf16.mxu0 0
    %5673 = vmatpush1.bf16.msra.mxu0 %v5663
    %5674 = vmatprep.subr.bf16.mxu0 0
    %5675 = vmatpush1.bf16.msra.mxu0 %v5662
    %5676 = vmatprep.subr.bf16.mxu0 0
    %5677 = vmatpush1.bf16.msra.mxu0 %v5661
    %5678 = vmatprep.subr.bf16.mxu0 0
    %5679 = vmatpush1.bf16.msra.mxu0 %v5660
    %5680 = vmatprep.subr.bf16.mxu0 0
    %5681 = vmatpush1.bf16.msra.mxu0 %v5659
    %5682 = vmatprep.subr.bf16.mxu0 0
    %5683 = vmatpush1.bf16.msra.mxu0 %v5658
    %5684 = vmatprep.subr.bf16.mxu0 0
    %5685 = vmatpush1.bf16.msra.mxu0 %v5657
    %5686 = vmatprep.subr.bf16.mxu0 0
    %5687 = vmatpush1.bf16.msra.mxu0 %v5656
    %5688 = vmatprep.subr.bf16.mxu0 0
    %5689 = vmatpush2.bf16.msra.mxu0 0
    %5690 = vmatprep.subr.bf16.mxu0 0
    %5691 = vmatpush2.bf16.msra.mxu0 0
    %5692 = vmatprep.subr.bf16.mxu0 0
    %5693 = vmatpush2.bf16.msra.mxu0 0
    %5694 = vmatprep.subr.bf16.mxu0 0
    %5695 = vmatpush2.bf16.msra.mxu0 0
    %5696 = vmatprep.subr.bf16.mxu0 0
    %5697 = vmatpush2.bf16.msra.mxu0 0
    %5698 = vmatprep.subr.bf16.mxu0 0
    %5699 = vmatpush2.bf16.msra.mxu0 0
    %5700 = vmatprep.subr.bf16.mxu0 0
    %5701 = vmatpush2.bf16.msra.mxu0 0
    %5702 = vmatprep.subr.bf16.mxu0 0
    %5703 = vmatpush2.bf16.msra.mxu0 0
    %5704 = vmatprep.mubr.bf16.mxu0 0
    %5705 = vmatmul.mubr.bf16.gmra.mxu0 %v5605
    %v5706 = vpop.f32.mrf.mxu0
    %v5707 = vadd.f32 %v4913, %v5706
    %v5708 = vpop.f32.mrf.mxu0
    %v5709 = vpop.f32.mrf.mxu0
    %v5710 = vadd.f32 %v4913, %v5709
    %v5711 = vpop.f32.mrf.mxu0
    %5712 = vmatprep.mubr.bf16.mxu0 0
    %5713 = vmatmul.mubr.bf16.gmra.mxu0 %v5606
    %v5714 = vpop.f32.mrf.mxu0
    %v5715 = vpop.f32.mrf.mxu0
    %v5716 = vpop.f32.mrf.mxu0
    %v5717 = vpop.f32.mrf.mxu0
    %5718 = vdwg.mxu0
    %v5719 = vadd.f32 %v5495, %v5707
    %v5720 = vadd.f32 %v5496, %v5710
    %v5721 = vsel %vm3533, %v5719, 0.0
    %5722 = vadd.xlane.f32.xlu0 %v5721
    %v5723 = vpop.xlane.xlu0 %5722
    %v5724 = vsel %vm3533, %v5720, 0.0
    %5725 = vadd.xlane.f32.xlu0 %v5724
    %v5726 = vpop.xlane.xlu0 %5725
    %v5727 = vmul.f32 %v5723, %v4584
    %v5728 = vmul.f32 %v5726, %v4584
    %v5729 = vsub.f32 %v5719, %v5727
    %v5730 = vsub.f32 %v5720, %v5728
    %v5731 = vmul.f32 %v5729, %v5729
    %v5732 = vmul.f32 %v5730, %v5730
    %v5733 = vsel %vm3533, %v5731, 0.0
    %5734 = vadd.xlane.f32.xlu0 %v5733
    %v5735 = vpop.xlane.xlu0 %5734
    %v5736 = vsel %vm3533, %v5732, 0.0
    %5737 = vadd.xlane.f32.xlu0 %v5736
    %v5738 = vpop.xlane.xlu0 %5737
    %v5739 = vmul.f32 %v5735, %v4584
    %v5740 = vmul.f32 %v5738, %v4584
    %v5741 = vadd.f32 %v5739, 1e-05
    %v5742 = vadd.f32 %v5740, 1e-05
    %v5743 = vrsqrt.pop %v5741
    %v5744 = vrsqrt.pop %v5742
    %v5745 = vmul.f32 %v5729, %v5743
    %v5746 = vmul.f32 %v5730, %v5744
    %v5747 = vmul.f32 %v5745, %v4914
    %v5748 = vmul.f32 %v5746, %v4914
    %v5749 = vadd.f32 %v5747, %v4915
    %v5750 = vadd.f32 %v5748, %v4915
    %v5752 = vrot.slane %v5749, 1
    %v5755 = vrot.slane %v5750, 2
    %v5757 = vsel %vm3599, %v5752, %v5755
    %vm5758 = vcmask 517120
    %v5759 = vsel %vm5758, %v5757, 0.0
    %5760 = vadd.xlane.f32.xlu0 %v5759
    %v5761 = vpop.xlane.xlu0 %5760
    %v5762 = vmul.f32 %v5761, %v4584
    %v5763 = vsub.f32 %v5757, %v5762
    %v5764 = vmul.f32 %v5763, %v5763
    %v5765 = vsel %vm5758, %v5764, 0.0
    %5766 = vadd.xlane.f32.xlu0 %v5765
    %v5767 = vpop.xlane.xlu0 %5766
    %v5768 = vmul.f32 %v5767, %v4584
    %v5769 = vadd.f32 %v5768, 1e-05
    %v5770 = vrsqrt.pop %v5769
    %v5771 = vmul.f32 %v5763, %v5770
    %v5772 = vmul.f32 %v5771, %v60
    %v5773 = vadd.f32 %v5772, %v61
    %v5774 = vpack.c.bf16 %v5773, %v5773
    %v5775 = vld [vmem:[%s10] sm:$0xf]
    %v5776 = vld [vmem:[%s10 + $0x4] sm:$0xf]
    %v5777 = vld [vmem:[%s10 + $0x8] sm:$0xf]
    %v5778 = vld [vmem:[%s10 + $0xc] sm:$0xf]
    %v5779 = vld [vmem:[%s10 + $0x10] sm:$0xf]
    %v5780 = vld [vmem:[%s10 + $0x14] sm:$0xf]
    %v5781 = vld [vmem:[%s10 + $0x18] sm:$0xf]
    %v5782 = vld [vmem:[%s10 + $0x1c] sm:$0xf]
    %v5791 = vunpack.c.l.b16 %v5775
    %v5792 = vunpack.c.l.b16 %v5776
    %v5793 = vunpack.c.l.b16 %v5777
    %v5794 = vunpack.c.l.b16 %v5778
    %v5795 = vunpack.c.l.b16 %v5779
    %v5796 = vunpack.c.l.b16 %v5780
    %v5797 = vunpack.c.l.b16 %v5781
    %v5798 = vunpack.c.l.b16 %v5782
    %v5799 = vpack.c.b16 %v5792, %v5791
    %v5800 = vpack.c.b16 %v5794, %v5793
    %v5801 = vpack.c.b16 %v5796, %v5795
    %v5802 = vpack.c.b16 %v5798, %v5797
    %v5808 = vsel %vm3533, %v5774, 0
    %5810 = vmatprep.subr.bf16.mxu0 0
    %5811 = vmatpush1.bf16.msra.mxu0 0
    %5812 = vmatprep.subr.bf16.mxu0 0
    %5813 = vmatpush1.bf16.msra.mxu0 0
    %5814 = vmatprep.subr.bf16.mxu0 0
    %5815 = vmatpush1.bf16.msra.mxu0 0
    %5816 = vmatprep.subr.bf16.mxu0 0
    %5817 = vmatpush1.bf16.msra.mxu0 0
    %5818 = vmatprep.subr.bf16.mxu0 0
    %5819 = vmatpush1.bf16.msra.mxu0 %v5802
    %5820 = vmatprep.subr.bf16.mxu0 0
    %5821 = vmatpush1.bf16.msra.mxu0 %v5801
    %5822 = vmatprep.subr.bf16.mxu0 0
    %5823 = vmatpush1.bf16.msra.mxu0 %v5800
    %5824 = vmatprep.subr.bf16.mxu0 0
    %5825 = vmatpush1.bf16.msra.mxu0 %v5799
    %5826 = vmatprep.subr.bf16.mxu0 0
    %5827 = vmatpush2.bf16.msra.mxu0 0
    %5828 = vmatprep.subr.bf16.mxu0 0
    %5829 = vmatpush2.bf16.msra.mxu0 0
    %5830 = vmatprep.subr.bf16.mxu0 0
    %5831 = vmatpush2.bf16.msra.mxu0 0
    %5832 = vmatprep.subr.bf16.mxu0 0
    %5833 = vmatpush2.bf16.msra.mxu0 0
    %5834 = vmatprep.subr.bf16.mxu0 0
    %5835 = vmatpush2.bf16.msra.mxu0 0
    %5836 = vmatprep.subr.bf16.mxu0 0
    %5837 = vmatpush2.bf16.msra.mxu0 0
    %5838 = vmatprep.subr.bf16.mxu0 0
    %5839 = vmatpush2.bf16.msra.mxu0 0
    %5840 = vmatprep.subr.bf16.mxu0 0
    %5841 = vmatpush2.bf16.msra.mxu0 0
    %5842 = vmatprep.mubr.bf16.mxu0 0
    %5843 = vmatmul.mubr.bf16.gmra.mxu0 %v5808
    %v5844 = vpop.f32.mrf.mxu0
    %v5845 = vadd.f32 %v62, %v5844
    %v5846 = vpop.f32.mrf.mxu0
    %v5847 = vpop.f32.mrf.mxu0
    %v5848 = vpop.f32.mrf.mxu0
    %5849 = vdwg.mxu0
    %5850 = vst [vmem:[#allocation5] sm:$0x3] %v5845
    // Predicated region
    $region50: #{tpu_custom_call.1} parent=1 // pred_check
      _
    $region51: #{tpu_custom_call.1} parent=1 // pred_check_branch
      %5852 = sbr.rel (0) target = $region53
    $region52: #{tpu_custom_call.1} parent=1 // pred_region
      %s5854 = ssub.s32 32, 32
      %5855 = vsyncadd [#allocation3], %s5854
      %s5857 = sshll.u32 [#allocation5], 4
      %s5858 = int_to_ptr.vmem [resolvable:$true] %s5857
      %5860 = dma.vmem_to_hbm [thread:$0]  %s5858, 32, %s11, [#allocation3]
    $region53: #{tpu_custom_call.1} parent=1 // pred_fallthru
      _
    // Predicated region
    $region54: #{tpu_custom_call.1} parent=1 // pred_check
      _
    $region55: #{tpu_custom_call.1} parent=1 // pred_check_branch
      %5862 = sbr.rel (0) target = $region57
    $region56: #{tpu_custom_call.1} parent=1 // pred_region
      %5863 = dma.done [#allocation3], 32
    $region57: #{tpu_custom_call.1} parent=1 // pred_fallthru
      _
    %5864 = vsyncpa [#allocation3], 1
    %5865 = vsyncpa [#allocation4], 1

</llo_original>
